<compile_context>
chip_gen: v7x
topology: tpu7x:2x2x1
jax: 0.10.0
libtpu: 0.0.40
codegen_flags: <defaults>
</compile_context>

<pallas_src>
import functools

import numpy as np

import jax
import jax.numpy as jnp
from jax.experimental import pallas as pl
from jax.experimental.pallas import tpu as pltpu

PATCH = 9                      # normal_refinement_beta
HALF = PATCH // 2
CENTER = (PATCH * PATCH) // 2  # 40 (8-aligned sublane row, nice)
GAMMA = 0.95                   # normal_refinement_gamma
EPS = 1e-5                     # eps of least_square_normal_regress / depth clamp
GN_EPS = 1e-5                  # GroupNorm eps (PyTorch default)
NUM_GROUPS = 8


# ---------------------------------------------------------------------------
# The single fused kernel (one grid step == one batch element)
# ---------------------------------------------------------------------------
def _geonet_fused_kernel(xyzp_ref, xn_ref, masks_ref,
                         w1_ref, b1_ref, gw1_ref, gb1_ref,
                         w2_ref, b2_ref, gw2_ref, gb2_ref,
                         w3_ref, b3_ref, wfc_ref, bfc_ref,
                         out_ref, *, H, W):
    HW = H * W
    f32 = jnp.float32

    # ---------------- LeastSquareModule (lane-dense, fully vectorised) ------
    X = xyzp_ref[0]                                  # (81, HW) x of every patch tap
    Y = xyzp_ref[1]
    Z = xyzp_ref[2]
    zc = Z[CENTER:CENTER + 1, :]                     # (1, HW) center depth, zc > 0

    # torch: zero the patch point where |(z - zc)/zc| > gamma (x,y,z all use the
    # z-based criterion).  zc >= eps > 0, so compare without the divide.
    m = (jnp.abs(Z - zc) <= GAMMA * zc).astype(f32)  # (81, HW)
    Xm = X * m
    Ym = Y * m
    Zm = Z * m

    def csum(a):                                     # sum over the 81 taps
        return jnp.sum(a, axis=0, keepdims=True)     # (1, HW)

    sxx = csum(Xm * Xm); sxy = csum(Xm * Ym); sxz = csum(Xm * Zm)
    syy = csum(Ym * Ym); syz = csum(Ym * Zm); szz = csum(Zm * Zm)
    sx = csum(Xm); sy = csum(Ym); sz = csum(Zm)

    # Symmetric 3x3 solve via the adjugate.  Where det < eps torch replaces A
    # by eye(3), i.e. the solution is just rhs = [sx, sy, sz].
    c00 = syy * szz - syz * syz
    c01 = sxz * syz - sxy * szz
    c02 = sxy * syz - sxz * syy
    c11 = sxx * szz - sxz * sxz
    c12 = sxy * sxz - sxx * syz
    c22 = sxx * syy - sxy * sxy
    det = sxx * c00 + sxy * c01 + sxz * c02

    use_eye = det < EPS                              # exact torch condition
    # approx reciprocal is safe: the per-pixel positive scale 1/det cancels in the
    # L2 normalisation below.
    inv_det = pl.reciprocal(jnp.where(use_eye, 1.0, det), approx=True)
    v0 = jnp.where(use_eye, sx, (c00 * sx + c01 * sy + c02 * sz) * inv_det)
    v1 = jnp.where(use_eye, sy, (c01 * sx + c11 * sy + c12 * sz) * inv_det)
    v2 = jnp.where(use_eye, sz, (c02 * sx + c12 * sy + c22 * sz) * inv_det)

    inv_nrm = jax.lax.rsqrt(v0 * v0 + v1 * v1 + v2 * v2)
    nfd = jnp.concatenate([v0, v1, v2], axis=0) * inv_nrm   # (3, HW)
    nfd = jnp.where(jnp.isnan(nfd), 0.0, nfd)                # torch: lstsq[lstsq!=lstsq]=0
    nfd = -nfd                                               # normal_from_depth

    # ---------------- NormalResidual (all in VMEM, in-kernel im2col) --------
    masks = masks_ref[...]                           # (9, HW) zero-pad validity masks

    def conv3x3(x, w2d, bias):
        # x: (Cin, HW) row-major flattened; 3x3 zero-padded conv as ONE matmul on
        # an im2col built from 9 lane-rolled + masked copies (never touches HBM).
        pieces = []
        for t in range(9):
            dy = t // 3 - 1
            dx = t % 3 - 1
            s = dy * W + dx                          # flat neighbour offset
            if s == 0:
                pieces.append(x)                     # center tap: always in-bounds
            else:
                xt = pltpu.roll(x, shift=(-s) % HW, axis=1)
                pieces.append(xt * masks[t:t + 1, :])
        col = jnp.concatenate(pieces, axis=0)        # (9*Cin, HW)
        return jnp.dot(w2d, col, preferred_element_type=f32) + bias

    def group_norm(y, gw, gb):
        # Single pass: sum and sum-of-squares together (2 big reductions total),
        # rsqrt instead of sqrt + divide.
        C = y.shape[0]
        gs = C // NUM_GROUPS
        s1 = jnp.sum(y, axis=1, keepdims=True)       # (C, 1)
        s2 = jnp.sum(y * y, axis=1, keepdims=True)   # (C, 1)
        inv_cnt = 1.0 / float(gs * HW)
        outs = []
        for g in range(NUM_GROUPS):
            lo = g * gs
            mean = jnp.sum(s1[lo:lo + gs, :], keepdims=True) * inv_cnt   # (1,1)
            ex2 = jnp.sum(s2[lo:lo + gs, :], keepdims=True) * inv_cnt
            rstd = jax.lax.rsqrt(ex2 - mean * mean + GN_EPS)
            outs.append((y[lo:lo + gs, :] - mean) * rstd * gw[lo:lo + gs, :]
                        + gb[lo:lo + gs, :])
        return jnp.concatenate(outs, axis=0)         # (C, HW)

    xn = xn_ref[...]                                 # (3, HW) initial normals

    # conv1_1's weight already carries the *10 scaling of normal_from_depth.
    h = conv3x3(nfd, w1_ref[...], b1_ref[...])                           # conv1_1
    h = group_norm(jnp.maximum(h, 0.0), gw1_ref[...], gb1_ref[...])      # relu, gn1_1
    h = conv3x3(h, w2_ref[...], b2_ref[...])                             # conv1_2
    h = group_norm(jnp.maximum(h, 0.0), gw2_ref[...], gb2_ref[...])      # relu, gn1_2
    res = conv3x3(h, w3_ref[...], b3_ref[...])                           # conv1_3

    s = nfd + res                                    # sum_norm_noise
    # torch divides by the plain L2 norm (no eps) -> keep faithful, via rsqrt.
    s = s * jax.lax.rsqrt(jnp.sum(s * s, axis=0, keepdims=True))

    fc_in = jnp.concatenate([xn, s], axis=0)         # (6, HW): [x_normal ; sum]
    r = jnp.dot(wfc_ref[...], fc_in, preferred_element_type=f32) + bfc_ref[...]
    r = r * jax.lax.rsqrt(jnp.sum(r * r, axis=0, keepdims=True))

    # (x + 1)/2, clamp; single lane-dense (3, HW) slab store.
    out_ref[...] = jnp.clip((r + 1.0) * 0.5, 0.0, 1.0)


# ---------------------------------------------------------------------------
# JAX-side glue: reprojection, padding, patch extraction, weight reshapes
# ---------------------------------------------------------------------------
def _conv_w_2d(w):
    # (Cout, Cin, 3, 3) -> (Cout, 9*Cin) with rows ordered tap-major (t = di*3+dj)
    # then input channel, matching the in-kernel im2col layout.
    cout, cin = w.shape[0], w.shape[1]
    return jnp.transpose(w, (0, 2, 3, 1)).reshape(cout, 9 * cin)


def _conv_masks(H, W):
    # (9, H*W) validity masks for zero-padded 3x3 conv expressed as lane rolls.
    # Built with numpy -> constant-folded at trace time.
    HW = H * W
    r = np.arange(HW, dtype=np.int32) // W
    c = np.arange(HW, dtype=np.int32) % W
    rows = []
    for t in range(9):
        dy = t // 3 - 1
        dx = t % 3 - 1
        ok = (r + dy >= 0) & (r + dy < H) & (c + dx >= 0) & (c + dx < W)
        rows.append(ok.astype(np.float32))
    return jnp.asarray(np.stack(rows, axis=0))


def _extract_xyz_patches(xyz_pad, H, W):
    # (B, 3, H+8, W+8) replicate-padded points -> (B, 3, 81, H*W)
    B = xyz_pad.shape[0]
    taps = []
    for di in range(PATCH):
        for dj in range(PATCH):
            taps.append(xyz_pad[:, :, di:di + H, dj:dj + W])
    p = jnp.stack(taps, axis=2)                      # (B, 3, 81, H, W)
    return p.reshape(B, 3, PATCH * PATCH, H * W)


def _const_spec(x):
    zeros = (0,) * x.ndim
    return pl.BlockSpec(x.shape, lambda b, _z=zeros: _z)


@jax.jit
def geonet_depth_to_normal(params, initial_depth, x_fov, initial_normals):
    """initial_depth: (B,1,H,W), x_fov: (B,) rad, initial_normals: (B,3,H,W)."""
    B, _, H, W = initial_depth.shape
    HW = H * W
    depth = jnp.where(initial_depth < EPS, EPS, initial_depth)

    # -- reproject_depth (elementwise glue; H == W as the torch code requires) --
    cx = (H - 1) / 2.0
    cy = (W - 1) / 2.0
    inv2tan = 1.0 / (2.0 * jnp.tan(x_fov / 2.0))     # (B,)
    fx = H * inv2tan
    fy = W * inv2tan
    z = depth[:, 0]                                  # (B, H, W)
    col = jnp.arange(W, dtype=jnp.float32)[None, None, :]
    row = jnp.arange(H, dtype=jnp.float32)[None, :, None]
    x3 = z * ((col - cx) / fx[:, None, None])
    y3 = z * ((row - cy) / fy[:, None, None])
    xyz = jnp.stack([x3, y3, z], axis=1)             # (B, 3, H, W)
    xyz_pad = jnp.pad(xyz, ((0, 0), (0, 0), (HALF, HALF), (HALF, HALF)), mode="edge")
    xyzp = _extract_xyz_patches(xyz_pad, H, W)       # (B, 3, 81, HW)

    xn = initial_normals.reshape(B, 3, HW)
    masks = _conv_masks(H, W)
    # Fold the `normal_from_depth * 10` scaling into the conv1_1 weight (bias is
    # unaffected): conv(W, 10*x) + b == conv(10*W, x) + b.
    w1 = _conv_w_2d(params["w1"]) * 10.0
    b1 = params["b1"].reshape(-1, 1)
    gw1 = params["gn1_w"].reshape(-1, 1); gb1 = params["gn1_b"].reshape(-1, 1)
    w2 = _conv_w_2d(params["w2"]); b2 = params["b2"].reshape(-1, 1)
    gw2 = params["gn2_w"].reshape(-1, 1); gb2 = params["gn2_b"].reshape(-1, 1)
    w3 = _conv_w_2d(params["w3"]); b3 = params["b3"].reshape(-1, 1)
    wfc = params["wfc"].reshape(3, 6); bfc = params["bfc"].reshape(-1, 1)

    kern = functools.partial(_geonet_fused_kernel, H=H, W=W)
    out = pl.pallas_call(
        kern,
        out_shape=jax.ShapeDtypeStruct((B, 3, HW), jnp.float32),
        grid=(B,),
        in_specs=[
            pl.BlockSpec((None, 3, PATCH * PATCH, HW), lambda b: (b, 0, 0, 0)),
            pl.BlockSpec((None, 3, HW), lambda b: (b, 0, 0)),
            _const_spec(masks),
            _const_spec(w1), _const_spec(b1), _const_spec(gw1), _const_spec(gb1),
            _const_spec(w2), _const_spec(b2), _const_spec(gw2), _const_spec(gb2),
            _const_spec(w3), _const_spec(b3), _const_spec(wfc), _const_spec(bfc),
        ],
        out_specs=pl.BlockSpec((None, 3, HW), lambda b: (b, 0, 0)),
        compiler_params=pltpu.CompilerParams(
            dimension_semantics=("parallel",)),      # B-way: uses both v7x cores
    )(xyzp, xn, masks,
      w1, b1, gw1, gb1,
      w2, b2, gw2, gb2,
      w3, b3, wfc, bfc)

    return out.reshape(B, 3, H, W)


# ---------------------------------------------------------------------------
# Parameter init (deterministic)
# ---------------------------------------------------------------------------
def init_params(key):
    ks = jax.random.split(key, 12)
    p = {}
    p["w1"] = jax.random.normal(ks[0], (64, 3, 3, 3), jnp.float32) * 0.10
    p["b1"] = jax.random.normal(ks[1], (64,), jnp.float32) * 0.05
    p["gn1_w"] = 1.0 + 0.1 * jax.random.normal(ks[2], (64,), jnp.float32)
    p["gn1_b"] = 0.05 * jax.random.normal(ks[3], (64,), jnp.float32)
    p["w2"] = jax.random.normal(ks[4], (64, 64, 3, 3), jnp.float32) * 0.05
    p["b2"] = jax.random.normal(ks[5], (64,), jnp.float32) * 0.05
    p["gn2_w"] = 1.0 + 0.1 * jax.random.normal(ks[6], (64,), jnp.float32)
    p["gn2_b"] = 0.05 * jax.random.normal(ks[7], (64,), jnp.float32)
    p["w3"] = jax.random.normal(ks[8], (3, 64, 3, 3), jnp.float32) * 0.05
    p["b3"] = jax.random.normal(ks[9], (3,), jnp.float32) * 0.05
    p["wfc"] = jax.random.normal(ks[10], (3, 6, 1, 1), jnp.float32) * 0.30
    p["bfc"] = jax.random.normal(ks[11], (3,), jnp.float32) * 0.05
    return p


if __name__ == "__main__":
    key = jax.random.PRNGKey(0)
    k_depth, k_norm, k_param = jax.random.split(key, 3)

    B, H, W = 2, 16, 16
    initial_depth = jax.random.uniform(k_depth, (B, 1, H, W), jnp.float32, 0.2, 2.0)
    x_fov = jnp.array([1.0, 1.2], jnp.float32)                 # radians, shape (B,)
    initial_normals = jax.random.normal(k_norm, (B, 3, H, W), jnp.float32)

    params = init_params(k_param)

    refined = geonet_depth_to_normal(params, initial_depth, x_fov, initial_normals)
    refined = jax.block_until_ready(refined)

    assert refined.shape == (B, 3, H, W)
    assert bool(jnp.all(jnp.isfinite(refined)))
    assert bool(jnp.all((refined >= 0.0) & (refined <= 1.0)))
    print("KERNEL_OK")
</pallas_src>

<mosaic_0001>
module attributes {stable_mosaic.version = 11 : i64} {
  func.func @_geonet_fused_kernel(%arg0: i32, %arg1: memref<1x3x81x256xf32, #tpu.memory_space<vmem>>, %arg2: memref<1x3x256xf32, #tpu.memory_space<vmem>>, %arg3: memref<9x256xf32, #tpu.memory_space<vmem>>, %arg4: memref<64x27xf32, #tpu.memory_space<vmem>>, %arg5: memref<64x1xf32, #tpu.memory_space<vmem>>, %arg6: memref<64x1xf32, #tpu.memory_space<vmem>>, %arg7: memref<64x1xf32, #tpu.memory_space<vmem>>, %arg8: memref<64x576xf32, #tpu.memory_space<vmem>>, %arg9: memref<64x1xf32, #tpu.memory_space<vmem>>, %arg10: memref<64x1xf32, #tpu.memory_space<vmem>>, %arg11: memref<64x1xf32, #tpu.memory_space<vmem>>, %arg12: memref<3x576xf32, #tpu.memory_space<vmem>>, %arg13: memref<3x1xf32, #tpu.memory_space<vmem>>, %arg14: memref<3x6xf32, #tpu.memory_space<vmem>>, %arg15: memref<3x1xf32, #tpu.memory_space<vmem>>, %arg16: memref<1x3x256xf32, #tpu.memory_space<vmem>>) attributes {dimension_semantics = [#tpu.dimension_semantics<parallel>], iteration_bounds = array<i64: 2>, scalar_prefetch = 0 : i64, scratch_operands = 0 : i64, tpu.core_type = #tpu.core_type<tc>, window_params = [{transform_indices = @transform_0, window_bounds = array<i64: 1, 3, 81, 256>}, {transform_indices = @transform_1, window_bounds = array<i64: 1, 3, 256>}, {pipeline_mode = #tpu.pipeline_mode<synchronous>, transform_indices = @transform_2, window_bounds = array<i64: 9, 256>}, {pipeline_mode = #tpu.pipeline_mode<synchronous>, transform_indices = @transform_3, window_bounds = array<i64: 64, 27>}, {pipeline_mode = #tpu.pipeline_mode<synchronous>, transform_indices = @transform_4, window_bounds = array<i64: 64, 1>}, {pipeline_mode = #tpu.pipeline_mode<synchronous>, transform_indices = @transform_5, window_bounds = array<i64: 64, 1>}, {pipeline_mode = #tpu.pipeline_mode<synchronous>, transform_indices = @transform_6, window_bounds = array<i64: 64, 1>}, {pipeline_mode = #tpu.pipeline_mode<synchronous>, transform_indices = @transform_7, window_bounds = array<i64: 64, 576>}, {pipeline_mode = #tpu.pipeline_mode<synchronous>, transform_indices = @transform_8, window_bounds = array<i64: 64, 1>}, {pipeline_mode = #tpu.pipeline_mode<synchronous>, transform_indices = @transform_9, window_bounds = array<i64: 64, 1>}, {pipeline_mode = #tpu.pipeline_mode<synchronous>, transform_indices = @transform_10, window_bounds = array<i64: 64, 1>}, {pipeline_mode = #tpu.pipeline_mode<synchronous>, transform_indices = @transform_11, window_bounds = array<i64: 3, 576>}, {pipeline_mode = #tpu.pipeline_mode<synchronous>, transform_indices = @transform_12, window_bounds = array<i64: 3, 1>}, {pipeline_mode = #tpu.pipeline_mode<synchronous>, transform_indices = @transform_13, window_bounds = array<i64: 3, 6>}, {pipeline_mode = #tpu.pipeline_mode<synchronous>, transform_indices = @transform_14, window_bounds = array<i64: 3, 1>}, {transform_indices = @transform_15, window_bounds = array<i64: 1, 3, 256>}]} {
    %c0 = arith.constant 0 : index
    %c0_0 = arith.constant 0 : index
    %c0_1 = arith.constant 0 : index
    %c0_2 = arith.constant 0 : index
    %0 = vector.load %arg1[%c0, %c0_0, %c0_1, %c0_2] : memref<1x3x81x256xf32, #tpu.memory_space<vmem>>, vector<1x1x81x256xf32>
    %1 = vector.shape_cast %0 : vector<1x1x81x256xf32> to vector<81x256xf32>
    %c0_3 = arith.constant 0 : index
    %c1 = arith.constant 1 : index
    %c0_4 = arith.constant 0 : index
    %c0_5 = arith.constant 0 : index
    %2 = vector.load %arg1[%c0_3, %c1, %c0_4, %c0_5] : memref<1x3x81x256xf32, #tpu.memory_space<vmem>>, vector<1x1x81x256xf32>
    %3 = vector.shape_cast %2 : vector<1x1x81x256xf32> to vector<81x256xf32>
    %c0_6 = arith.constant 0 : index
    %c2 = arith.constant 2 : index
    %c0_7 = arith.constant 0 : index
    %c0_8 = arith.constant 0 : index
    %4 = vector.load %arg1[%c0_6, %c2, %c0_7, %c0_8] : memref<1x3x81x256xf32, #tpu.memory_space<vmem>>, vector<1x1x81x256xf32>
    %5 = vector.shape_cast %4 : vector<1x1x81x256xf32> to vector<81x256xf32>
    %6 = vector.extract_strided_slice %5 {offsets = [40, 0], sizes = [1, 256], strides = [1, 1]} : vector<81x256xf32> to vector<1x256xf32>
    %7 = vector.broadcast %6 : vector<1x256xf32> to vector<81x256xf32>
    %8 = arith.subf %5, %7 : vector<81x256xf32>
    %9 = math.absf %8 : vector<81x256xf32>
    %cst = arith.constant 0.949999988 : f32
    %10 = vector.broadcast %cst : f32 to vector<1x256xf32>
    %11 = arith.mulf %10, %6 : vector<1x256xf32>
    %12 = vector.broadcast %11 : vector<1x256xf32> to vector<81x256xf32>
    %13 = arith.cmpf ole, %9, %12 : vector<81x256xf32>
    %14 = arith.extui %13 : vector<81x256xi1> to vector<81x256xi32>
    %15 = arith.sitofp %14 : vector<81x256xi32> to vector<81x256xf32>
    %16 = arith.mulf %1, %15 : vector<81x256xf32>
    %17 = arith.mulf %3, %15 : vector<81x256xf32>
    %18 = arith.mulf %5, %15 : vector<81x256xf32>
    %19 = arith.mulf %16, %16 : vector<81x256xf32>
    %cst_9 = arith.constant dense<0.000000e+00> : vector<256xf32>
    %20 = vector.multi_reduction <add>, %19, %cst_9 [0] : vector<81x256xf32> to vector<256xf32>
    %21 = vector.shape_cast %20 : vector<256xf32> to vector<1x256xf32>
    %22 = arith.mulf %16, %17 : vector<81x256xf32>
    %cst_10 = arith.constant dense<0.000000e+00> : vector<256xf32>
    %23 = vector.multi_reduction <add>, %22, %cst_10 [0] : vector<81x256xf32> to vector<256xf32>
    %24 = vector.shape_cast %23 : vector<256xf32> to vector<1x256xf32>
    %25 = arith.mulf %16, %18 : vector<81x256xf32>
    %cst_11 = arith.constant dense<0.000000e+00> : vector<256xf32>
    %26 = vector.multi_reduction <add>, %25, %cst_11 [0] : vector<81x256xf32> to vector<256xf32>
    %27 = vector.shape_cast %26 : vector<256xf32> to vector<1x256xf32>
    %28 = arith.mulf %17, %17 : vector<81x256xf32>
    %cst_12 = arith.constant dense<0.000000e+00> : vector<256xf32>
    %29 = vector.multi_reduction <add>, %28, %cst_12 [0] : vector<81x256xf32> to vector<256xf32>
    %30 = vector.shape_cast %29 : vector<256xf32> to vector<1x256xf32>
    %31 = arith.mulf %17, %18 : vector<81x256xf32>
    %cst_13 = arith.constant dense<0.000000e+00> : vector<256xf32>
    %32 = vector.multi_reduction <add>, %31, %cst_13 [0] : vector<81x256xf32> to vector<256xf32>
    %33 = vector.shape_cast %32 : vector<256xf32> to vector<1x256xf32>
    %34 = arith.mulf %18, %18 : vector<81x256xf32>
    %cst_14 = arith.constant dense<0.000000e+00> : vector<256xf32>
    %35 = vector.multi_reduction <add>, %34, %cst_14 [0] : vector<81x256xf32> to vector<256xf32>
    %36 = vector.shape_cast %35 : vector<256xf32> to vector<1x256xf32>
    %cst_15 = arith.constant dense<0.000000e+00> : vector<256xf32>
    %37 = vector.multi_reduction <add>, %16, %cst_15 [0] : vector<81x256xf32> to vector<256xf32>
    %38 = vector.shape_cast %37 : vector<256xf32> to vector<1x256xf32>
    %cst_16 = arith.constant dense<0.000000e+00> : vector<256xf32>
    %39 = vector.multi_reduction <add>, %17, %cst_16 [0] : vector<81x256xf32> to vector<256xf32>
    %40 = vector.shape_cast %39 : vector<256xf32> to vector<1x256xf32>
    %cst_17 = arith.constant dense<0.000000e+00> : vector<256xf32>
    %41 = vector.multi_reduction <add>, %18, %cst_17 [0] : vector<81x256xf32> to vector<256xf32>
    %42 = vector.shape_cast %41 : vector<256xf32> to vector<1x256xf32>
    %43 = arith.mulf %30, %36 : vector<1x256xf32>
    %44 = arith.mulf %33, %33 : vector<1x256xf32>
    %45 = arith.subf %43, %44 : vector<1x256xf32>
    %46 = arith.mulf %27, %33 : vector<1x256xf32>
    %47 = arith.mulf %24, %36 : vector<1x256xf32>
    %48 = arith.subf %46, %47 : vector<1x256xf32>
    %49 = arith.mulf %24, %33 : vector<1x256xf32>
    %50 = arith.mulf %27, %30 : vector<1x256xf32>
    %51 = arith.subf %49, %50 : vector<1x256xf32>
    %52 = arith.mulf %21, %36 : vector<1x256xf32>
    %53 = arith.mulf %27, %27 : vector<1x256xf32>
    %54 = arith.subf %52, %53 : vector<1x256xf32>
    %55 = arith.mulf %24, %27 : vector<1x256xf32>
    %56 = arith.mulf %21, %33 : vector<1x256xf32>
    %57 = arith.subf %55, %56 : vector<1x256xf32>
    %58 = arith.mulf %21, %30 : vector<1x256xf32>
    %59 = arith.mulf %24, %24 : vector<1x256xf32>
    %60 = arith.subf %58, %59 : vector<1x256xf32>
    %61 = arith.mulf %21, %45 : vector<1x256xf32>
    %62 = arith.mulf %24, %48 : vector<1x256xf32>
    %63 = arith.addf %61, %62 : vector<1x256xf32>
    %64 = arith.mulf %27, %51 : vector<1x256xf32>
    %65 = arith.addf %63, %64 : vector<1x256xf32>
    %cst_18 = arith.constant 9.99999974E-6 : f32
    %66 = vector.broadcast %cst_18 : f32 to vector<1x256xf32>
    %67 = arith.cmpf olt, %65, %66 : vector<1x256xf32>
    %cst_19 = arith.constant 1.000000e+00 : f32
    %68 = vector.broadcast %cst_19 : f32 to vector<1x256xf32>
    %69 = arith.select %67, %68, %65 : vector<1x256xi1>, vector<1x256xf32>
    %70 = tpu.reciprocal %69 {approx = true} : vector<1x256xf32> -> vector<1x256xf32>
    %71 = arith.mulf %45, %38 : vector<1x256xf32>
    %72 = arith.mulf %48, %40 : vector<1x256xf32>
    %73 = arith.addf %71, %72 : vector<1x256xf32>
    %74 = arith.mulf %51, %42 : vector<1x256xf32>
    %75 = arith.addf %73, %74 : vector<1x256xf32>
    %76 = arith.mulf %75, %70 : vector<1x256xf32>
    %77 = arith.select %67, %38, %76 : vector<1x256xi1>, vector<1x256xf32>
    %78 = arith.mulf %48, %38 : vector<1x256xf32>
    %79 = arith.mulf %54, %40 : vector<1x256xf32>
    %80 = arith.addf %78, %79 : vector<1x256xf32>
    %81 = arith.mulf %57, %42 : vector<1x256xf32>
    %82 = arith.addf %80, %81 : vector<1x256xf32>
    %83 = arith.mulf %82, %70 : vector<1x256xf32>
    %84 = arith.select %67, %40, %83 : vector<1x256xi1>, vector<1x256xf32>
    %85 = arith.mulf %51, %38 : vector<1x256xf32>
    %86 = arith.mulf %57, %40 : vector<1x256xf32>
    %87 = arith.addf %85, %86 : vector<1x256xf32>
    %88 = arith.mulf %60, %42 : vector<1x256xf32>
    %89 = arith.addf %87, %88 : vector<1x256xf32>
    %90 = arith.mulf %89, %70 : vector<1x256xf32>
    %91 = arith.select %67, %42, %90 : vector<1x256xi1>, vector<1x256xf32>
    %92 = arith.mulf %77, %77 : vector<1x256xf32>
    %93 = arith.mulf %84, %84 : vector<1x256xf32>
    %94 = arith.addf %92, %93 : vector<1x256xf32>
    %95 = arith.mulf %91, %91 : vector<1x256xf32>
    %96 = arith.addf %94, %95 : vector<1x256xf32>
    %97 = math.rsqrt %96 : vector<1x256xf32>
    %98 = tpu.concatenate %77, %84, %91 in 0 : vector<1x256xf32>, vector<1x256xf32>, vector<1x256xf32> -> vector<3x256xf32>
    %99 = vector.broadcast %97 : vector<1x256xf32> to vector<3x256xf32>
    %100 = arith.mulf %98, %99 : vector<3x256xf32>
    %101 = arith.cmpf one, %100, %100 : vector<3x256xf32>
    %cst_20 = arith.constant 0.000000e+00 : f32
    %102 = vector.broadcast %cst_20 : f32 to vector<3x256xf32>
    %103 = arith.select %101, %102, %100 : vector<3x256xi1>, vector<3x256xf32>
    %cst_21 = arith.constant 0.000000e+00 : f32
    %104 = vector.broadcast %cst_21 : f32 to vector<3x256xf32>
    %105 = arith.subf %104, %103 : vector<3x256xf32>
    %c0_22 = arith.constant 0 : index
    %c0_23 = arith.constant 0 : index
    %106 = vector.load %arg3[%c0_22, %c0_23] : memref<9x256xf32, #tpu.memory_space<vmem>>, vector<9x256xf32>
    %c0_24 = arith.constant 0 : index
    %c0_25 = arith.constant 0 : index
    %c0_26 = arith.constant 0 : index
    %107 = vector.load %arg2[%c0_24, %c0_25, %c0_26] : memref<1x3x256xf32, #tpu.memory_space<vmem>>, vector<1x3x256xf32>
    %108 = vector.shape_cast %107 : vector<1x3x256xf32> to vector<3x256xf32>
    %c0_27 = arith.constant 0 : index
    %c0_28 = arith.constant 0 : index
    %109 = vector.load %arg4[%c0_27, %c0_28] : memref<64x27xf32, #tpu.memory_space<vmem>>, vector<64x27xf32>
    %c0_29 = arith.constant 0 : index
    %c0_30 = arith.constant 0 : index
    %110 = vector.load %arg5[%c0_29, %c0_30] : memref<64x1xf32, #tpu.memory_space<vmem>>, vector<64x1xf32>
    %c17_i32 = arith.constant 17 : i32
    %111 = tpu.dynamic_rotate %105 by %c17_i32 dim 1 : vector<3x256xf32>, i32 -> vector<3x256xf32>
    %112 = vector.extract_strided_slice %106 {offsets = [0, 0], sizes = [1, 256], strides = [1, 1]} : vector<9x256xf32> to vector<1x256xf32>
    %113 = vector.broadcast %112 : vector<1x256xf32> to vector<3x256xf32>
    %114 = arith.mulf %111, %113 : vector<3x256xf32>
    %c16_i32 = arith.constant 16 : i32
    %115 = tpu.dynamic_rotate %105 by %c16_i32 dim 1 : vector<3x256xf32>, i32 -> vector<3x256xf32>
    %116 = vector.extract_strided_slice %106 {offsets = [1, 0], sizes = [1, 256], strides = [1, 1]} : vector<9x256xf32> to vector<1x256xf32>
    %117 = vector.broadcast %116 : vector<1x256xf32> to vector<3x256xf32>
    %118 = arith.mulf %115, %117 : vector<3x256xf32>
    %c15_i32 = arith.constant 15 : i32
    %119 = tpu.dynamic_rotate %105 by %c15_i32 dim 1 : vector<3x256xf32>, i32 -> vector<3x256xf32>
    %120 = vector.extract_strided_slice %106 {offsets = [2, 0], sizes = [1, 256], strides = [1, 1]} : vector<9x256xf32> to vector<1x256xf32>
    %121 = vector.broadcast %120 : vector<1x256xf32> to vector<3x256xf32>
    %122 = arith.mulf %119, %121 : vector<3x256xf32>
    %c1_i32 = arith.constant 1 : i32
    %123 = tpu.dynamic_rotate %105 by %c1_i32 dim 1 : vector<3x256xf32>, i32 -> vector<3x256xf32>
    %124 = vector.extract_strided_slice %106 {offsets = [3, 0], sizes = [1, 256], strides = [1, 1]} : vector<9x256xf32> to vector<1x256xf32>
    %125 = vector.broadcast %124 : vector<1x256xf32> to vector<3x256xf32>
    %126 = arith.mulf %123, %125 : vector<3x256xf32>
    %c255_i32 = arith.constant 255 : i32
    %127 = tpu.dynamic_rotate %105 by %c255_i32 dim 1 : vector<3x256xf32>, i32 -> vector<3x256xf32>
    %128 = vector.extract_strided_slice %106 {offsets = [5, 0], sizes = [1, 256], strides = [1, 1]} : vector<9x256xf32> to vector<1x256xf32>
    %129 = vector.broadcast %128 : vector<1x256xf32> to vector<3x256xf32>
    %130 = arith.mulf %127, %129 : vector<3x256xf32>
    %c241_i32 = arith.constant 241 : i32
    %131 = tpu.dynamic_rotate %105 by %c241_i32 dim 1 : vector<3x256xf32>, i32 -> vector<3x256xf32>
    %132 = vector.extract_strided_slice %106 {offsets = [6, 0], sizes = [1, 256], strides = [1, 1]} : vector<9x256xf32> to vector<1x256xf32>
    %133 = vector.broadcast %132 : vector<1x256xf32> to vector<3x256xf32>
    %134 = arith.mulf %131, %133 : vector<3x256xf32>
    %c240_i32 = arith.constant 240 : i32
    %135 = tpu.dynamic_rotate %105 by %c240_i32 dim 1 : vector<3x256xf32>, i32 -> vector<3x256xf32>
    %136 = vector.extract_strided_slice %106 {offsets = [7, 0], sizes = [1, 256], strides = [1, 1]} : vector<9x256xf32> to vector<1x256xf32>
    %137 = vector.broadcast %136 : vector<1x256xf32> to vector<3x256xf32>
    %138 = arith.mulf %135, %137 : vector<3x256xf32>
    %c239_i32 = arith.constant 239 : i32
    %139 = tpu.dynamic_rotate %105 by %c239_i32 dim 1 : vector<3x256xf32>, i32 -> vector<3x256xf32>
    %140 = vector.extract_strided_slice %106 {offsets = [8, 0], sizes = [1, 256], strides = [1, 1]} : vector<9x256xf32> to vector<1x256xf32>
    %141 = vector.broadcast %140 : vector<1x256xf32> to vector<3x256xf32>
    %142 = arith.mulf %139, %141 : vector<3x256xf32>
    %143 = tpu.concatenate %114, %118, %122, %126, %105, %130, %134, %138, %142 in 0 : vector<3x256xf32>, vector<3x256xf32>, vector<3x256xf32>, vector<3x256xf32>, vector<3x256xf32>, vector<3x256xf32>, vector<3x256xf32>, vector<3x256xf32>, vector<3x256xf32> -> vector<27x256xf32>
    %cst_31 = arith.constant dense<0.000000e+00> : vector<64x256xf32>
    %144 = tpu.matmul %109, %143, %cst_31 {dimension_numbers = #tpu.dot_dimension_numbers<[1], [0], [0], [1], [0, 0, 1, 1], [], []>} : vector<64x27xf32>, vector<27x256xf32>, vector<64x256xf32> -> vector<64x256xf32>
    %145 = vector.broadcast %110 : vector<64x1xf32> to vector<64x256xf32>
    %146 = arith.addf %144, %145 : vector<64x256xf32>
    %cst_32 = arith.constant 0.000000e+00 : f32
    %147 = vector.broadcast %cst_32 : f32 to vector<64x256xf32>
    %148 = arith.maximumf %146, %147 : vector<64x256xf32>
    %c0_33 = arith.constant 0 : index
    %c0_34 = arith.constant 0 : index
    %149 = vector.load %arg6[%c0_33, %c0_34] : memref<64x1xf32, #tpu.memory_space<vmem>>, vector<64x1xf32>
    %c0_35 = arith.constant 0 : index
    %c0_36 = arith.constant 0 : index
    %150 = vector.load %arg7[%c0_35, %c0_36] : memref<64x1xf32, #tpu.memory_space<vmem>>, vector<64x1xf32>
    %cst_37 = arith.constant dense<0.000000e+00> : vector<64xf32>
    %151 = vector.multi_reduction <add>, %148, %cst_37 [1] : vector<64x256xf32> to vector<64xf32>
    %152 = vector.shape_cast %151 : vector<64xf32> to vector<64x1xf32>
    %153 = arith.mulf %148, %148 : vector<64x256xf32>
    %cst_38 = arith.constant dense<0.000000e+00> : vector<64xf32>
    %154 = vector.multi_reduction <add>, %153, %cst_38 [1] : vector<64x256xf32> to vector<64xf32>
    %155 = vector.shape_cast %154 : vector<64xf32> to vector<64x1xf32>
    %156 = vector.extract_strided_slice %152 {offsets = [0, 0], sizes = [8, 1], strides = [1, 1]} : vector<64x1xf32> to vector<8x1xf32>
    %157 = vector.shape_cast %156 : vector<8x1xf32> to vector<1x8x1xf32>
    %cst_39 = arith.constant dense<0.000000e+00> : vector<1xf32>
    %158 = vector.multi_reduction <add>, %157, %cst_39 [1, 2] : vector<1x8x1xf32> to vector<1xf32>
    %159 = vector.shape_cast %158 : vector<1xf32> to vector<1x1x1xf32>
    %160 = vector.extract %159[0, 0, 0] : f32 from vector<1x1x1xf32>
    %161 = vector.broadcast %160 : f32 to vector<1x1xf32>
    %cst_40 = arith.constant 4.8828125E-4 : f32
    %162 = vector.broadcast %cst_40 : f32 to vector<1x1xf32>
    %163 = arith.mulf %161, %162 : vector<1x1xf32>
    %164 = vector.extract_strided_slice %155 {offsets = [0, 0], sizes = [8, 1], strides = [1, 1]} : vector<64x1xf32> to vector<8x1xf32>
    %165 = vector.shape_cast %164 : vector<8x1xf32> to vector<1x8x1xf32>
    %cst_41 = arith.constant dense<0.000000e+00> : vector<1xf32>
    %166 = vector.multi_reduction <add>, %165, %cst_41 [1, 2] : vector<1x8x1xf32> to vector<1xf32>
    %167 = vector.shape_cast %166 : vector<1xf32> to vector<1x1x1xf32>
    %168 = vector.extract %167[0, 0, 0] : f32 from vector<1x1x1xf32>
    %169 = vector.broadcast %168 : f32 to vector<1x1xf32>
    %cst_42 = arith.constant 4.8828125E-4 : f32
    %170 = vector.broadcast %cst_42 : f32 to vector<1x1xf32>
    %171 = arith.mulf %169, %170 : vector<1x1xf32>
    %172 = arith.mulf %163, %163 : vector<1x1xf32>
    %173 = arith.subf %171, %172 : vector<1x1xf32>
    %cst_43 = arith.constant 9.99999974E-6 : f32
    %174 = vector.broadcast %cst_43 : f32 to vector<1x1xf32>
    %175 = arith.addf %173, %174 : vector<1x1xf32>
    %176 = math.rsqrt %175 : vector<1x1xf32>
    %177 = vector.extract_strided_slice %148 {offsets = [0, 0], sizes = [8, 256], strides = [1, 1]} : vector<64x256xf32> to vector<8x256xf32>
    %178 = vector.broadcast %163 : vector<1x1xf32> to vector<8x256xf32>
    %179 = arith.subf %177, %178 : vector<8x256xf32>
    %180 = vector.broadcast %176 : vector<1x1xf32> to vector<8x256xf32>
    %181 = arith.mulf %179, %180 : vector<8x256xf32>
    %182 = vector.extract_strided_slice %149 {offsets = [0, 0], sizes = [8, 1], strides = [1, 1]} : vector<64x1xf32> to vector<8x1xf32>
    %183 = vector.broadcast %182 : vector<8x1xf32> to vector<8x256xf32>
    %184 = arith.mulf %181, %183 : vector<8x256xf32>
    %185 = vector.extract_strided_slice %150 {offsets = [0, 0], sizes = [8, 1], strides = [1, 1]} : vector<64x1xf32> to vector<8x1xf32>
    %186 = vector.broadcast %185 : vector<8x1xf32> to vector<8x256xf32>
    %187 = arith.addf %184, %186 : vector<8x256xf32>
    %188 = vector.extract_strided_slice %152 {offsets = [8, 0], sizes = [8, 1], strides = [1, 1]} : vector<64x1xf32> to vector<8x1xf32>
    %189 = vector.shape_cast %188 : vector<8x1xf32> to vector<1x8x1xf32>
    %cst_44 = arith.constant dense<0.000000e+00> : vector<1xf32>
    %190 = vector.multi_reduction <add>, %189, %cst_44 [1, 2] : vector<1x8x1xf32> to vector<1xf32>
    %191 = vector.shape_cast %190 : vector<1xf32> to vector<1x1x1xf32>
    %192 = vector.extract %191[0, 0, 0] : f32 from vector<1x1x1xf32>
    %193 = vector.broadcast %192 : f32 to vector<1x1xf32>
    %cst_45 = arith.constant 4.8828125E-4 : f32
    %194 = vector.broadcast %cst_45 : f32 to vector<1x1xf32>
    %195 = arith.mulf %193, %194 : vector<1x1xf32>
    %196 = vector.extract_strided_slice %155 {offsets = [8, 0], sizes = [8, 1], strides = [1, 1]} : vector<64x1xf32> to vector<8x1xf32>
    %197 = vector.shape_cast %196 : vector<8x1xf32> to vector<1x8x1xf32>
    %cst_46 = arith.constant dense<0.000000e+00> : vector<1xf32>
    %198 = vector.multi_reduction <add>, %197, %cst_46 [1, 2] : vector<1x8x1xf32> to vector<1xf32>
    %199 = vector.shape_cast %198 : vector<1xf32> to vector<1x1x1xf32>
    %200 = vector.extract %199[0, 0, 0] : f32 from vector<1x1x1xf32>
    %201 = vector.broadcast %200 : f32 to vector<1x1xf32>
    %cst_47 = arith.constant 4.8828125E-4 : f32
    %202 = vector.broadcast %cst_47 : f32 to vector<1x1xf32>
    %203 = arith.mulf %201, %202 : vector<1x1xf32>
    %204 = arith.mulf %195, %195 : vector<1x1xf32>
    %205 = arith.subf %203, %204 : vector<1x1xf32>
    %cst_48 = arith.constant 9.99999974E-6 : f32
    %206 = vector.broadcast %cst_48 : f32 to vector<1x1xf32>
    %207 = arith.addf %205, %206 : vector<1x1xf32>
    %208 = math.rsqrt %207 : vector<1x1xf32>
    %209 = vector.extract_strided_slice %148 {offsets = [8, 0], sizes = [8, 256], strides = [1, 1]} : vector<64x256xf32> to vector<8x256xf32>
    %210 = vector.broadcast %195 : vector<1x1xf32> to vector<8x256xf32>
    %211 = arith.subf %209, %210 : vector<8x256xf32>
    %212 = vector.broadcast %208 : vector<1x1xf32> to vector<8x256xf32>
    %213 = arith.mulf %211, %212 : vector<8x256xf32>
    %214 = vector.extract_strided_slice %149 {offsets = [8, 0], sizes = [8, 1], strides = [1, 1]} : vector<64x1xf32> to vector<8x1xf32>
    %215 = vector.broadcast %214 : vector<8x1xf32> to vector<8x256xf32>
    %216 = arith.mulf %213, %215 : vector<8x256xf32>
    %217 = vector.extract_strided_slice %150 {offsets = [8, 0], sizes = [8, 1], strides = [1, 1]} : vector<64x1xf32> to vector<8x1xf32>
    %218 = vector.broadcast %217 : vector<8x1xf32> to vector<8x256xf32>
    %219 = arith.addf %216, %218 : vector<8x256xf32>
    %220 = vector.extract_strided_slice %152 {offsets = [16, 0], sizes = [8, 1], strides = [1, 1]} : vector<64x1xf32> to vector<8x1xf32>
    %221 = vector.shape_cast %220 : vector<8x1xf32> to vector<1x8x1xf32>
    %cst_49 = arith.constant dense<0.000000e+00> : vector<1xf32>
    %222 = vector.multi_reduction <add>, %221, %cst_49 [1, 2] : vector<1x8x1xf32> to vector<1xf32>
    %223 = vector.shape_cast %222 : vector<1xf32> to vector<1x1x1xf32>
    %224 = vector.extract %223[0, 0, 0] : f32 from vector<1x1x1xf32>
    %225 = vector.broadcast %224 : f32 to vector<1x1xf32>
    %cst_50 = arith.constant 4.8828125E-4 : f32
    %226 = vector.broadcast %cst_50 : f32 to vector<1x1xf32>
    %227 = arith.mulf %225, %226 : vector<1x1xf32>
    %228 = vector.extract_strided_slice %155 {offsets = [16, 0], sizes = [8, 1], strides = [1, 1]} : vector<64x1xf32> to vector<8x1xf32>
    %229 = vector.shape_cast %228 : vector<8x1xf32> to vector<1x8x1xf32>
    %cst_51 = arith.constant dense<0.000000e+00> : vector<1xf32>
    %230 = vector.multi_reduction <add>, %229, %cst_51 [1, 2] : vector<1x8x1xf32> to vector<1xf32>
    %231 = vector.shape_cast %230 : vector<1xf32> to vector<1x1x1xf32>
    %232 = vector.extract %231[0, 0, 0] : f32 from vector<1x1x1xf32>
    %233 = vector.broadcast %232 : f32 to vector<1x1xf32>
    %cst_52 = arith.constant 4.8828125E-4 : f32
    %234 = vector.broadcast %cst_52 : f32 to vector<1x1xf32>
    %235 = arith.mulf %233, %234 : vector<1x1xf32>
    %236 = arith.mulf %227, %227 : vector<1x1xf32>
    %237 = arith.subf %235, %236 : vector<1x1xf32>
    %cst_53 = arith.constant 9.99999974E-6 : f32
    %238 = vector.broadcast %cst_53 : f32 to vector<1x1xf32>
    %239 = arith.addf %237, %238 : vector<1x1xf32>
    %240 = math.rsqrt %239 : vector<1x1xf32>
    %241 = vector.extract_strided_slice %148 {offsets = [16, 0], sizes = [8, 256], strides = [1, 1]} : vector<64x256xf32> to vector<8x256xf32>
    %242 = vector.broadcast %227 : vector<1x1xf32> to vector<8x256xf32>
    %243 = arith.subf %241, %242 : vector<8x256xf32>
    %244 = vector.broadcast %240 : vector<1x1xf32> to vector<8x256xf32>
    %245 = arith.mulf %243, %244 : vector<8x256xf32>
    %246 = vector.extract_strided_slice %149 {offsets = [16, 0], sizes = [8, 1], strides = [1, 1]} : vector<64x1xf32> to vector<8x1xf32>
    %247 = vector.broadcast %246 : vector<8x1xf32> to vector<8x256xf32>
    %248 = arith.mulf %245, %247 : vector<8x256xf32>
    %249 = vector.extract_strided_slice %150 {offsets = [16, 0], sizes = [8, 1], strides = [1, 1]} : vector<64x1xf32> to vector<8x1xf32>
    %250 = vector.broadcast %249 : vector<8x1xf32> to vector<8x256xf32>
    %251 = arith.addf %248, %250 : vector<8x256xf32>
    %252 = vector.extract_strided_slice %152 {offsets = [24, 0], sizes = [8, 1], strides = [1, 1]} : vector<64x1xf32> to vector<8x1xf32>
    %253 = vector.shape_cast %252 : vector<8x1xf32> to vector<1x8x1xf32>
    %cst_54 = arith.constant dense<0.000000e+00> : vector<1xf32>
    %254 = vector.multi_reduction <add>, %253, %cst_54 [1, 2] : vector<1x8x1xf32> to vector<1xf32>
    %255 = vector.shape_cast %254 : vector<1xf32> to vector<1x1x1xf32>
    %256 = vector.extract %255[0, 0, 0] : f32 from vector<1x1x1xf32>
    %257 = vector.broadcast %256 : f32 to vector<1x1xf32>
    %cst_55 = arith.constant 4.8828125E-4 : f32
    %258 = vector.broadcast %cst_55 : f32 to vector<1x1xf32>
    %259 = arith.mulf %257, %258 : vector<1x1xf32>
    %260 = vector.extract_strided_slice %155 {offsets = [24, 0], sizes = [8, 1], strides = [1, 1]} : vector<64x1xf32> to vector<8x1xf32>
    %261 = vector.shape_cast %260 : vector<8x1xf32> to vector<1x8x1xf32>
    %cst_56 = arith.constant dense<0.000000e+00> : vector<1xf32>
    %262 = vector.multi_reduction <add>, %261, %cst_56 [1, 2] : vector<1x8x1xf32> to vector<1xf32>
    %263 = vector.shape_cast %262 : vector<1xf32> to vector<1x1x1xf32>
    %264 = vector.extract %263[0, 0, 0] : f32 from vector<1x1x1xf32>
    %265 = vector.broadcast %264 : f32 to vector<1x1xf32>
    %cst_57 = arith.constant 4.8828125E-4 : f32
    %266 = vector.broadcast %cst_57 : f32 to vector<1x1xf32>
    %267 = arith.mulf %265, %266 : vector<1x1xf32>
    %268 = arith.mulf %259, %259 : vector<1x1xf32>
    %269 = arith.subf %267, %268 : vector<1x1xf32>
    %cst_58 = arith.constant 9.99999974E-6 : f32
    %270 = vector.broadcast %cst_58 : f32 to vector<1x1xf32>
    %271 = arith.addf %269, %270 : vector<1x1xf32>
    %272 = math.rsqrt %271 : vector<1x1xf32>
    %273 = vector.extract_strided_slice %148 {offsets = [24, 0], sizes = [8, 256], strides = [1, 1]} : vector<64x256xf32> to vector<8x256xf32>
    %274 = vector.broadcast %259 : vector<1x1xf32> to vector<8x256xf32>
    %275 = arith.subf %273, %274 : vector<8x256xf32>
    %276 = vector.broadcast %272 : vector<1x1xf32> to vector<8x256xf32>
    %277 = arith.mulf %275, %276 : vector<8x256xf32>
    %278 = vector.extract_strided_slice %149 {offsets = [24, 0], sizes = [8, 1], strides = [1, 1]} : vector<64x1xf32> to vector<8x1xf32>
    %279 = vector.broadcast %278 : vector<8x1xf32> to vector<8x256xf32>
    %280 = arith.mulf %277, %279 : vector<8x256xf32>
    %281 = vector.extract_strided_slice %150 {offsets = [24, 0], sizes = [8, 1], strides = [1, 1]} : vector<64x1xf32> to vector<8x1xf32>
    %282 = vector.broadcast %281 : vector<8x1xf32> to vector<8x256xf32>
    %283 = arith.addf %280, %282 : vector<8x256xf32>
    %284 = vector.extract_strided_slice %152 {offsets = [32, 0], sizes = [8, 1], strides = [1, 1]} : vector<64x1xf32> to vector<8x1xf32>
    %285 = vector.shape_cast %284 : vector<8x1xf32> to vector<1x8x1xf32>
    %cst_59 = arith.constant dense<0.000000e+00> : vector<1xf32>
    %286 = vector.multi_reduction <add>, %285, %cst_59 [1, 2] : vector<1x8x1xf32> to vector<1xf32>
    %287 = vector.shape_cast %286 : vector<1xf32> to vector<1x1x1xf32>
    %288 = vector.extract %287[0, 0, 0] : f32 from vector<1x1x1xf32>
    %289 = vector.broadcast %288 : f32 to vector<1x1xf32>
    %cst_60 = arith.constant 4.8828125E-4 : f32
    %290 = vector.broadcast %cst_60 : f32 to vector<1x1xf32>
    %291 = arith.mulf %289, %290 : vector<1x1xf32>
    %292 = vector.extract_strided_slice %155 {offsets = [32, 0], sizes = [8, 1], strides = [1, 1]} : vector<64x1xf32> to vector<8x1xf32>
    %293 = vector.shape_cast %292 : vector<8x1xf32> to vector<1x8x1xf32>
    %cst_61 = arith.constant dense<0.000000e+00> : vector<1xf32>
    %294 = vector.multi_reduction <add>, %293, %cst_61 [1, 2] : vector<1x8x1xf32> to vector<1xf32>
    %295 = vector.shape_cast %294 : vector<1xf32> to vector<1x1x1xf32>
    %296 = vector.extract %295[0, 0, 0] : f32 from vector<1x1x1xf32>
    %297 = vector.broadcast %296 : f32 to vector<1x1xf32>
    %cst_62 = arith.constant 4.8828125E-4 : f32
    %298 = vector.broadcast %cst_62 : f32 to vector<1x1xf32>
    %299 = arith.mulf %297, %298 : vector<1x1xf32>
    %300 = arith.mulf %291, %291 : vector<1x1xf32>
    %301 = arith.subf %299, %300 : vector<1x1xf32>
    %cst_63 = arith.constant 9.99999974E-6 : f32
    %302 = vector.broadcast %cst_63 : f32 to vector<1x1xf32>
    %303 = arith.addf %301, %302 : vector<1x1xf32>
    %304 = math.rsqrt %303 : vector<1x1xf32>
    %305 = vector.extract_strided_slice %148 {offsets = [32, 0], sizes = [8, 256], strides = [1, 1]} : vector<64x256xf32> to vector<8x256xf32>
    %306 = vector.broadcast %291 : vector<1x1xf32> to vector<8x256xf32>
    %307 = arith.subf %305, %306 : vector<8x256xf32>
    %308 = vector.broadcast %304 : vector<1x1xf32> to vector<8x256xf32>
    %309 = arith.mulf %307, %308 : vector<8x256xf32>
    %310 = vector.extract_strided_slice %149 {offsets = [32, 0], sizes = [8, 1], strides = [1, 1]} : vector<64x1xf32> to vector<8x1xf32>
    %311 = vector.broadcast %310 : vector<8x1xf32> to vector<8x256xf32>
    %312 = arith.mulf %309, %311 : vector<8x256xf32>
    %313 = vector.extract_strided_slice %150 {offsets = [32, 0], sizes = [8, 1], strides = [1, 1]} : vector<64x1xf32> to vector<8x1xf32>
    %314 = vector.broadcast %313 : vector<8x1xf32> to vector<8x256xf32>
    %315 = arith.addf %312, %314 : vector<8x256xf32>
    %316 = vector.extract_strided_slice %152 {offsets = [40, 0], sizes = [8, 1], strides = [1, 1]} : vector<64x1xf32> to vector<8x1xf32>
    %317 = vector.shape_cast %316 : vector<8x1xf32> to vector<1x8x1xf32>
    %cst_64 = arith.constant dense<0.000000e+00> : vector<1xf32>
    %318 = vector.multi_reduction <add>, %317, %cst_64 [1, 2] : vector<1x8x1xf32> to vector<1xf32>
    %319 = vector.shape_cast %318 : vector<1xf32> to vector<1x1x1xf32>
    %320 = vector.extract %319[0, 0, 0] : f32 from vector<1x1x1xf32>
    %321 = vector.broadcast %320 : f32 to vector<1x1xf32>
    %cst_65 = arith.constant 4.8828125E-4 : f32
    %322 = vector.broadcast %cst_65 : f32 to vector<1x1xf32>
    %323 = arith.mulf %321, %322 : vector<1x1xf32>
    %324 = vector.extract_strided_slice %155 {offsets = [40, 0], sizes = [8, 1], strides = [1, 1]} : vector<64x1xf32> to vector<8x1xf32>
    %325 = vector.shape_cast %324 : vector<8x1xf32> to vector<1x8x1xf32>
    %cst_66 = arith.constant dense<0.000000e+00> : vector<1xf32>
    %326 = vector.multi_reduction <add>, %325, %cst_66 [1, 2] : vector<1x8x1xf32> to vector<1xf32>
    %327 = vector.shape_cast %326 : vector<1xf32> to vector<1x1x1xf32>
    %328 = vector.extract %327[0, 0, 0] : f32 from vector<1x1x1xf32>
    %329 = vector.broadcast %328 : f32 to vector<1x1xf32>
    %cst_67 = arith.constant 4.8828125E-4 : f32
    %330 = vector.broadcast %cst_67 : f32 to vector<1x1xf32>
    %331 = arith.mulf %329, %330 : vector<1x1xf32>
    %332 = arith.mulf %323, %323 : vector<1x1xf32>
    %333 = arith.subf %331, %332 : vector<1x1xf32>
    %cst_68 = arith.constant 9.99999974E-6 : f32
    %334 = vector.broadcast %cst_68 : f32 to vector<1x1xf32>
    %335 = arith.addf %333, %334 : vector<1x1xf32>
    %336 = math.rsqrt %335 : vector<1x1xf32>
    %337 = vector.extract_strided_slice %148 {offsets = [40, 0], sizes = [8, 256], strides = [1, 1]} : vector<64x256xf32> to vector<8x256xf32>
    %338 = vector.broadcast %323 : vector<1x1xf32> to vector<8x256xf32>
    %339 = arith.subf %337, %338 : vector<8x256xf32>
    %340 = vector.broadcast %336 : vector<1x1xf32> to vector<8x256xf32>
    %341 = arith.mulf %339, %340 : vector<8x256xf32>
    %342 = vector.extract_strided_slice %149 {offsets = [40, 0], sizes = [8, 1], strides = [1, 1]} : vector<64x1xf32> to vector<8x1xf32>
    %343 = vector.broadcast %342 : vector<8x1xf32> to vector<8x256xf32>
    %344 = arith.mulf %341, %343 : vector<8x256xf32>
    %345 = vector.extract_strided_slice %150 {offsets = [40, 0], sizes = [8, 1], strides = [1, 1]} : vector<64x1xf32> to vector<8x1xf32>
    %346 = vector.broadcast %345 : vector<8x1xf32> to vector<8x256xf32>
    %347 = arith.addf %344, %346 : vector<8x256xf32>
    %348 = vector.extract_strided_slice %152 {offsets = [48, 0], sizes = [8, 1], strides = [1, 1]} : vector<64x1xf32> to vector<8x1xf32>
    %349 = vector.shape_cast %348 : vector<8x1xf32> to vector<1x8x1xf32>
    %cst_69 = arith.constant dense<0.000000e+00> : vector<1xf32>
    %350 = vector.multi_reduction <add>, %349, %cst_69 [1, 2] : vector<1x8x1xf32> to vector<1xf32>
    %351 = vector.shape_cast %350 : vector<1xf32> to vector<1x1x1xf32>
    %352 = vector.extract %351[0, 0, 0] : f32 from vector<1x1x1xf32>
    %353 = vector.broadcast %352 : f32 to vector<1x1xf32>
    %cst_70 = arith.constant 4.8828125E-4 : f32
    %354 = vector.broadcast %cst_70 : f32 to vector<1x1xf32>
    %355 = arith.mulf %353, %354 : vector<1x1xf32>
    %356 = vector.extract_strided_slice %155 {offsets = [48, 0], sizes = [8, 1], strides = [1, 1]} : vector<64x1xf32> to vector<8x1xf32>
    %357 = vector.shape_cast %356 : vector<8x1xf32> to vector<1x8x1xf32>
    %cst_71 = arith.constant dense<0.000000e+00> : vector<1xf32>
    %358 = vector.multi_reduction <add>, %357, %cst_71 [1, 2] : vector<1x8x1xf32> to vector<1xf32>
    %359 = vector.shape_cast %358 : vector<1xf32> to vector<1x1x1xf32>
    %360 = vector.extract %359[0, 0, 0] : f32 from vector<1x1x1xf32>
    %361 = vector.broadcast %360 : f32 to vector<1x1xf32>
    %cst_72 = arith.constant 4.8828125E-4 : f32
    %362 = vector.broadcast %cst_72 : f32 to vector<1x1xf32>
    %363 = arith.mulf %361, %362 : vector<1x1xf32>
    %364 = arith.mulf %355, %355 : vector<1x1xf32>
    %365 = arith.subf %363, %364 : vector<1x1xf32>
    %cst_73 = arith.constant 9.99999974E-6 : f32
    %366 = vector.broadcast %cst_73 : f32 to vector<1x1xf32>
    %367 = arith.addf %365, %366 : vector<1x1xf32>
    %368 = math.rsqrt %367 : vector<1x1xf32>
    %369 = vector.extract_strided_slice %148 {offsets = [48, 0], sizes = [8, 256], strides = [1, 1]} : vector<64x256xf32> to vector<8x256xf32>
    %370 = vector.broadcast %355 : vector<1x1xf32> to vector<8x256xf32>
    %371 = arith.subf %369, %370 : vector<8x256xf32>
    %372 = vector.broadcast %368 : vector<1x1xf32> to vector<8x256xf32>
    %373 = arith.mulf %371, %372 : vector<8x256xf32>
    %374 = vector.extract_strided_slice %149 {offsets = [48, 0], sizes = [8, 1], strides = [1, 1]} : vector<64x1xf32> to vector<8x1xf32>
    %375 = vector.broadcast %374 : vector<8x1xf32> to vector<8x256xf32>
    %376 = arith.mulf %373, %375 : vector<8x256xf32>
    %377 = vector.extract_strided_slice %150 {offsets = [48, 0], sizes = [8, 1], strides = [1, 1]} : vector<64x1xf32> to vector<8x1xf32>
    %378 = vector.broadcast %377 : vector<8x1xf32> to vector<8x256xf32>
    %379 = arith.addf %376, %378 : vector<8x256xf32>
    %380 = vector.extract_strided_slice %152 {offsets = [56, 0], sizes = [8, 1], strides = [1, 1]} : vector<64x1xf32> to vector<8x1xf32>
    %381 = vector.shape_cast %380 : vector<8x1xf32> to vector<1x8x1xf32>
    %cst_74 = arith.constant dense<0.000000e+00> : vector<1xf32>
    %382 = vector.multi_reduction <add>, %381, %cst_74 [1, 2] : vector<1x8x1xf32> to vector<1xf32>
    %383 = vector.shape_cast %382 : vector<1xf32> to vector<1x1x1xf32>
    %384 = vector.extract %383[0, 0, 0] : f32 from vector<1x1x1xf32>
    %385 = vector.broadcast %384 : f32 to vector<1x1xf32>
    %cst_75 = arith.constant 4.8828125E-4 : f32
    %386 = vector.broadcast %cst_75 : f32 to vector<1x1xf32>
    %387 = arith.mulf %385, %386 : vector<1x1xf32>
    %388 = vector.extract_strided_slice %155 {offsets = [56, 0], sizes = [8, 1], strides = [1, 1]} : vector<64x1xf32> to vector<8x1xf32>
    %389 = vector.shape_cast %388 : vector<8x1xf32> to vector<1x8x1xf32>
    %cst_76 = arith.constant dense<0.000000e+00> : vector<1xf32>
    %390 = vector.multi_reduction <add>, %389, %cst_76 [1, 2] : vector<1x8x1xf32> to vector<1xf32>
    %391 = vector.shape_cast %390 : vector<1xf32> to vector<1x1x1xf32>
    %392 = vector.extract %391[0, 0, 0] : f32 from vector<1x1x1xf32>
    %393 = vector.broadcast %392 : f32 to vector<1x1xf32>
    %cst_77 = arith.constant 4.8828125E-4 : f32
    %394 = vector.broadcast %cst_77 : f32 to vector<1x1xf32>
    %395 = arith.mulf %393, %394 : vector<1x1xf32>
    %396 = arith.mulf %387, %387 : vector<1x1xf32>
    %397 = arith.subf %395, %396 : vector<1x1xf32>
    %cst_78 = arith.constant 9.99999974E-6 : f32
    %398 = vector.broadcast %cst_78 : f32 to vector<1x1xf32>
    %399 = arith.addf %397, %398 : vector<1x1xf32>
    %400 = math.rsqrt %399 : vector<1x1xf32>
    %401 = vector.extract_strided_slice %148 {offsets = [56, 0], sizes = [8, 256], strides = [1, 1]} : vector<64x256xf32> to vector<8x256xf32>
    %402 = vector.broadcast %387 : vector<1x1xf32> to vector<8x256xf32>
    %403 = arith.subf %401, %402 : vector<8x256xf32>
    %404 = vector.broadcast %400 : vector<1x1xf32> to vector<8x256xf32>
    %405 = arith.mulf %403, %404 : vector<8x256xf32>
    %406 = vector.extract_strided_slice %149 {offsets = [56, 0], sizes = [8, 1], strides = [1, 1]} : vector<64x1xf32> to vector<8x1xf32>
    %407 = vector.broadcast %406 : vector<8x1xf32> to vector<8x256xf32>
    %408 = arith.mulf %405, %407 : vector<8x256xf32>
    %409 = vector.extract_strided_slice %150 {offsets = [56, 0], sizes = [8, 1], strides = [1, 1]} : vector<64x1xf32> to vector<8x1xf32>
    %410 = vector.broadcast %409 : vector<8x1xf32> to vector<8x256xf32>
    %411 = arith.addf %408, %410 : vector<8x256xf32>
    %412 = tpu.concatenate %187, %219, %251, %283, %315, %347, %379, %411 in 0 : vector<8x256xf32>, vector<8x256xf32>, vector<8x256xf32>, vector<8x256xf32>, vector<8x256xf32>, vector<8x256xf32>, vector<8x256xf32>, vector<8x256xf32> -> vector<64x256xf32>
    %c0_79 = arith.constant 0 : index
    %c0_80 = arith.constant 0 : index
    %413 = vector.load %arg8[%c0_79, %c0_80] : memref<64x576xf32, #tpu.memory_space<vmem>>, vector<64x576xf32>
    %c0_81 = arith.constant 0 : index
    %c0_82 = arith.constant 0 : index
    %414 = vector.load %arg9[%c0_81, %c0_82] : memref<64x1xf32, #tpu.memory_space<vmem>>, vector<64x1xf32>
    %c17_i32_83 = arith.constant 17 : i32
    %415 = tpu.dynamic_rotate %412 by %c17_i32_83 dim 1 : vector<64x256xf32>, i32 -> vector<64x256xf32>
    %416 = vector.extract_strided_slice %106 {offsets = [0, 0], sizes = [1, 256], strides = [1, 1]} : vector<9x256xf32> to vector<1x256xf32>
    %417 = vector.broadcast %416 : vector<1x256xf32> to vector<64x256xf32>
    %418 = arith.mulf %415, %417 : vector<64x256xf32>
    %c16_i32_84 = arith.constant 16 : i32
    %419 = tpu.dynamic_rotate %412 by %c16_i32_84 dim 1 : vector<64x256xf32>, i32 -> vector<64x256xf32>
    %420 = vector.extract_strided_slice %106 {offsets = [1, 0], sizes = [1, 256], strides = [1, 1]} : vector<9x256xf32> to vector<1x256xf32>
    %421 = vector.broadcast %420 : vector<1x256xf32> to vector<64x256xf32>
    %422 = arith.mulf %419, %421 : vector<64x256xf32>
    %c15_i32_85 = arith.constant 15 : i32
    %423 = tpu.dynamic_rotate %412 by %c15_i32_85 dim 1 : vector<64x256xf32>, i32 -> vector<64x256xf32>
    %424 = vector.extract_strided_slice %106 {offsets = [2, 0], sizes = [1, 256], strides = [1, 1]} : vector<9x256xf32> to vector<1x256xf32>
    %425 = vector.broadcast %424 : vector<1x256xf32> to vector<64x256xf32>
    %426 = arith.mulf %423, %425 : vector<64x256xf32>
    %c1_i32_86 = arith.constant 1 : i32
    %427 = tpu.dynamic_rotate %412 by %c1_i32_86 dim 1 : vector<64x256xf32>, i32 -> vector<64x256xf32>
    %428 = vector.extract_strided_slice %106 {offsets = [3, 0], sizes = [1, 256], strides = [1, 1]} : vector<9x256xf32> to vector<1x256xf32>
    %429 = vector.broadcast %428 : vector<1x256xf32> to vector<64x256xf32>
    %430 = arith.mulf %427, %429 : vector<64x256xf32>
    %c255_i32_87 = arith.constant 255 : i32
    %431 = tpu.dynamic_rotate %412 by %c255_i32_87 dim 1 : vector<64x256xf32>, i32 -> vector<64x256xf32>
    %432 = vector.extract_strided_slice %106 {offsets = [5, 0], sizes = [1, 256], strides = [1, 1]} : vector<9x256xf32> to vector<1x256xf32>
    %433 = vector.broadcast %432 : vector<1x256xf32> to vector<64x256xf32>
    %434 = arith.mulf %431, %433 : vector<64x256xf32>
    %c241_i32_88 = arith.constant 241 : i32
    %435 = tpu.dynamic_rotate %412 by %c241_i32_88 dim 1 : vector<64x256xf32>, i32 -> vector<64x256xf32>
    %436 = vector.extract_strided_slice %106 {offsets = [6, 0], sizes = [1, 256], strides = [1, 1]} : vector<9x256xf32> to vector<1x256xf32>
    %437 = vector.broadcast %436 : vector<1x256xf32> to vector<64x256xf32>
    %438 = arith.mulf %435, %437 : vector<64x256xf32>
    %c240_i32_89 = arith.constant 240 : i32
    %439 = tpu.dynamic_rotate %412 by %c240_i32_89 dim 1 : vector<64x256xf32>, i32 -> vector<64x256xf32>
    %440 = vector.extract_strided_slice %106 {offsets = [7, 0], sizes = [1, 256], strides = [1, 1]} : vector<9x256xf32> to vector<1x256xf32>
    %441 = vector.broadcast %440 : vector<1x256xf32> to vector<64x256xf32>
    %442 = arith.mulf %439, %441 : vector<64x256xf32>
    %c239_i32_90 = arith.constant 239 : i32
    %443 = tpu.dynamic_rotate %412 by %c239_i32_90 dim 1 : vector<64x256xf32>, i32 -> vector<64x256xf32>
    %444 = vector.extract_strided_slice %106 {offsets = [8, 0], sizes = [1, 256], strides = [1, 1]} : vector<9x256xf32> to vector<1x256xf32>
    %445 = vector.broadcast %444 : vector<1x256xf32> to vector<64x256xf32>
    %446 = arith.mulf %443, %445 : vector<64x256xf32>
    %447 = tpu.concatenate %418, %422, %426, %430, %412, %434, %438, %442, %446 in 0 : vector<64x256xf32>, vector<64x256xf32>, vector<64x256xf32>, vector<64x256xf32>, vector<64x256xf32>, vector<64x256xf32>, vector<64x256xf32>, vector<64x256xf32>, vector<64x256xf32> -> vector<576x256xf32>
    %cst_91 = arith.constant dense<0.000000e+00> : vector<64x256xf32>
    %448 = tpu.matmul %413, %447, %cst_91 {dimension_numbers = #tpu.dot_dimension_numbers<[1], [0], [0], [1], [0, 0, 1, 1], [], []>} : vector<64x576xf32>, vector<576x256xf32>, vector<64x256xf32> -> vector<64x256xf32>
    %449 = vector.broadcast %414 : vector<64x1xf32> to vector<64x256xf32>
    %450 = arith.addf %448, %449 : vector<64x256xf32>
    %cst_92 = arith.constant 0.000000e+00 : f32
    %451 = vector.broadcast %cst_92 : f32 to vector<64x256xf32>
    %452 = arith.maximumf %450, %451 : vector<64x256xf32>
    %c0_93 = arith.constant 0 : index
    %c0_94 = arith.constant 0 : index
    %453 = vector.load %arg10[%c0_93, %c0_94] : memref<64x1xf32, #tpu.memory_space<vmem>>, vector<64x1xf32>
    %c0_95 = arith.constant 0 : index
    %c0_96 = arith.constant 0 : index
    %454 = vector.load %arg11[%c0_95, %c0_96] : memref<64x1xf32, #tpu.memory_space<vmem>>, vector<64x1xf32>
    %cst_97 = arith.constant dense<0.000000e+00> : vector<64xf32>
    %455 = vector.multi_reduction <add>, %452, %cst_97 [1] : vector<64x256xf32> to vector<64xf32>
    %456 = vector.shape_cast %455 : vector<64xf32> to vector<64x1xf32>
    %457 = arith.mulf %452, %452 : vector<64x256xf32>
    %cst_98 = arith.constant dense<0.000000e+00> : vector<64xf32>
    %458 = vector.multi_reduction <add>, %457, %cst_98 [1] : vector<64x256xf32> to vector<64xf32>
    %459 = vector.shape_cast %458 : vector<64xf32> to vector<64x1xf32>
    %460 = vector.extract_strided_slice %456 {offsets = [0, 0], sizes = [8, 1], strides = [1, 1]} : vector<64x1xf32> to vector<8x1xf32>
    %461 = vector.shape_cast %460 : vector<8x1xf32> to vector<1x8x1xf32>
    %cst_99 = arith.constant dense<0.000000e+00> : vector<1xf32>
    %462 = vector.multi_reduction <add>, %461, %cst_99 [1, 2] : vector<1x8x1xf32> to vector<1xf32>
    %463 = vector.shape_cast %462 : vector<1xf32> to vector<1x1x1xf32>
    %464 = vector.extract %463[0, 0, 0] : f32 from vector<1x1x1xf32>
    %465 = vector.broadcast %464 : f32 to vector<1x1xf32>
    %cst_100 = arith.constant 4.8828125E-4 : f32
    %466 = vector.broadcast %cst_100 : f32 to vector<1x1xf32>
    %467 = arith.mulf %465, %466 : vector<1x1xf32>
    %468 = vector.extract_strided_slice %459 {offsets = [0, 0], sizes = [8, 1], strides = [1, 1]} : vector<64x1xf32> to vector<8x1xf32>
    %469 = vector.shape_cast %468 : vector<8x1xf32> to vector<1x8x1xf32>
    %cst_101 = arith.constant dense<0.000000e+00> : vector<1xf32>
    %470 = vector.multi_reduction <add>, %469, %cst_101 [1, 2] : vector<1x8x1xf32> to vector<1xf32>
    %471 = vector.shape_cast %470 : vector<1xf32> to vector<1x1x1xf32>
    %472 = vector.extract %471[0, 0, 0] : f32 from vector<1x1x1xf32>
    %473 = vector.broadcast %472 : f32 to vector<1x1xf32>
    %cst_102 = arith.constant 4.8828125E-4 : f32
    %474 = vector.broadcast %cst_102 : f32 to vector<1x1xf32>
    %475 = arith.mulf %473, %474 : vector<1x1xf32>
    %476 = arith.mulf %467, %467 : vector<1x1xf32>
    %477 = arith.subf %475, %476 : vector<1x1xf32>
    %cst_103 = arith.constant 9.99999974E-6 : f32
    %478 = vector.broadcast %cst_103 : f32 to vector<1x1xf32>
    %479 = arith.addf %477, %478 : vector<1x1xf32>
    %480 = math.rsqrt %479 : vector<1x1xf32>
    %481 = vector.extract_strided_slice %452 {offsets = [0, 0], sizes = [8, 256], strides = [1, 1]} : vector<64x256xf32> to vector<8x256xf32>
    %482 = vector.broadcast %467 : vector<1x1xf32> to vector<8x256xf32>
    %483 = arith.subf %481, %482 : vector<8x256xf32>
    %484 = vector.broadcast %480 : vector<1x1xf32> to vector<8x256xf32>
    %485 = arith.mulf %483, %484 : vector<8x256xf32>
    %486 = vector.extract_strided_slice %453 {offsets = [0, 0], sizes = [8, 1], strides = [1, 1]} : vector<64x1xf32> to vector<8x1xf32>
    %487 = vector.broadcast %486 : vector<8x1xf32> to vector<8x256xf32>
    %488 = arith.mulf %485, %487 : vector<8x256xf32>
    %489 = vector.extract_strided_slice %454 {offsets = [0, 0], sizes = [8, 1], strides = [1, 1]} : vector<64x1xf32> to vector<8x1xf32>
    %490 = vector.broadcast %489 : vector<8x1xf32> to vector<8x256xf32>
    %491 = arith.addf %488, %490 : vector<8x256xf32>
    %492 = vector.extract_strided_slice %456 {offsets = [8, 0], sizes = [8, 1], strides = [1, 1]} : vector<64x1xf32> to vector<8x1xf32>
    %493 = vector.shape_cast %492 : vector<8x1xf32> to vector<1x8x1xf32>
    %cst_104 = arith.constant dense<0.000000e+00> : vector<1xf32>
    %494 = vector.multi_reduction <add>, %493, %cst_104 [1, 2] : vector<1x8x1xf32> to vector<1xf32>
    %495 = vector.shape_cast %494 : vector<1xf32> to vector<1x1x1xf32>
    %496 = vector.extract %495[0, 0, 0] : f32 from vector<1x1x1xf32>
    %497 = vector.broadcast %496 : f32 to vector<1x1xf32>
    %cst_105 = arith.constant 4.8828125E-4 : f32
    %498 = vector.broadcast %cst_105 : f32 to vector<1x1xf32>
    %499 = arith.mulf %497, %498 : vector<1x1xf32>
    %500 = vector.extract_strided_slice %459 {offsets = [8, 0], sizes = [8, 1], strides = [1, 1]} : vector<64x1xf32> to vector<8x1xf32>
    %501 = vector.shape_cast %500 : vector<8x1xf32> to vector<1x8x1xf32>
    %cst_106 = arith.constant dense<0.000000e+00> : vector<1xf32>
    %502 = vector.multi_reduction <add>, %501, %cst_106 [1, 2] : vector<1x8x1xf32> to vector<1xf32>
    %503 = vector.shape_cast %502 : vector<1xf32> to vector<1x1x1xf32>
    %504 = vector.extract %503[0, 0, 0] : f32 from vector<1x1x1xf32>
    %505 = vector.broadcast %504 : f32 to vector<1x1xf32>
    %cst_107 = arith.constant 4.8828125E-4 : f32
    %506 = vector.broadcast %cst_107 : f32 to vector<1x1xf32>
    %507 = arith.mulf %505, %506 : vector<1x1xf32>
    %508 = arith.mulf %499, %499 : vector<1x1xf32>
    %509 = arith.subf %507, %508 : vector<1x1xf32>
    %cst_108 = arith.constant 9.99999974E-6 : f32
    %510 = vector.broadcast %cst_108 : f32 to vector<1x1xf32>
    %511 = arith.addf %509, %510 : vector<1x1xf32>
    %512 = math.rsqrt %511 : vector<1x1xf32>
    %513 = vector.extract_strided_slice %452 {offsets = [8, 0], sizes = [8, 256], strides = [1, 1]} : vector<64x256xf32> to vector<8x256xf32>
    %514 = vector.broadcast %499 : vector<1x1xf32> to vector<8x256xf32>
    %515 = arith.subf %513, %514 : vector<8x256xf32>
    %516 = vector.broadcast %512 : vector<1x1xf32> to vector<8x256xf32>
    %517 = arith.mulf %515, %516 : vector<8x256xf32>
    %518 = vector.extract_strided_slice %453 {offsets = [8, 0], sizes = [8, 1], strides = [1, 1]} : vector<64x1xf32> to vector<8x1xf32>
    %519 = vector.broadcast %518 : vector<8x1xf32> to vector<8x256xf32>
    %520 = arith.mulf %517, %519 : vector<8x256xf32>
    %521 = vector.extract_strided_slice %454 {offsets = [8, 0], sizes = [8, 1], strides = [1, 1]} : vector<64x1xf32> to vector<8x1xf32>
    %522 = vector.broadcast %521 : vector<8x1xf32> to vector<8x256xf32>
    %523 = arith.addf %520, %522 : vector<8x256xf32>
    %524 = vector.extract_strided_slice %456 {offsets = [16, 0], sizes = [8, 1], strides = [1, 1]} : vector<64x1xf32> to vector<8x1xf32>
    %525 = vector.shape_cast %524 : vector<8x1xf32> to vector<1x8x1xf32>
    %cst_109 = arith.constant dense<0.000000e+00> : vector<1xf32>
    %526 = vector.multi_reduction <add>, %525, %cst_109 [1, 2] : vector<1x8x1xf32> to vector<1xf32>
    %527 = vector.shape_cast %526 : vector<1xf32> to vector<1x1x1xf32>
    %528 = vector.extract %527[0, 0, 0] : f32 from vector<1x1x1xf32>
    %529 = vector.broadcast %528 : f32 to vector<1x1xf32>
    %cst_110 = arith.constant 4.8828125E-4 : f32
    %530 = vector.broadcast %cst_110 : f32 to vector<1x1xf32>
    %531 = arith.mulf %529, %530 : vector<1x1xf32>
    %532 = vector.extract_strided_slice %459 {offsets = [16, 0], sizes = [8, 1], strides = [1, 1]} : vector<64x1xf32> to vector<8x1xf32>
    %533 = vector.shape_cast %532 : vector<8x1xf32> to vector<1x8x1xf32>
    %cst_111 = arith.constant dense<0.000000e+00> : vector<1xf32>
    %534 = vector.multi_reduction <add>, %533, %cst_111 [1, 2] : vector<1x8x1xf32> to vector<1xf32>
    %535 = vector.shape_cast %534 : vector<1xf32> to vector<1x1x1xf32>
    %536 = vector.extract %535[0, 0, 0] : f32 from vector<1x1x1xf32>
    %537 = vector.broadcast %536 : f32 to vector<1x1xf32>
    %cst_112 = arith.constant 4.8828125E-4 : f32
    %538 = vector.broadcast %cst_112 : f32 to vector<1x1xf32>
    %539 = arith.mulf %537, %538 : vector<1x1xf32>
    %540 = arith.mulf %531, %531 : vector<1x1xf32>
    %541 = arith.subf %539, %540 : vector<1x1xf32>
    %cst_113 = arith.constant 9.99999974E-6 : f32
    %542 = vector.broadcast %cst_113 : f32 to vector<1x1xf32>
    %543 = arith.addf %541, %542 : vector<1x1xf32>
    %544 = math.rsqrt %543 : vector<1x1xf32>
    %545 = vector.extract_strided_slice %452 {offsets = [16, 0], sizes = [8, 256], strides = [1, 1]} : vector<64x256xf32> to vector<8x256xf32>
    %546 = vector.broadcast %531 : vector<1x1xf32> to vector<8x256xf32>
    %547 = arith.subf %545, %546 : vector<8x256xf32>
    %548 = vector.broadcast %544 : vector<1x1xf32> to vector<8x256xf32>
    %549 = arith.mulf %547, %548 : vector<8x256xf32>
    %550 = vector.extract_strided_slice %453 {offsets = [16, 0], sizes = [8, 1], strides = [1, 1]} : vector<64x1xf32> to vector<8x1xf32>
    %551 = vector.broadcast %550 : vector<8x1xf32> to vector<8x256xf32>
    %552 = arith.mulf %549, %551 : vector<8x256xf32>
    %553 = vector.extract_strided_slice %454 {offsets = [16, 0], sizes = [8, 1], strides = [1, 1]} : vector<64x1xf32> to vector<8x1xf32>
    %554 = vector.broadcast %553 : vector<8x1xf32> to vector<8x256xf32>
    %555 = arith.addf %552, %554 : vector<8x256xf32>
    %556 = vector.extract_strided_slice %456 {offsets = [24, 0], sizes = [8, 1], strides = [1, 1]} : vector<64x1xf32> to vector<8x1xf32>
    %557 = vector.shape_cast %556 : vector<8x1xf32> to vector<1x8x1xf32>
    %cst_114 = arith.constant dense<0.000000e+00> : vector<1xf32>
    %558 = vector.multi_reduction <add>, %557, %cst_114 [1, 2] : vector<1x8x1xf32> to vector<1xf32>
    %559 = vector.shape_cast %558 : vector<1xf32> to vector<1x1x1xf32>
    %560 = vector.extract %559[0, 0, 0] : f32 from vector<1x1x1xf32>
    %561 = vector.broadcast %560 : f32 to vector<1x1xf32>
    %cst_115 = arith.constant 4.8828125E-4 : f32
    %562 = vector.broadcast %cst_115 : f32 to vector<1x1xf32>
    %563 = arith.mulf %561, %562 : vector<1x1xf32>
    %564 = vector.extract_strided_slice %459 {offsets = [24, 0], sizes = [8, 1], strides = [1, 1]} : vector<64x1xf32> to vector<8x1xf32>
    %565 = vector.shape_cast %564 : vector<8x1xf32> to vector<1x8x1xf32>
    %cst_116 = arith.constant dense<0.000000e+00> : vector<1xf32>
    %566 = vector.multi_reduction <add>, %565, %cst_116 [1, 2] : vector<1x8x1xf32> to vector<1xf32>
    %567 = vector.shape_cast %566 : vector<1xf32> to vector<1x1x1xf32>
    %568 = vector.extract %567[0, 0, 0] : f32 from vector<1x1x1xf32>
    %569 = vector.broadcast %568 : f32 to vector<1x1xf32>
    %cst_117 = arith.constant 4.8828125E-4 : f32
    %570 = vector.broadcast %cst_117 : f32 to vector<1x1xf32>
    %571 = arith.mulf %569, %570 : vector<1x1xf32>
    %572 = arith.mulf %563, %563 : vector<1x1xf32>
    %573 = arith.subf %571, %572 : vector<1x1xf32>
    %cst_118 = arith.constant 9.99999974E-6 : f32
    %574 = vector.broadcast %cst_118 : f32 to vector<1x1xf32>
    %575 = arith.addf %573, %574 : vector<1x1xf32>
    %576 = math.rsqrt %575 : vector<1x1xf32>
    %577 = vector.extract_strided_slice %452 {offsets = [24, 0], sizes = [8, 256], strides = [1, 1]} : vector<64x256xf32> to vector<8x256xf32>
    %578 = vector.broadcast %563 : vector<1x1xf32> to vector<8x256xf32>
    %579 = arith.subf %577, %578 : vector<8x256xf32>
    %580 = vector.broadcast %576 : vector<1x1xf32> to vector<8x256xf32>
    %581 = arith.mulf %579, %580 : vector<8x256xf32>
    %582 = vector.extract_strided_slice %453 {offsets = [24, 0], sizes = [8, 1], strides = [1, 1]} : vector<64x1xf32> to vector<8x1xf32>
    %583 = vector.broadcast %582 : vector<8x1xf32> to vector<8x256xf32>
    %584 = arith.mulf %581, %583 : vector<8x256xf32>
    %585 = vector.extract_strided_slice %454 {offsets = [24, 0], sizes = [8, 1], strides = [1, 1]} : vector<64x1xf32> to vector<8x1xf32>
    %586 = vector.broadcast %585 : vector<8x1xf32> to vector<8x256xf32>
    %587 = arith.addf %584, %586 : vector<8x256xf32>
    %588 = vector.extract_strided_slice %456 {offsets = [32, 0], sizes = [8, 1], strides = [1, 1]} : vector<64x1xf32> to vector<8x1xf32>
    %589 = vector.shape_cast %588 : vector<8x1xf32> to vector<1x8x1xf32>
    %cst_119 = arith.constant dense<0.000000e+00> : vector<1xf32>
    %590 = vector.multi_reduction <add>, %589, %cst_119 [1, 2] : vector<1x8x1xf32> to vector<1xf32>
    %591 = vector.shape_cast %590 : vector<1xf32> to vector<1x1x1xf32>
    %592 = vector.extract %591[0, 0, 0] : f32 from vector<1x1x1xf32>
    %593 = vector.broadcast %592 : f32 to vector<1x1xf32>
    %cst_120 = arith.constant 4.8828125E-4 : f32
    %594 = vector.broadcast %cst_120 : f32 to vector<1x1xf32>
    %595 = arith.mulf %593, %594 : vector<1x1xf32>
    %596 = vector.extract_strided_slice %459 {offsets = [32, 0], sizes = [8, 1], strides = [1, 1]} : vector<64x1xf32> to vector<8x1xf32>
    %597 = vector.shape_cast %596 : vector<8x1xf32> to vector<1x8x1xf32>
    %cst_121 = arith.constant dense<0.000000e+00> : vector<1xf32>
    %598 = vector.multi_reduction <add>, %597, %cst_121 [1, 2] : vector<1x8x1xf32> to vector<1xf32>
    %599 = vector.shape_cast %598 : vector<1xf32> to vector<1x1x1xf32>
    %600 = vector.extract %599[0, 0, 0] : f32 from vector<1x1x1xf32>
    %601 = vector.broadcast %600 : f32 to vector<1x1xf32>
    %cst_122 = arith.constant 4.8828125E-4 : f32
    %602 = vector.broadcast %cst_122 : f32 to vector<1x1xf32>
    %603 = arith.mulf %601, %602 : vector<1x1xf32>
    %604 = arith.mulf %595, %595 : vector<1x1xf32>
    %605 = arith.subf %603, %604 : vector<1x1xf32>
    %cst_123 = arith.constant 9.99999974E-6 : f32
    %606 = vector.broadcast %cst_123 : f32 to vector<1x1xf32>
    %607 = arith.addf %605, %606 : vector<1x1xf32>
    %608 = math.rsqrt %607 : vector<1x1xf32>
    %609 = vector.extract_strided_slice %452 {offsets = [32, 0], sizes = [8, 256], strides = [1, 1]} : vector<64x256xf32> to vector<8x256xf32>
    %610 = vector.broadcast %595 : vector<1x1xf32> to vector<8x256xf32>
    %611 = arith.subf %609, %610 : vector<8x256xf32>
    %612 = vector.broadcast %608 : vector<1x1xf32> to vector<8x256xf32>
    %613 = arith.mulf %611, %612 : vector<8x256xf32>
    %614 = vector.extract_strided_slice %453 {offsets = [32, 0], sizes = [8, 1], strides = [1, 1]} : vector<64x1xf32> to vector<8x1xf32>
    %615 = vector.broadcast %614 : vector<8x1xf32> to vector<8x256xf32>
    %616 = arith.mulf %613, %615 : vector<8x256xf32>
    %617 = vector.extract_strided_slice %454 {offsets = [32, 0], sizes = [8, 1], strides = [1, 1]} : vector<64x1xf32> to vector<8x1xf32>
    %618 = vector.broadcast %617 : vector<8x1xf32> to vector<8x256xf32>
    %619 = arith.addf %616, %618 : vector<8x256xf32>
    %620 = vector.extract_strided_slice %456 {offsets = [40, 0], sizes = [8, 1], strides = [1, 1]} : vector<64x1xf32> to vector<8x1xf32>
    %621 = vector.shape_cast %620 : vector<8x1xf32> to vector<1x8x1xf32>
    %cst_124 = arith.constant dense<0.000000e+00> : vector<1xf32>
    %622 = vector.multi_reduction <add>, %621, %cst_124 [1, 2] : vector<1x8x1xf32> to vector<1xf32>
    %623 = vector.shape_cast %622 : vector<1xf32> to vector<1x1x1xf32>
    %624 = vector.extract %623[0, 0, 0] : f32 from vector<1x1x1xf32>
    %625 = vector.broadcast %624 : f32 to vector<1x1xf32>
    %cst_125 = arith.constant 4.8828125E-4 : f32
    %626 = vector.broadcast %cst_125 : f32 to vector<1x1xf32>
    %627 = arith.mulf %625, %626 : vector<1x1xf32>
    %628 = vector.extract_strided_slice %459 {offsets = [40, 0], sizes = [8, 1], strides = [1, 1]} : vector<64x1xf32> to vector<8x1xf32>
    %629 = vector.shape_cast %628 : vector<8x1xf32> to vector<1x8x1xf32>
    %cst_126 = arith.constant dense<0.000000e+00> : vector<1xf32>
    %630 = vector.multi_reduction <add>, %629, %cst_126 [1, 2] : vector<1x8x1xf32> to vector<1xf32>
    %631 = vector.shape_cast %630 : vector<1xf32> to vector<1x1x1xf32>
    %632 = vector.extract %631[0, 0, 0] : f32 from vector<1x1x1xf32>
    %633 = vector.broadcast %632 : f32 to vector<1x1xf32>
    %cst_127 = arith.constant 4.8828125E-4 : f32
    %634 = vector.broadcast %cst_127 : f32 to vector<1x1xf32>
    %635 = arith.mulf %633, %634 : vector<1x1xf32>
    %636 = arith.mulf %627, %627 : vector<1x1xf32>
    %637 = arith.subf %635, %636 : vector<1x1xf32>
    %cst_128 = arith.constant 9.99999974E-6 : f32
    %638 = vector.broadcast %cst_128 : f32 to vector<1x1xf32>
    %639 = arith.addf %637, %638 : vector<1x1xf32>
    %640 = math.rsqrt %639 : vector<1x1xf32>
    %641 = vector.extract_strided_slice %452 {offsets = [40, 0], sizes = [8, 256], strides = [1, 1]} : vector<64x256xf32> to vector<8x256xf32>
    %642 = vector.broadcast %627 : vector<1x1xf32> to vector<8x256xf32>
    %643 = arith.subf %641, %642 : vector<8x256xf32>
    %644 = vector.broadcast %640 : vector<1x1xf32> to vector<8x256xf32>
    %645 = arith.mulf %643, %644 : vector<8x256xf32>
    %646 = vector.extract_strided_slice %453 {offsets = [40, 0], sizes = [8, 1], strides = [1, 1]} : vector<64x1xf32> to vector<8x1xf32>
    %647 = vector.broadcast %646 : vector<8x1xf32> to vector<8x256xf32>
    %648 = arith.mulf %645, %647 : vector<8x256xf32>
    %649 = vector.extract_strided_slice %454 {offsets = [40, 0], sizes = [8, 1], strides = [1, 1]} : vector<64x1xf32> to vector<8x1xf32>
    %650 = vector.broadcast %649 : vector<8x1xf32> to vector<8x256xf32>
    %651 = arith.addf %648, %650 : vector<8x256xf32>
    %652 = vector.extract_strided_slice %456 {offsets = [48, 0], sizes = [8, 1], strides = [1, 1]} : vector<64x1xf32> to vector<8x1xf32>
    %653 = vector.shape_cast %652 : vector<8x1xf32> to vector<1x8x1xf32>
    %cst_129 = arith.constant dense<0.000000e+00> : vector<1xf32>
    %654 = vector.multi_reduction <add>, %653, %cst_129 [1, 2] : vector<1x8x1xf32> to vector<1xf32>
    %655 = vector.shape_cast %654 : vector<1xf32> to vector<1x1x1xf32>
    %656 = vector.extract %655[0, 0, 0] : f32 from vector<1x1x1xf32>
    %657 = vector.broadcast %656 : f32 to vector<1x1xf32>
    %cst_130 = arith.constant 4.8828125E-4 : f32
    %658 = vector.broadcast %cst_130 : f32 to vector<1x1xf32>
    %659 = arith.mulf %657, %658 : vector<1x1xf32>
    %660 = vector.extract_strided_slice %459 {offsets = [48, 0], sizes = [8, 1], strides = [1, 1]} : vector<64x1xf32> to vector<8x1xf32>
    %661 = vector.shape_cast %660 : vector<8x1xf32> to vector<1x8x1xf32>
    %cst_131 = arith.constant dense<0.000000e+00> : vector<1xf32>
    %662 = vector.multi_reduction <add>, %661, %cst_131 [1, 2] : vector<1x8x1xf32> to vector<1xf32>
    %663 = vector.shape_cast %662 : vector<1xf32> to vector<1x1x1xf32>
    %664 = vector.extract %663[0, 0, 0] : f32 from vector<1x1x1xf32>
    %665 = vector.broadcast %664 : f32 to vector<1x1xf32>
    %cst_132 = arith.constant 4.8828125E-4 : f32
    %666 = vector.broadcast %cst_132 : f32 to vector<1x1xf32>
    %667 = arith.mulf %665, %666 : vector<1x1xf32>
    %668 = arith.mulf %659, %659 : vector<1x1xf32>
    %669 = arith.subf %667, %668 : vector<1x1xf32>
    %cst_133 = arith.constant 9.99999974E-6 : f32
    %670 = vector.broadcast %cst_133 : f32 to vector<1x1xf32>
    %671 = arith.addf %669, %670 : vector<1x1xf32>
    %672 = math.rsqrt %671 : vector<1x1xf32>
    %673 = vector.extract_strided_slice %452 {offsets = [48, 0], sizes = [8, 256], strides = [1, 1]} : vector<64x256xf32> to vector<8x256xf32>
    %674 = vector.broadcast %659 : vector<1x1xf32> to vector<8x256xf32>
    %675 = arith.subf %673, %674 : vector<8x256xf32>
    %676 = vector.broadcast %672 : vector<1x1xf32> to vector<8x256xf32>
    %677 = arith.mulf %675, %676 : vector<8x256xf32>
    %678 = vector.extract_strided_slice %453 {offsets = [48, 0], sizes = [8, 1], strides = [1, 1]} : vector<64x1xf32> to vector<8x1xf32>
    %679 = vector.broadcast %678 : vector<8x1xf32> to vector<8x256xf32>
    %680 = arith.mulf %677, %679 : vector<8x256xf32>
    %681 = vector.extract_strided_slice %454 {offsets = [48, 0], sizes = [8, 1], strides = [1, 1]} : vector<64x1xf32> to vector<8x1xf32>
    %682 = vector.broadcast %681 : vector<8x1xf32> to vector<8x256xf32>
    %683 = arith.addf %680, %682 : vector<8x256xf32>
    %684 = vector.extract_strided_slice %456 {offsets = [56, 0], sizes = [8, 1], strides = [1, 1]} : vector<64x1xf32> to vector<8x1xf32>
    %685 = vector.shape_cast %684 : vector<8x1xf32> to vector<1x8x1xf32>
    %cst_134 = arith.constant dense<0.000000e+00> : vector<1xf32>
    %686 = vector.multi_reduction <add>, %685, %cst_134 [1, 2] : vector<1x8x1xf32> to vector<1xf32>
    %687 = vector.shape_cast %686 : vector<1xf32> to vector<1x1x1xf32>
    %688 = vector.extract %687[0, 0, 0] : f32 from vector<1x1x1xf32>
    %689 = vector.broadcast %688 : f32 to vector<1x1xf32>
    %cst_135 = arith.constant 4.8828125E-4 : f32
    %690 = vector.broadcast %cst_135 : f32 to vector<1x1xf32>
    %691 = arith.mulf %689, %690 : vector<1x1xf32>
    %692 = vector.extract_strided_slice %459 {offsets = [56, 0], sizes = [8, 1], strides = [1, 1]} : vector<64x1xf32> to vector<8x1xf32>
    %693 = vector.shape_cast %692 : vector<8x1xf32> to vector<1x8x1xf32>
    %cst_136 = arith.constant dense<0.000000e+00> : vector<1xf32>
    %694 = vector.multi_reduction <add>, %693, %cst_136 [1, 2] : vector<1x8x1xf32> to vector<1xf32>
    %695 = vector.shape_cast %694 : vector<1xf32> to vector<1x1x1xf32>
    %696 = vector.extract %695[0, 0, 0] : f32 from vector<1x1x1xf32>
    %697 = vector.broadcast %696 : f32 to vector<1x1xf32>
    %cst_137 = arith.constant 4.8828125E-4 : f32
    %698 = vector.broadcast %cst_137 : f32 to vector<1x1xf32>
    %699 = arith.mulf %697, %698 : vector<1x1xf32>
    %700 = arith.mulf %691, %691 : vector<1x1xf32>
    %701 = arith.subf %699, %700 : vector<1x1xf32>
    %cst_138 = arith.constant 9.99999974E-6 : f32
    %702 = vector.broadcast %cst_138 : f32 to vector<1x1xf32>
    %703 = arith.addf %701, %702 : vector<1x1xf32>
    %704 = math.rsqrt %703 : vector<1x1xf32>
    %705 = vector.extract_strided_slice %452 {offsets = [56, 0], sizes = [8, 256], strides = [1, 1]} : vector<64x256xf32> to vector<8x256xf32>
    %706 = vector.broadcast %691 : vector<1x1xf32> to vector<8x256xf32>
    %707 = arith.subf %705, %706 : vector<8x256xf32>
    %708 = vector.broadcast %704 : vector<1x1xf32> to vector<8x256xf32>
    %709 = arith.mulf %707, %708 : vector<8x256xf32>
    %710 = vector.extract_strided_slice %453 {offsets = [56, 0], sizes = [8, 1], strides = [1, 1]} : vector<64x1xf32> to vector<8x1xf32>
    %711 = vector.broadcast %710 : vector<8x1xf32> to vector<8x256xf32>
    %712 = arith.mulf %709, %711 : vector<8x256xf32>
    %713 = vector.extract_strided_slice %454 {offsets = [56, 0], sizes = [8, 1], strides = [1, 1]} : vector<64x1xf32> to vector<8x1xf32>
    %714 = vector.broadcast %713 : vector<8x1xf32> to vector<8x256xf32>
    %715 = arith.addf %712, %714 : vector<8x256xf32>
    %716 = tpu.concatenate %491, %523, %555, %587, %619, %651, %683, %715 in 0 : vector<8x256xf32>, vector<8x256xf32>, vector<8x256xf32>, vector<8x256xf32>, vector<8x256xf32>, vector<8x256xf32>, vector<8x256xf32>, vector<8x256xf32> -> vector<64x256xf32>
    %c0_139 = arith.constant 0 : index
    %c0_140 = arith.constant 0 : index
    %717 = vector.load %arg12[%c0_139, %c0_140] : memref<3x576xf32, #tpu.memory_space<vmem>>, vector<3x576xf32>
    %c0_141 = arith.constant 0 : index
    %c0_142 = arith.constant 0 : index
    %718 = vector.load %arg13[%c0_141, %c0_142] : memref<3x1xf32, #tpu.memory_space<vmem>>, vector<3x1xf32>
    %c17_i32_143 = arith.constant 17 : i32
    %719 = tpu.dynamic_rotate %716 by %c17_i32_143 dim 1 : vector<64x256xf32>, i32 -> vector<64x256xf32>
    %720 = vector.extract_strided_slice %106 {offsets = [0, 0], sizes = [1, 256], strides = [1, 1]} : vector<9x256xf32> to vector<1x256xf32>
    %721 = vector.broadcast %720 : vector<1x256xf32> to vector<64x256xf32>
    %722 = arith.mulf %719, %721 : vector<64x256xf32>
    %c16_i32_144 = arith.constant 16 : i32
    %723 = tpu.dynamic_rotate %716 by %c16_i32_144 dim 1 : vector<64x256xf32>, i32 -> vector<64x256xf32>
    %724 = vector.extract_strided_slice %106 {offsets = [1, 0], sizes = [1, 256], strides = [1, 1]} : vector<9x256xf32> to vector<1x256xf32>
    %725 = vector.broadcast %724 : vector<1x256xf32> to vector<64x256xf32>
    %726 = arith.mulf %723, %725 : vector<64x256xf32>
    %c15_i32_145 = arith.constant 15 : i32
    %727 = tpu.dynamic_rotate %716 by %c15_i32_145 dim 1 : vector<64x256xf32>, i32 -> vector<64x256xf32>
    %728 = vector.extract_strided_slice %106 {offsets = [2, 0], sizes = [1, 256], strides = [1, 1]} : vector<9x256xf32> to vector<1x256xf32>
    %729 = vector.broadcast %728 : vector<1x256xf32> to vector<64x256xf32>
    %730 = arith.mulf %727, %729 : vector<64x256xf32>
    %c1_i32_146 = arith.constant 1 : i32
    %731 = tpu.dynamic_rotate %716 by %c1_i32_146 dim 1 : vector<64x256xf32>, i32 -> vector<64x256xf32>
    %732 = vector.extract_strided_slice %106 {offsets = [3, 0], sizes = [1, 256], strides = [1, 1]} : vector<9x256xf32> to vector<1x256xf32>
    %733 = vector.broadcast %732 : vector<1x256xf32> to vector<64x256xf32>
    %734 = arith.mulf %731, %733 : vector<64x256xf32>
    %c255_i32_147 = arith.constant 255 : i32
    %735 = tpu.dynamic_rotate %716 by %c255_i32_147 dim 1 : vector<64x256xf32>, i32 -> vector<64x256xf32>
    %736 = vector.extract_strided_slice %106 {offsets = [5, 0], sizes = [1, 256], strides = [1, 1]} : vector<9x256xf32> to vector<1x256xf32>
    %737 = vector.broadcast %736 : vector<1x256xf32> to vector<64x256xf32>
    %738 = arith.mulf %735, %737 : vector<64x256xf32>
    %c241_i32_148 = arith.constant 241 : i32
    %739 = tpu.dynamic_rotate %716 by %c241_i32_148 dim 1 : vector<64x256xf32>, i32 -> vector<64x256xf32>
    %740 = vector.extract_strided_slice %106 {offsets = [6, 0], sizes = [1, 256], strides = [1, 1]} : vector<9x256xf32> to vector<1x256xf32>
    %741 = vector.broadcast %740 : vector<1x256xf32> to vector<64x256xf32>
    %742 = arith.mulf %739, %741 : vector<64x256xf32>
    %c240_i32_149 = arith.constant 240 : i32
    %743 = tpu.dynamic_rotate %716 by %c240_i32_149 dim 1 : vector<64x256xf32>, i32 -> vector<64x256xf32>
    %744 = vector.extract_strided_slice %106 {offsets = [7, 0], sizes = [1, 256], strides = [1, 1]} : vector<9x256xf32> to vector<1x256xf32>
    %745 = vector.broadcast %744 : vector<1x256xf32> to vector<64x256xf32>
    %746 = arith.mulf %743, %745 : vector<64x256xf32>
    %c239_i32_150 = arith.constant 239 : i32
    %747 = tpu.dynamic_rotate %716 by %c239_i32_150 dim 1 : vector<64x256xf32>, i32 -> vector<64x256xf32>
    %748 = vector.extract_strided_slice %106 {offsets = [8, 0], sizes = [1, 256], strides = [1, 1]} : vector<9x256xf32> to vector<1x256xf32>
    %749 = vector.broadcast %748 : vector<1x256xf32> to vector<64x256xf32>
    %750 = arith.mulf %747, %749 : vector<64x256xf32>
    %751 = tpu.concatenate %722, %726, %730, %734, %716, %738, %742, %746, %750 in 0 : vector<64x256xf32>, vector<64x256xf32>, vector<64x256xf32>, vector<64x256xf32>, vector<64x256xf32>, vector<64x256xf32>, vector<64x256xf32>, vector<64x256xf32>, vector<64x256xf32> -> vector<576x256xf32>
    %cst_151 = arith.constant dense<0.000000e+00> : vector<3x256xf32>
    %752 = tpu.matmul %717, %751, %cst_151 {dimension_numbers = #tpu.dot_dimension_numbers<[1], [0], [0], [1], [0, 0, 1, 1], [], []>} : vector<3x576xf32>, vector<576x256xf32>, vector<3x256xf32> -> vector<3x256xf32>
    %753 = vector.broadcast %718 : vector<3x1xf32> to vector<3x256xf32>
    %754 = arith.addf %752, %753 : vector<3x256xf32>
    %755 = arith.addf %105, %754 : vector<3x256xf32>
    %756 = arith.mulf %755, %755 : vector<3x256xf32>
    %cst_152 = arith.constant dense<0.000000e+00> : vector<256xf32>
    %757 = vector.multi_reduction <add>, %756, %cst_152 [0] : vector<3x256xf32> to vector<256xf32>
    %758 = vector.shape_cast %757 : vector<256xf32> to vector<1x256xf32>
    %759 = math.rsqrt %758 : vector<1x256xf32>
    %760 = vector.broadcast %759 : vector<1x256xf32> to vector<3x256xf32>
    %761 = arith.mulf %755, %760 : vector<3x256xf32>
    %762 = tpu.concatenate %108, %761 in 0 : vector<3x256xf32>, vector<3x256xf32> -> vector<6x256xf32>
    %c0_153 = arith.constant 0 : index
    %c0_154 = arith.constant 0 : index
    %763 = vector.load %arg14[%c0_153, %c0_154] : memref<3x6xf32, #tpu.memory_space<vmem>>, vector<3x6xf32>
    %cst_155 = arith.constant dense<0.000000e+00> : vector<3x256xf32>
    %764 = tpu.matmul %763, %762, %cst_155 {dimension_numbers = #tpu.dot_dimension_numbers<[1], [0], [0], [1], [0, 0, 1, 1], [], []>} : vector<3x6xf32>, vector<6x256xf32>, vector<3x256xf32> -> vector<3x256xf32>
    %c0_156 = arith.constant 0 : index
    %c0_157 = arith.constant 0 : index
    %765 = vector.load %arg15[%c0_156, %c0_157] : memref<3x1xf32, #tpu.memory_space<vmem>>, vector<3x1xf32>
    %766 = vector.broadcast %765 : vector<3x1xf32> to vector<3x256xf32>
    %767 = arith.addf %764, %766 : vector<3x256xf32>
    %768 = arith.mulf %767, %767 : vector<3x256xf32>
    %cst_158 = arith.constant dense<0.000000e+00> : vector<256xf32>
    %769 = vector.multi_reduction <add>, %768, %cst_158 [0] : vector<3x256xf32> to vector<256xf32>
    %770 = vector.shape_cast %769 : vector<256xf32> to vector<1x256xf32>
    %771 = math.rsqrt %770 : vector<1x256xf32>
    %772 = vector.broadcast %771 : vector<1x256xf32> to vector<3x256xf32>
    %773 = arith.mulf %767, %772 : vector<3x256xf32>
    %cst_159 = arith.constant 1.000000e+00 : f32
    %774 = vector.broadcast %cst_159 : f32 to vector<3x256xf32>
    %775 = arith.addf %773, %774 : vector<3x256xf32>
    %cst_160 = arith.constant 5.000000e-01 : f32
    %776 = vector.broadcast %cst_160 : f32 to vector<3x256xf32>
    %777 = arith.mulf %775, %776 : vector<3x256xf32>
    %cst_161 = arith.constant 0.000000e+00 : f32
    %cst_162 = arith.constant 1.000000e+00 : f32
    %778 = vector.broadcast %cst_161 : f32 to vector<3x256xf32>
    %779 = arith.maximumf %778, %777 : vector<3x256xf32>
    %780 = vector.broadcast %cst_162 : f32 to vector<3x256xf32>
    %781 = arith.minimumf %780, %779 : vector<3x256xf32>
    %c0_163 = arith.constant 0 : index
    %c0_164 = arith.constant 0 : index
    %c0_165 = arith.constant 0 : index
    %782 = vector.load %arg16[%c0_163, %c0_164, %c0_165] : memref<1x3x256xf32, #tpu.memory_space<vmem>>, vector<1x3x256xf32>
    %783 = vector.shape_cast %782 : vector<1x3x256xf32> to vector<3x256xf32>
    %784 = vector.shape_cast %781 : vector<3x256xf32> to vector<1x3x256xf32>
    tpu.vector_store %arg16[%c0_163, %c0_164, %c0_165], %784 {strides = array<i32>} : memref<1x3x256xf32, #tpu.memory_space<vmem>>, vector<1x3x256xf32>,
    return
  }
  func.func @transform_0(%arg0: i32) -> (i32, i32, i32, i32) {
    %c0_i32 = arith.constant 0 : i32
    %c0_i32_0 = arith.constant 0 : i32
    %c0_i32_1 = arith.constant 0 : i32
    %c0_i32_2 = arith.constant 0 : i32
    return %arg0, %c0_i32, %c0_i32_0, %c0_i32_1 : i32, i32, i32, i32
  }
  func.func @transform_1(%arg0: i32) -> (i32, i32, i32) {
    %c0_i32 = arith.constant 0 : i32
    %c0_i32_0 = arith.constant 0 : i32
    %c0_i32_1 = arith.constant 0 : i32
    return %arg0, %c0_i32, %c0_i32_0 : i32, i32, i32
  }
  func.func @transform_2(%arg0: i32) -> (i32, i32) {
    %c0_i32 = arith.constant 0 : i32
    %c0_i32_0 = arith.constant 0 : i32
    %c0_i32_1 = arith.constant 0 : i32
    return %c0_i32, %c0_i32_0 : i32, i32
  }
  func.func @transform_3(%arg0: i32) -> (i32, i32) {
    %c0_i32 = arith.constant 0 : i32
    %c0_i32_0 = arith.constant 0 : i32
    %c0_i32_1 = arith.constant 0 : i32
    return %c0_i32, %c0_i32_0 : i32, i32
  }
  func.func @transform_4(%arg0: i32) -> (i32, i32) {
    %c0_i32 = arith.constant 0 : i32
    %c0_i32_0 = arith.constant 0 : i32
    %c0_i32_1 = arith.constant 0 : i32
    return %c0_i32, %c0_i32_0 : i32, i32
  }
  func.func @transform_5(%arg0: i32) -> (i32, i32) {
    %c0_i32 = arith.constant 0 : i32
    %c0_i32_0 = arith.constant 0 : i32
    %c0_i32_1 = arith.constant 0 : i32
    return %c0_i32, %c0_i32_0 : i32, i32
  }
  func.func @transform_6(%arg0: i32) -> (i32, i32) {
    %c0_i32 = arith.constant 0 : i32
    %c0_i32_0 = arith.constant 0 : i32
    %c0_i32_1 = arith.constant 0 : i32
    return %c0_i32, %c0_i32_0 : i32, i32
  }
  func.func @transform_7(%arg0: i32) -> (i32, i32) {
    %c0_i32 = arith.constant 0 : i32
    %c0_i32_0 = arith.constant 0 : i32
    %c0_i32_1 = arith.constant 0 : i32
    return %c0_i32, %c0_i32_0 : i32, i32
  }
  func.func @transform_8(%arg0: i32) -> (i32, i32) {
    %c0_i32 = arith.constant 0 : i32
    %c0_i32_0 = arith.constant 0 : i32
    %c0_i32_1 = arith.constant 0 : i32
    return %c0_i32, %c0_i32_0 : i32, i32
  }
  func.func @transform_9(%arg0: i32) -> (i32, i32) {
    %c0_i32 = arith.constant 0 : i32
    %c0_i32_0 = arith.constant 0 : i32
    %c0_i32_1 = arith.constant 0 : i32
    return %c0_i32, %c0_i32_0 : i32, i32
  }
  func.func @transform_10(%arg0: i32) -> (i32, i32) {
    %c0_i32 = arith.constant 0 : i32
    %c0_i32_0 = arith.constant 0 : i32
    %c0_i32_1 = arith.constant 0 : i32
    return %c0_i32, %c0_i32_0 : i32, i32
  }
  func.func @transform_11(%arg0: i32) -> (i32, i32) {
    %c0_i32 = arith.constant 0 : i32
    %c0_i32_0 = arith.constant 0 : i32
    %c0_i32_1 = arith.constant 0 : i32
    return %c0_i32, %c0_i32_0 : i32, i32
  }
  func.func @transform_12(%arg0: i32) -> (i32, i32) {
    %c0_i32 = arith.constant 0 : i32
    %c0_i32_0 = arith.constant 0 : i32
    %c0_i32_1 = arith.constant 0 : i32
    return %c0_i32, %c0_i32_0 : i32, i32
  }
  func.func @transform_13(%arg0: i32) -> (i32, i32) {
    %c0_i32 = arith.constant 0 : i32
    %c0_i32_0 = arith.constant 0 : i32
    %c0_i32_1 = arith.constant 0 : i32
    return %c0_i32, %c0_i32_0 : i32, i32
  }
  func.func @transform_14(%arg0: i32) -> (i32, i32) {
    %c0_i32 = arith.constant 0 : i32
    %c0_i32_0 = arith.constant 0 : i32
    %c0_i32_1 = arith.constant 0 : i32
    return %c0_i32, %c0_i32_0 : i32, i32
  }
  func.func @transform_15(%arg0: i32) -> (i32, i32, i32) {
    %c0_i32 = arith.constant 0 : i32
    %c0_i32_0 = arith.constant 0 : i32
    %c0_i32_1 = arith.constant 0 : i32
    return %arg0, %c0_i32, %c0_i32_0 : i32, i32, i32
  }
}

</mosaic_0001>

<llo_original>
// kernel: geonet_depth_to_normal.1
$region0: #{geonet_depth_to_normal.1}
  #allocation0 [shape = 'u32[]', space=smem, size = 0x4, offset = 0x4, fixed_abs, tag = 'smem constant byte address 0x4 - core index']
  #allocation1 [shape = 'u32[144,128]{1,0:T(1,128)}', space=vmem, size = 0x12000, scoped, tag = 'internal scratch']
  %s0 = inlined_call_operand.vmem [shape: f32[2,3,81,256], index: 0, kind: input, shape index: {}]
  %s1 = inlined_call_operand.vmem [shape: f32[2,3,256], index: 1, kind: input, shape index: {}]
  %s2 = inlined_call_operand.vmem [shape: f32[9,256], index: 2, kind: input, shape index: {}]
  %s3 = inlined_call_operand.vmem [shape: f32[64,27], index: 3, kind: input, shape index: {}]
  %s4 = inlined_call_operand.vmem [shape: f32[64,1], index: 4, kind: input, shape index: {}]
  %s5 = inlined_call_operand.vmem [shape: f32[64,1], index: 5, kind: input, shape index: {}]
  %s6 = inlined_call_operand.vmem [shape: f32[64,1], index: 6, kind: input, shape index: {}]
  %s7 = inlined_call_operand.vmem [shape: f32[64,576], index: 7, kind: input, shape index: {}]
  %s8 = inlined_call_operand.vmem [shape: f32[64,1], index: 8, kind: input, shape index: {}]
  %s9 = inlined_call_operand.vmem [shape: f32[64,1], index: 9, kind: input, shape index: {}]
  %s10 = inlined_call_operand.vmem [shape: f32[64,1], index: 10, kind: input, shape index: {}]
  %s11 = inlined_call_operand.vmem [shape: f32[3,576], index: 11, kind: input, shape index: {}]
  %s12 = inlined_call_operand.vmem [shape: f32[3,1], index: 12, kind: input, shape index: {}]
  %s13 = inlined_call_operand.vmem [shape: f32[3,6], index: 13, kind: input, shape index: {}]
  %s14 = inlined_call_operand.vmem [shape: f32[3,1], index: 14, kind: input, shape index: {}]
  %s15 = inlined_call_operand.vmem [shape: f32[2,3,256], index: 15, kind: output, shape index: {}]
  %s16 = sld [smem:[#allocation0]]
  $region93: #{geonet_depth_to_normal.1} parent=0
    _
  %s18 = ssub.s32 1, %s16
  %s19 = scalar_select 0, %s18, %s16
  loop: start=0, step=1, limit=4
  $region2: #{geonet_depth_to_normal.1} parent=0 // loop_pre_header
    _
  $region3: #{geonet_depth_to_normal.1} parent=0 // loop_header
    %s21 = sphi 0, %s25
    %p22 = scmp.ge.s32.totalorder %s21, 4
    %s31 = sphi 0, %s33
    %s34 = sphi 0, %s31
    %s35 = sphi 0, %s34
    %s51 = sphi 0, %s35
    %s57 = sphi 0, %s59
    %s60 = sphi 0, %s57
    %s61 = sphi 0, %s60
    %s77 = sphi 0, %s61
    %s81 = sphi 0, %s81
    %s83 = sphi 0, %s81
    %s84 = sphi 0, %s83
    %s98 = sphi 0, %s84
    %s102 = sphi 0, %s102
    %s104 = sphi 0, %s102
    %s105 = sphi 0, %s104
    %s119 = sphi 0, %s105
    %s123 = sphi 0, %s123
    %s125 = sphi 0, %s123
    %s126 = sphi 0, %s125
    %s140 = sphi 0, %s126
    %s144 = sphi 0, %s144
    %s146 = sphi 0, %s144
    %s147 = sphi 0, %s146
    %s161 = sphi 0, %s147
    %s165 = sphi 0, %s165
    %s167 = sphi 0, %s165
    %s168 = sphi 0, %s167
    %s182 = sphi 0, %s168
    %s186 = sphi 0, %s186
    %s188 = sphi 0, %s186
    %s189 = sphi 0, %s188
    %s203 = sphi 0, %s189
    %s207 = sphi 0, %s207
    %s209 = sphi 0, %s207
    %s210 = sphi 0, %s209
    %s224 = sphi 0, %s210
    %s228 = sphi 0, %s228
    %s230 = sphi 0, %s228
    %s231 = sphi 0, %s230
    %s245 = sphi 0, %s231
    %s249 = sphi 0, %s249
    %s251 = sphi 0, %s249
    %s252 = sphi 0, %s251
    %s266 = sphi 0, %s252
    %s270 = sphi 0, %s270
    %s272 = sphi 0, %s270
    %s273 = sphi 0, %s272
    %s287 = sphi 0, %s273
    %s291 = sphi 0, %s291
    %s293 = sphi 0, %s291
    %s294 = sphi 0, %s293
    %s308 = sphi 0, %s294
    %s312 = sphi 0, %s312
    %s314 = sphi 0, %s312
    %s315 = sphi 0, %s314
    %s329 = sphi 0, %s315
    %s333 = sphi 0, %s333
    %s335 = sphi 0, %s333
    %s336 = sphi 0, %s335
    %s350 = sphi 0, %s336
    %s356 = sphi 0, %s358
    %s359 = sphi 0, %s356
    %s360 = sphi 0, %s359
    %s376 = sphi 0, %s360
  $region4: #{geonet_depth_to_normal.1} parent=0 // loop_header_branch
    %24 = sbr.rel (%p22) target = $region8
  $region5: #{geonet_depth_to_normal.1} parent=0 // loop_body
    %s26 = ssub.s32 %s21, 1
    %s27 = ssub.s32 %s21, 2
    %s28 = sadd.s32 %s21, 1
    %s29 = ssub.s32 %s21, %s28
    %p30 = scmp.eq.s32.totalorder %s29, 0
    %s32 = sadd.s32 %s31, 1
    %s33 = scalar_select %p30, %s31, %s32
    %p36 = pneg %p30
    %p37 = scmp.eq.s32.totalorder %s21, 1
    %p38 = por %p36, %p37
    %p39 = scmp.ne.s32.totalorder %s31, %s34
    %p40 = scmp.eq.s32.totalorder %s21, 0
    %p41 = por %p39, %p40
    %p42 = scmp.ne.s32.totalorder %s31, %s34
    %p43 = scmp.eq.s32.totalorder %s26, 1
    %p44 = por %p42, %p43
    %p45 = scmp.ne.s32.totalorder %s34, %s35
    %p46 = scmp.eq.s32.totalorder %s26, 0
    %p47 = por %p45, %p46
    %p48 = scmp.ne.s32.totalorder %s34, %s35
    %p49 = scmp.eq.s32.totalorder %s27, 1
    %p50 = por %p48, %p49
    %p52 = scmp.ne.s32.totalorder %s35, %s51
    %p53 = scmp.eq.s32.totalorder %s27, 0
    %p54 = por %p52, %p53
    %s55 = ssub.s32 %s21, %s28
    %p56 = scmp.eq.s32.totalorder %s55, 0
    %s58 = sadd.s32 %s57, 1
    %s59 = scalar_select %p56, %s57, %s58
    %p62 = pneg %p56
    %p63 = scmp.eq.s32.totalorder %s21, 1
    %p64 = por %p62, %p63
    %p65 = scmp.ne.s32.totalorder %s57, %s60
    %p66 = scmp.eq.s32.totalorder %s21, 0
    %p67 = por %p65, %p66
    %p68 = scmp.ne.s32.totalorder %s57, %s60
    %p69 = scmp.eq.s32.totalorder %s26, 1
    %p70 = por %p68, %p69
    %p71 = scmp.ne.s32.totalorder %s60, %s61
    %p72 = scmp.eq.s32.totalorder %s26, 0
    %p73 = por %p71, %p72
    %p74 = scmp.ne.s32.totalorder %s60, %s61
    %p75 = scmp.eq.s32.totalorder %s27, 1
    %p76 = por %p74, %p75
    %p78 = scmp.ne.s32.totalorder %s61, %s77
    %p79 = scmp.eq.s32.totalorder %s27, 0
    %p80 = por %p78, %p79
    %s82 = sadd.s32 %s81, 1
    %p85 = scmp.eq.s32.totalorder %s21, 1
    %p86 = scmp.ne.s32.totalorder %s81, %s83
    %p87 = scmp.eq.s32.totalorder %s21, 0
    %p88 = por %p86, %p87
    %p89 = scmp.ne.s32.totalorder %s81, %s83
    %p90 = scmp.eq.s32.totalorder %s26, 1
    %p91 = por %p89, %p90
    %p92 = scmp.ne.s32.totalorder %s83, %s84
    %p93 = scmp.eq.s32.totalorder %s26, 0
    %p94 = por %p92, %p93
    %p95 = scmp.ne.s32.totalorder %s83, %s84
    %p96 = scmp.eq.s32.totalorder %s27, 1
    %p97 = por %p95, %p96
    %p99 = scmp.ne.s32.totalorder %s84, %s98
    %p100 = scmp.eq.s32.totalorder %s27, 0
    %p101 = por %p99, %p100
    %s103 = sadd.s32 %s102, 1
    %p106 = scmp.eq.s32.totalorder %s21, 1
    %p107 = scmp.ne.s32.totalorder %s102, %s104
    %p108 = scmp.eq.s32.totalorder %s21, 0
    %p109 = por %p107, %p108
    %p110 = scmp.ne.s32.totalorder %s102, %s104
    %p111 = scmp.eq.s32.totalorder %s26, 1
    %p112 = por %p110, %p111
    %p113 = scmp.ne.s32.totalorder %s104, %s105
    %p114 = scmp.eq.s32.totalorder %s26, 0
    %p115 = por %p113, %p114
    %p116 = scmp.ne.s32.totalorder %s104, %s105
    %p117 = scmp.eq.s32.totalorder %s27, 1
    %p118 = por %p116, %p117
    %p120 = scmp.ne.s32.totalorder %s105, %s119
    %p121 = scmp.eq.s32.totalorder %s27, 0
    %p122 = por %p120, %p121
    %s124 = sadd.s32 %s123, 1
    %p127 = scmp.eq.s32.totalorder %s21, 1
    %p128 = scmp.ne.s32.totalorder %s123, %s125
    %p129 = scmp.eq.s32.totalorder %s21, 0
    %p130 = por %p128, %p129
    %p131 = scmp.ne.s32.totalorder %s123, %s125
    %p132 = scmp.eq.s32.totalorder %s26, 1
    %p133 = por %p131, %p132
    %p134 = scmp.ne.s32.totalorder %s125, %s126
    %p135 = scmp.eq.s32.totalorder %s26, 0
    %p136 = por %p134, %p135
    %p137 = scmp.ne.s32.totalorder %s125, %s126
    %p138 = scmp.eq.s32.totalorder %s27, 1
    %p139 = por %p137, %p138
    %p141 = scmp.ne.s32.totalorder %s126, %s140
    %p142 = scmp.eq.s32.totalorder %s27, 0
    %p143 = por %p141, %p142
    %s145 = sadd.s32 %s144, 1
    %p148 = scmp.eq.s32.totalorder %s21, 1
    %p149 = scmp.ne.s32.totalorder %s144, %s146
    %p150 = scmp.eq.s32.totalorder %s21, 0
    %p151 = por %p149, %p150
    %p152 = scmp.ne.s32.totalorder %s144, %s146
    %p153 = scmp.eq.s32.totalorder %s26, 1
    %p154 = por %p152, %p153
    %p155 = scmp.ne.s32.totalorder %s146, %s147
    %p156 = scmp.eq.s32.totalorder %s26, 0
    %p157 = por %p155, %p156
    %p158 = scmp.ne.s32.totalorder %s146, %s147
    %p159 = scmp.eq.s32.totalorder %s27, 1
    %p160 = por %p158, %p159
    %p162 = scmp.ne.s32.totalorder %s147, %s161
    %p163 = scmp.eq.s32.totalorder %s27, 0
    %p164 = por %p162, %p163
    %s166 = sadd.s32 %s165, 1
    %p169 = scmp.eq.s32.totalorder %s21, 1
    %p170 = scmp.ne.s32.totalorder %s165, %s167
    %p171 = scmp.eq.s32.totalorder %s21, 0
    %p172 = por %p170, %p171
    %p173 = scmp.ne.s32.totalorder %s165, %s167
    %p174 = scmp.eq.s32.totalorder %s26, 1
    %p175 = por %p173, %p174
    %p176 = scmp.ne.s32.totalorder %s167, %s168
    %p177 = scmp.eq.s32.totalorder %s26, 0
    %p178 = por %p176, %p177
    %p179 = scmp.ne.s32.totalorder %s167, %s168
    %p180 = scmp.eq.s32.totalorder %s27, 1
    %p181 = por %p179, %p180
    %p183 = scmp.ne.s32.totalorder %s168, %s182
    %p184 = scmp.eq.s32.totalorder %s27, 0
    %p185 = por %p183, %p184
    %s187 = sadd.s32 %s186, 1
    %p190 = scmp.eq.s32.totalorder %s21, 1
    %p191 = scmp.ne.s32.totalorder %s186, %s188
    %p192 = scmp.eq.s32.totalorder %s21, 0
    %p193 = por %p191, %p192
    %p194 = scmp.ne.s32.totalorder %s186, %s188
    %p195 = scmp.eq.s32.totalorder %s26, 1
    %p196 = por %p194, %p195
    %p197 = scmp.ne.s32.totalorder %s188, %s189
    %p198 = scmp.eq.s32.totalorder %s26, 0
    %p199 = por %p197, %p198
    %p200 = scmp.ne.s32.totalorder %s188, %s189
    %p201 = scmp.eq.s32.totalorder %s27, 1
    %p202 = por %p200, %p201
    %p204 = scmp.ne.s32.totalorder %s189, %s203
    %p205 = scmp.eq.s32.totalorder %s27, 0
    %p206 = por %p204, %p205
    %s208 = sadd.s32 %s207, 1
    %p211 = scmp.eq.s32.totalorder %s21, 1
    %p212 = scmp.ne.s32.totalorder %s207, %s209
    %p213 = scmp.eq.s32.totalorder %s21, 0
    %p214 = por %p212, %p213
    %p215 = scmp.ne.s32.totalorder %s207, %s209
    %p216 = scmp.eq.s32.totalorder %s26, 1
    %p217 = por %p215, %p216
    %p218 = scmp.ne.s32.totalorder %s209, %s210
    %p219 = scmp.eq.s32.totalorder %s26, 0
    %p220 = por %p218, %p219
    %p221 = scmp.ne.s32.totalorder %s209, %s210
    %p222 = scmp.eq.s32.totalorder %s27, 1
    %p223 = por %p221, %p222
    %p225 = scmp.ne.s32.totalorder %s210, %s224
    %p226 = scmp.eq.s32.totalorder %s27, 0
    %p227 = por %p225, %p226
    %s229 = sadd.s32 %s228, 1
    %p232 = scmp.eq.s32.totalorder %s21, 1
    %p233 = scmp.ne.s32.totalorder %s228, %s230
    %p234 = scmp.eq.s32.totalorder %s21, 0
    %p235 = por %p233, %p234
    %p236 = scmp.ne.s32.totalorder %s228, %s230
    %p237 = scmp.eq.s32.totalorder %s26, 1
    %p238 = por %p236, %p237
    %p239 = scmp.ne.s32.totalorder %s230, %s231
    %p240 = scmp.eq.s32.totalorder %s26, 0
    %p241 = por %p239, %p240
    %p242 = scmp.ne.s32.totalorder %s230, %s231
    %p243 = scmp.eq.s32.totalorder %s27, 1
    %p244 = por %p242, %p243
    %p246 = scmp.ne.s32.totalorder %s231, %s245
    %p247 = scmp.eq.s32.totalorder %s27, 0
    %p248 = por %p246, %p247
    %s250 = sadd.s32 %s249, 1
    %p253 = scmp.eq.s32.totalorder %s21, 1
    %p254 = scmp.ne.s32.totalorder %s249, %s251
    %p255 = scmp.eq.s32.totalorder %s21, 0
    %p256 = por %p254, %p255
    %p257 = scmp.ne.s32.totalorder %s249, %s251
    %p258 = scmp.eq.s32.totalorder %s26, 1
    %p259 = por %p257, %p258
    %p260 = scmp.ne.s32.totalorder %s251, %s252
    %p261 = scmp.eq.s32.totalorder %s26, 0
    %p262 = por %p260, %p261
    %p263 = scmp.ne.s32.totalorder %s251, %s252
    %p264 = scmp.eq.s32.totalorder %s27, 1
    %p265 = por %p263, %p264
    %p267 = scmp.ne.s32.totalorder %s252, %s266
    %p268 = scmp.eq.s32.totalorder %s27, 0
    %p269 = por %p267, %p268
    %s271 = sadd.s32 %s270, 1
    %p274 = scmp.eq.s32.totalorder %s21, 1
    %p275 = scmp.ne.s32.totalorder %s270, %s272
    %p276 = scmp.eq.s32.totalorder %s21, 0
    %p277 = por %p275, %p276
    %p278 = scmp.ne.s32.totalorder %s270, %s272
    %p279 = scmp.eq.s32.totalorder %s26, 1
    %p280 = por %p278, %p279
    %p281 = scmp.ne.s32.totalorder %s272, %s273
    %p282 = scmp.eq.s32.totalorder %s26, 0
    %p283 = por %p281, %p282
    %p284 = scmp.ne.s32.totalorder %s272, %s273
    %p285 = scmp.eq.s32.totalorder %s27, 1
    %p286 = por %p284, %p285
    %p288 = scmp.ne.s32.totalorder %s273, %s287
    %p289 = scmp.eq.s32.totalorder %s27, 0
    %p290 = por %p288, %p289
    %s292 = sadd.s32 %s291, 1
    %p295 = scmp.eq.s32.totalorder %s21, 1
    %p296 = scmp.ne.s32.totalorder %s291, %s293
    %p297 = scmp.eq.s32.totalorder %s21, 0
    %p298 = por %p296, %p297
    %p299 = scmp.ne.s32.totalorder %s291, %s293
    %p300 = scmp.eq.s32.totalorder %s26, 1
    %p301 = por %p299, %p300
    %p302 = scmp.ne.s32.totalorder %s293, %s294
    %p303 = scmp.eq.s32.totalorder %s26, 0
    %p304 = por %p302, %p303
    %p305 = scmp.ne.s32.totalorder %s293, %s294
    %p306 = scmp.eq.s32.totalorder %s27, 1
    %p307 = por %p305, %p306
    %p309 = scmp.ne.s32.totalorder %s294, %s308
    %p310 = scmp.eq.s32.totalorder %s27, 0
    %p311 = por %p309, %p310
    %s313 = sadd.s32 %s312, 1
    %p316 = scmp.eq.s32.totalorder %s21, 1
    %p317 = scmp.ne.s32.totalorder %s312, %s314
    %p318 = scmp.eq.s32.totalorder %s21, 0
    %p319 = por %p317, %p318
    %p320 = scmp.ne.s32.totalorder %s312, %s314
    %p321 = scmp.eq.s32.totalorder %s26, 1
    %p322 = por %p320, %p321
    %p323 = scmp.ne.s32.totalorder %s314, %s315
    %p324 = scmp.eq.s32.totalorder %s26, 0
    %p325 = por %p323, %p324
    %p326 = scmp.ne.s32.totalorder %s314, %s315
    %p327 = scmp.eq.s32.totalorder %s27, 1
    %p328 = por %p326, %p327
    %p330 = scmp.ne.s32.totalorder %s315, %s329
    %p331 = scmp.eq.s32.totalorder %s27, 0
    %p332 = por %p330, %p331
    %s334 = sadd.s32 %s333, 1
    %p337 = scmp.eq.s32.totalorder %s21, 1
    %p338 = scmp.ne.s32.totalorder %s333, %s335
    %p339 = scmp.eq.s32.totalorder %s21, 0
    %p340 = por %p338, %p339
    %p341 = scmp.ne.s32.totalorder %s333, %s335
    %p342 = scmp.eq.s32.totalorder %s26, 1
    %p343 = por %p341, %p342
    %p344 = scmp.ne.s32.totalorder %s335, %s336
    %p345 = scmp.eq.s32.totalorder %s26, 0
    %p346 = por %p344, %p345
    %p347 = scmp.ne.s32.totalorder %s335, %s336
    %p348 = scmp.eq.s32.totalorder %s27, 1
    %p349 = por %p347, %p348
    %p351 = scmp.ne.s32.totalorder %s336, %s350
    %p352 = scmp.eq.s32.totalorder %s27, 0
    %p353 = por %p351, %p352
    %s354 = ssub.s32 %s21, %s28
    %p355 = scmp.eq.s32.totalorder %s354, 0
    %s357 = sadd.s32 %s356, 1
    %s358 = scalar_select %p355, %s356, %s357
    %p361 = pneg %p355
    %p362 = scmp.eq.s32.totalorder %s21, 1
    %p363 = por %p361, %p362
    %p364 = scmp.ne.s32.totalorder %s356, %s359
    %p365 = scmp.eq.s32.totalorder %s21, 0
    %p366 = por %p364, %p365
    %p367 = scmp.ne.s32.totalorder %s356, %s359
    %p368 = scmp.eq.s32.totalorder %s26, 1
    %p369 = por %p367, %p368
    %p370 = scmp.ne.s32.totalorder %s359, %s360
    %p371 = scmp.eq.s32.totalorder %s26, 0
    %p372 = por %p370, %p371
    %p373 = scmp.ne.s32.totalorder %s359, %s360
    %p374 = scmp.eq.s32.totalorder %s27, 1
    %p375 = por %p373, %p374
    %p377 = scmp.ne.s32.totalorder %s360, %s376
    %p378 = scmp.eq.s32.totalorder %s27, 0
    %p379 = por %p377, %p378
    %p380 = scmp.le.s32.totalorder 1, %s21
    %p381 = scmp.lt.s32.totalorder %s21, 3
    %p382 = pnand %p380, %p381
    %p383 = pneg %p382
    // Predicated region
    $region9: #{geonet_depth_to_normal.1} parent=5 // pred_check
      _
    $region10: #{geonet_depth_to_normal.1} parent=5 // pred_check_branch
      %385 = sbr.rel (%p382) target = $region12
    $region11: #{geonet_depth_to_normal.1} parent=5 // pred_region
      %s386 = ssub.s32 %s21, 1
      // Predicated region
      $region13: #{geonet_depth_to_normal.1} parent=11 // pred_check
        %p387 = pneg %p94
      $region14: #{geonet_depth_to_normal.1} parent=11 // pred_check_branch
        %389 = sbr.rel (%p387) target = $region16
      $region15: #{geonet_depth_to_normal.1} parent=11 // pred_region
        _
      $region16: #{geonet_depth_to_normal.1} parent=11 // pred_fallthru
        _
      // Predicated region
      $region17: #{geonet_depth_to_normal.1} parent=11 // pred_check
        %p390 = pneg %p115
      $region18: #{geonet_depth_to_normal.1} parent=11 // pred_check_branch
        %392 = sbr.rel (%p390) target = $region20
      $region19: #{geonet_depth_to_normal.1} parent=11 // pred_region
        _
      $region20: #{geonet_depth_to_normal.1} parent=11 // pred_fallthru
        _
      // Predicated region
      $region21: #{geonet_depth_to_normal.1} parent=11 // pred_check
        %p393 = pneg %p136
      $region22: #{geonet_depth_to_normal.1} parent=11 // pred_check_branch
        %395 = sbr.rel (%p393) target = $region24
      $region23: #{geonet_depth_to_normal.1} parent=11 // pred_region
        _
      $region24: #{geonet_depth_to_normal.1} parent=11 // pred_fallthru
        _
      // Predicated region
      $region25: #{geonet_depth_to_normal.1} parent=11 // pred_check
        %p396 = pneg %p157
      $region26: #{geonet_depth_to_normal.1} parent=11 // pred_check_branch
        %398 = sbr.rel (%p396) target = $region28
      $region27: #{geonet_depth_to_normal.1} parent=11 // pred_region
        _
      $region28: #{geonet_depth_to_normal.1} parent=11 // pred_fallthru
        _
      // Predicated region
      $region29: #{geonet_depth_to_normal.1} parent=11 // pred_check
        %p399 = pneg %p178
      $region30: #{geonet_depth_to_normal.1} parent=11 // pred_check_branch
        %401 = sbr.rel (%p399) target = $region32
      $region31: #{geonet_depth_to_normal.1} parent=11 // pred_region
        _
      $region32: #{geonet_depth_to_normal.1} parent=11 // pred_fallthru
        _
      // Predicated region
      $region33: #{geonet_depth_to_normal.1} parent=11 // pred_check
        %p402 = pneg %p199
      $region34: #{geonet_depth_to_normal.1} parent=11 // pred_check_branch
        %404 = sbr.rel (%p402) target = $region36
      $region35: #{geonet_depth_to_normal.1} parent=11 // pred_region
        _
      $region36: #{geonet_depth_to_normal.1} parent=11 // pred_fallthru
        _
      // Predicated region
      $region37: #{geonet_depth_to_normal.1} parent=11 // pred_check
        %p405 = pneg %p220
      $region38: #{geonet_depth_to_normal.1} parent=11 // pred_check_branch
        %407 = sbr.rel (%p405) target = $region40
      $region39: #{geonet_depth_to_normal.1} parent=11 // pred_region
        _
      $region40: #{geonet_depth_to_normal.1} parent=11 // pred_fallthru
        _
      // Predicated region
      $region41: #{geonet_depth_to_normal.1} parent=11 // pred_check
        %p408 = pneg %p241
      $region42: #{geonet_depth_to_normal.1} parent=11 // pred_check_branch
        %410 = sbr.rel (%p408) target = $region44
      $region43: #{geonet_depth_to_normal.1} parent=11 // pred_region
        _
      $region44: #{geonet_depth_to_normal.1} parent=11 // pred_fallthru
        _
      // Predicated region
      $region45: #{geonet_depth_to_normal.1} parent=11 // pred_check
        %p411 = pneg %p262
      $region46: #{geonet_depth_to_normal.1} parent=11 // pred_check_branch
        %413 = sbr.rel (%p411) target = $region48
      $region47: #{geonet_depth_to_normal.1} parent=11 // pred_region
        _
      $region48: #{geonet_depth_to_normal.1} parent=11 // pred_fallthru
        _
      // Predicated region
      $region49: #{geonet_depth_to_normal.1} parent=11 // pred_check
        %p414 = pneg %p283
      $region50: #{geonet_depth_to_normal.1} parent=11 // pred_check_branch
        %416 = sbr.rel (%p414) target = $region52
      $region51: #{geonet_depth_to_normal.1} parent=11 // pred_region
        _
      $region52: #{geonet_depth_to_normal.1} parent=11 // pred_fallthru
        _
      // Predicated region
      $region53: #{geonet_depth_to_normal.1} parent=11 // pred_check
        %p417 = pneg %p304
      $region54: #{geonet_depth_to_normal.1} parent=11 // pred_check_branch
        %419 = sbr.rel (%p417) target = $region56
      $region55: #{geonet_depth_to_normal.1} parent=11 // pred_region
        _
      $region56: #{geonet_depth_to_normal.1} parent=11 // pred_fallthru
        _
      // Predicated region
      $region57: #{geonet_depth_to_normal.1} parent=11 // pred_check
        %p420 = pneg %p325
      $region58: #{geonet_depth_to_normal.1} parent=11 // pred_check_branch
        %422 = sbr.rel (%p420) target = $region60
      $region59: #{geonet_depth_to_normal.1} parent=11 // pred_region
        _
      $region60: #{geonet_depth_to_normal.1} parent=11 // pred_fallthru
        _
      // Predicated region
      $region61: #{geonet_depth_to_normal.1} parent=11 // pred_check
        %p423 = pneg %p346
      $region62: #{geonet_depth_to_normal.1} parent=11 // pred_check_branch
        %425 = sbr.rel (%p423) target = $region64
      $region63: #{geonet_depth_to_normal.1} parent=11 // pred_region
        _
      $region64: #{geonet_depth_to_normal.1} parent=11 // pred_fallthru
        _
    $region12: #{geonet_depth_to_normal.1} parent=5 // pred_fallthru
      _
    %p426 = scmp.lt.s32.totalorder %s21, 2
    // Predicated region
    $region65: #{geonet_depth_to_normal.1} parent=5 // pred_check
      %p427 = pneg %p426
    $region66: #{geonet_depth_to_normal.1} parent=5 // pred_check_branch
      %429 = sbr.rel (%p427) target = $region68
    $region67: #{geonet_depth_to_normal.1} parent=5 // pred_region
      // Predicated region
      $region69: #{geonet_depth_to_normal.1} parent=67 // pred_check
        %p430 = pneg %p41
      $region70: #{geonet_depth_to_normal.1} parent=67 // pred_check_branch
        %432 = sbr.rel (%p430) target = $region72
      $region71: #{geonet_depth_to_normal.1} parent=67 // pred_region
        %p433 = scmp.lt.s32.totalorder %s21, 1
        %s434 = scalar_select %p433, %s21, 1
        %s435 = smul.addr %s434, 66
        %s436 = smul.addr %s435, 8
        %s437 = scalar_lea.vmem %s0, %s436
      $region72: #{geonet_depth_to_normal.1} parent=67 // pred_fallthru
        _
      // Predicated region
      $region73: #{geonet_depth_to_normal.1} parent=67 // pred_check
        %p438 = pneg %p67
      $region74: #{geonet_depth_to_normal.1} parent=67 // pred_check_branch
        %440 = sbr.rel (%p438) target = $region76
      $region75: #{geonet_depth_to_normal.1} parent=67 // pred_region
        %p441 = scmp.lt.s32.totalorder %s21, 1
        %s442 = scalar_select %p441, %s21, 1
        %s443 = smul.addr %s442, 2
        %s444 = smul.addr %s443, 4
        %s445 = scalar_lea.vmem %s1, %s444
      $region76: #{geonet_depth_to_normal.1} parent=67 // pred_fallthru
        _
    $region68: #{geonet_depth_to_normal.1} parent=5 // pred_fallthru
      _
    %p446 = scmp.le.s32.totalorder 1, %s21
    %p447 = scmp.lt.s32.totalorder %s21, 3
    %p448 = pnand %p446, %p447
    %p449 = pneg %p448
    // Predicated region
    $region77: #{geonet_depth_to_normal.1} parent=5 // pred_check
      _
    $region78: #{geonet_depth_to_normal.1} parent=5 // pred_check_branch
      %451 = sbr.rel (%p448) target = $region80
    $region79: #{geonet_depth_to_normal.1} parent=5 // pred_region
      %s452 = ssub.s32 %s21, 1
      %p453 = scmp.lt.s32.totalorder %s26, 1
      %s454 = scalar_select %p453, %s26, 1
      %s455 = smul.addr %s454, 66
      %s456 = smul.addr %s455, 8
      %s457 = scalar_lea.vmem %s0, %s456
      %p458 = pneg %p47
      %p459 = pneg %p44
      %p460 = scmp.lt.s32.totalorder %s26, 1
      %s461 = scalar_select %p460, %s26, 1
      %s462 = smul.addr %s461, 2
      %s463 = smul.addr %s462, 4
      %s464 = scalar_lea.vmem %s1, %s463
      %p465 = pneg %p73
      %p466 = pneg %p70
      %p467 = pneg %p94
      %p468 = pneg %p91
      %p469 = pneg %p115
      %p470 = pneg %p112
      %p471 = pneg %p136
      %p472 = pneg %p133
      %p473 = pneg %p157
      %p474 = pneg %p154
      %p475 = pneg %p178
      %p476 = pneg %p175
      %p477 = pneg %p199
      %p478 = pneg %p196
      %p479 = pneg %p220
      %p480 = pneg %p217
      %p481 = pneg %p241
      %p482 = pneg %p238
      %p483 = pneg %p262
      %p484 = pneg %p259
      %p485 = pneg %p283
      %p486 = pneg %p280
      %p487 = pneg %p304
      %p488 = pneg %p301
      %p489 = pneg %p325
      %p490 = pneg %p322
      %p491 = pneg %p346
      %p492 = pneg %p343
      %p493 = pneg %p372
      %p494 = pneg %p369
      %p495 = scmp.lt.s32.totalorder %s26, 1
      %s496 = scalar_select %p495, %s26, 1
      %s497 = smul.addr %s496, 2
      %s498 = smul.addr %s497, 4
      %s499 = scalar_lea.vmem %s15, %s498
      %p500 = scmp.lt.s32.totalorder %s26, 1
      %s501 = scalar_select %p500, %s26, 1
      %s502 = smul.addr %s501, 66
      %s503 = smul.addr %s502, 8
      %s504 = scalar_lea.vmem %s0, %s503
      %p505 = scmp.lt.s32.totalorder %s26, 1
      %s506 = scalar_select %p505, %s26, 1
      %s507 = smul.addr %s506, 2
      %s508 = smul.addr %s507, 4
      %s509 = scalar_lea.vmem %s1, %s508
      %p510 = scmp.lt.s32.totalorder %s26, 1
      %s511 = scalar_select %p510, %s26, 1
      %s512 = smul.addr %s511, 2
      %s513 = smul.addr %s512, 4
      %s514 = scalar_lea.vmem %s15, %s513
      %v515 = vld [vmem:[%s504] sm:$0xff]
      %v516 = vld [vmem:[%s504 + $0x8] sm:$0xff]
      %v517 = vld [vmem:[%s504 + $0x10] sm:$0xff]
      %v518 = vld [vmem:[%s504 + $0x18] sm:$0xff]
      %v519 = vld [vmem:[%s504 + $0x20] sm:$0xff]
      %v520 = vld [vmem:[%s504 + $0x28] sm:$0xff]
      %v521 = vld [vmem:[%s504 + $0x30] sm:$0xff]
      %v522 = vld [vmem:[%s504 + $0x38] sm:$0xff]
      %v523 = vld [vmem:[%s504 + $0x40] sm:$0xff]
      %v524 = vld [vmem:[%s504 + $0x48] sm:$0xff]
      %v525 = vld [vmem:[%s504 + $0x50] sm:$0xff]
      %v526 = vld [vmem:[%s504 + $0x58] sm:$0xff]
      %v527 = vld [vmem:[%s504 + $0x60] sm:$0xff]
      %v528 = vld [vmem:[%s504 + $0x68] sm:$0xff]
      %v529 = vld [vmem:[%s504 + $0x70] sm:$0xff]
      %v530 = vld [vmem:[%s504 + $0x78] sm:$0xff]
      %v531 = vld [vmem:[%s504 + $0x80] sm:$0xff]
      %v532 = vld [vmem:[%s504 + $0x88] sm:$0xff]
      %v533 = vld [vmem:[%s504 + $0x90] sm:$0xff]
      %v534 = vld [vmem:[%s504 + $0x98] sm:$0xff]
      %v535 = vld [vmem:[%s504 + $0xa0] sm:$0x1]
      %v536 = vld [vmem:[%s504 + $0xa8] sm:$0x1]
      %s537 = scalar_lea.vmem %s504, 176
      %v538 = vld [vmem:[%s537] sm:$0xff]
      %v539 = vld [vmem:[%s537 + $0x8] sm:$0xff]
      %v540 = vld [vmem:[%s537 + $0x10] sm:$0xff]
      %v541 = vld [vmem:[%s537 + $0x18] sm:$0xff]
      %v542 = vld [vmem:[%s537 + $0x20] sm:$0xff]
      %v543 = vld [vmem:[%s537 + $0x28] sm:$0xff]
      %v544 = vld [vmem:[%s537 + $0x30] sm:$0xff]
      %v545 = vld [vmem:[%s537 + $0x38] sm:$0xff]
      %v546 = vld [vmem:[%s537 + $0x40] sm:$0xff]
      %v547 = vld [vmem:[%s537 + $0x48] sm:$0xff]
      %v548 = vld [vmem:[%s537 + $0x50] sm:$0xff]
      %v549 = vld [vmem:[%s537 + $0x58] sm:$0xff]
      %v550 = vld [vmem:[%s537 + $0x60] sm:$0xff]
      %v551 = vld [vmem:[%s537 + $0x68] sm:$0xff]
      %v552 = vld [vmem:[%s537 + $0x70] sm:$0xff]
      %v553 = vld [vmem:[%s537 + $0x78] sm:$0xff]
      %v554 = vld [vmem:[%s537 + $0x80] sm:$0xff]
      %v555 = vld [vmem:[%s537 + $0x88] sm:$0xff]
      %v556 = vld [vmem:[%s537 + $0x90] sm:$0xff]
      %v557 = vld [vmem:[%s537 + $0x98] sm:$0xff]
      %v558 = vld [vmem:[%s537 + $0xa0] sm:$0x1]
      %v559 = vld [vmem:[%s537 + $0xa8] sm:$0x1]
      %s560 = scalar_lea.vmem %s504, 352
      %v561 = vld [vmem:[%s560] sm:$0xff]
      %v562 = vld [vmem:[%s560 + $0x8] sm:$0xff]
      %v563 = vld [vmem:[%s560 + $0x10] sm:$0xff]
      %v564 = vld [vmem:[%s560 + $0x18] sm:$0xff]
      %v565 = vld [vmem:[%s560 + $0x20] sm:$0xff]
      %v566 = vld [vmem:[%s560 + $0x28] sm:$0xff]
      %v567 = vld [vmem:[%s560 + $0x30] sm:$0xff]
      %v568 = vld [vmem:[%s560 + $0x38] sm:$0xff]
      %v569 = vld [vmem:[%s560 + $0x40] sm:$0xff]
      %v570 = vld [vmem:[%s560 + $0x48] sm:$0xff]
      %v571 = vld [vmem:[%s560 + $0x50] sm:$0xff]
      %v572 = vld [vmem:[%s560 + $0x58] sm:$0xff]
      %v573 = vld [vmem:[%s560 + $0x60] sm:$0xff]
      %v574 = vld [vmem:[%s560 + $0x68] sm:$0xff]
      %v575 = vld [vmem:[%s560 + $0x70] sm:$0xff]
      %v576 = vld [vmem:[%s560 + $0x78] sm:$0xff]
      %v577 = vld [vmem:[%s560 + $0x80] sm:$0xff]
      %v578 = vld [vmem:[%s560 + $0x88] sm:$0xff]
      %v579 = vld [vmem:[%s560 + $0x90] sm:$0xff]
      %v580 = vld [vmem:[%s560 + $0x98] sm:$0xff]
      %v581 = vld [vmem:[%s560 + $0xa0] sm:$0x1]
      %v582 = vld [vmem:[%s560 + $0xa8] sm:$0x1]
      %v583 = vlaneseq
      %v584 = vshrl.u32 %v583, 7
      %v585 = vsub.s32 0, %v584
      %v586 = vrot.slane %v571, %v585
      %v587 = vlaneseq
      %v588 = vshrl.u32 %v587, 7
      %v589 = vsub.s32 0, %v588
      %v590 = vrot.slane %v572, %v589
      %v591 = vsub.f32 %v561, %v586
      %v592 = vsub.f32 %v562, %v590
      %v593 = vsub.f32 %v563, %v586
      %v594 = vsub.f32 %v564, %v590
      %v595 = vsub.f32 %v565, %v586
      %v596 = vsub.f32 %v566, %v590
      %v597 = vsub.f32 %v567, %v586
      %v598 = vsub.f32 %v568, %v590
      %v599 = vsub.f32 %v569, %v586
      %v600 = vsub.f32 %v570, %v590
      %v601 = vsub.f32 %v571, %v586
      %v602 = vsub.f32 %v572, %v590
      %v603 = vsub.f32 %v573, %v586
      %v604 = vsub.f32 %v574, %v590
      %v605 = vsub.f32 %v575, %v586
      %v606 = vsub.f32 %v576, %v590
      %v607 = vsub.f32 %v577, %v586
      %v608 = vsub.f32 %v578, %v590
      %v609 = vsub.f32 %v579, %v586
      %v610 = vsub.f32 %v580, %v590
      %v611 = vsub.f32 %v581, %v586
      %v612 = vsub.f32 %v582, %v590
      %v613 = vand.u32 2147483647, %v591
      %v614 = vand.u32 2147483647, %v592
      %v615 = vand.u32 2147483647, %v593
      %v616 = vand.u32 2147483647, %v594
      %v617 = vand.u32 2147483647, %v595
      %v618 = vand.u32 2147483647, %v596
      %v619 = vand.u32 2147483647, %v597
      %v620 = vand.u32 2147483647, %v598
      %v621 = vand.u32 2147483647, %v599
      %v622 = vand.u32 2147483647, %v600
      %v623 = vand.u32 2147483647, %v601
      %v624 = vand.u32 2147483647, %v602
      %v625 = vand.u32 2147483647, %v603
      %v626 = vand.u32 2147483647, %v604
      %v627 = vand.u32 2147483647, %v605
      %v628 = vand.u32 2147483647, %v606
      %v629 = vand.u32 2147483647, %v607
      %v630 = vand.u32 2147483647, %v608
      %v631 = vand.u32 2147483647, %v609
      %v632 = vand.u32 2147483647, %v610
      %v633 = vand.u32 2147483647, %v611
      %v634 = vand.u32 2147483647, %v612
      %v635 = vmul.f32 %v571, 0.95
      %v636 = vmul.f32 %v572, 0.95
      %v637 = vlaneseq
      %v638 = vshrl.u32 %v637, 7
      %v639 = vsub.s32 0, %v638
      %v640 = vrot.slane %v635, %v639
      %v641 = vlaneseq
      %v642 = vshrl.u32 %v641, 7
      %v643 = vsub.s32 0, %v642
      %v644 = vrot.slane %v636, %v643
      %vm645 = vcmp.le.f32.partialorder %v613, %v640
      %vm646 = vcmp.le.f32.partialorder %v614, %v644
      %vm647 = vcmp.le.f32.partialorder %v615, %v640
      %vm648 = vcmp.le.f32.partialorder %v616, %v644
      %vm649 = vcmp.le.f32.partialorder %v617, %v640
      %vm650 = vcmp.le.f32.partialorder %v618, %v644
      %vm651 = vcmp.le.f32.partialorder %v619, %v640
      %vm652 = vcmp.le.f32.partialorder %v620, %v644
      %vm653 = vcmp.le.f32.partialorder %v621, %v640
      %vm654 = vcmp.le.f32.partialorder %v622, %v644
      %vm655 = vcmp.le.f32.partialorder %v623, %v640
      %vm656 = vcmp.le.f32.partialorder %v624, %v644
      %vm657 = vcmp.le.f32.partialorder %v625, %v640
      %vm658 = vcmp.le.f32.partialorder %v626, %v644
      %vm659 = vcmp.le.f32.partialorder %v627, %v640
      %vm660 = vcmp.le.f32.partialorder %v628, %v644
      %vm661 = vcmp.le.f32.partialorder %v629, %v640
      %vm662 = vcmp.le.f32.partialorder %v630, %v644
      %vm663 = vcmp.le.f32.partialorder %v631, %v640
      %vm664 = vcmp.le.f32.partialorder %v632, %v644
      %vm665 = vcmp.le.f32.partialorder %v633, %v640
      %vm666 = vcmp.le.f32.partialorder %v634, %v644
      %v667 = vsel %vm645, 1, 0
      %v668 = vsel %vm646, 1, 0
      %v669 = vsel %vm647, 1, 0
      %v670 = vsel %vm648, 1, 0
      %v671 = vsel %vm649, 1, 0
      %v672 = vsel %vm650, 1, 0
      %v673 = vsel %vm651, 1, 0
      %v674 = vsel %vm652, 1, 0
      %v675 = vsel %vm653, 1, 0
      %v676 = vsel %vm654, 1, 0
      %v677 = vsel %vm655, 1, 0
      %v678 = vsel %vm656, 1, 0
      %v679 = vsel %vm657, 1, 0
      %v680 = vsel %vm658, 1, 0
      %v681 = vsel %vm659, 1, 0
      %v682 = vsel %vm660, 1, 0
      %v683 = vsel %vm661, 1, 0
      %v684 = vsel %vm662, 1, 0
      %v685 = vsel %vm663, 1, 0
      %v686 = vsel %vm664, 1, 0
      %v687 = vsel %vm665, 1, 0
      %v688 = vsel %vm666, 1, 0
      %v689 = vcvt.s32.f32 %v667
      %v690 = vcvt.s32.f32 %v668
      %v691 = vcvt.s32.f32 %v669
      %v692 = vcvt.s32.f32 %v670
      %v693 = vcvt.s32.f32 %v671
      %v694 = vcvt.s32.f32 %v672
      %v695 = vcvt.s32.f32 %v673
      %v696 = vcvt.s32.f32 %v674
      %v697 = vcvt.s32.f32 %v675
      %v698 = vcvt.s32.f32 %v676
      %v699 = vcvt.s32.f32 %v677
      %v700 = vcvt.s32.f32 %v678
      %v701 = vcvt.s32.f32 %v679
      %v702 = vcvt.s32.f32 %v680
      %v703 = vcvt.s32.f32 %v681
      %v704 = vcvt.s32.f32 %v682
      %v705 = vcvt.s32.f32 %v683
      %v706 = vcvt.s32.f32 %v684
      %v707 = vcvt.s32.f32 %v685
      %v708 = vcvt.s32.f32 %v686
      %v709 = vcvt.s32.f32 %v687
      %v710 = vcvt.s32.f32 %v688
      %v711 = vmul.f32 %v515, %v689
      %v712 = vmul.f32 %v516, %v690
      %v713 = vmul.f32 %v517, %v691
      %v714 = vmul.f32 %v518, %v692
      %v715 = vmul.f32 %v519, %v693
      %v716 = vmul.f32 %v520, %v694
      %v717 = vmul.f32 %v521, %v695
      %v718 = vmul.f32 %v522, %v696
      %v719 = vmul.f32 %v523, %v697
      %v720 = vmul.f32 %v524, %v698
      %v721 = vmul.f32 %v525, %v699
      %v722 = vmul.f32 %v526, %v700
      %v723 = vmul.f32 %v527, %v701
      %v724 = vmul.f32 %v528, %v702
      %v725 = vmul.f32 %v529, %v703
      %v726 = vmul.f32 %v530, %v704
      %v727 = vmul.f32 %v531, %v705
      %v728 = vmul.f32 %v532, %v706
      %v729 = vmul.f32 %v533, %v707
      %v730 = vmul.f32 %v534, %v708
      %v731 = vmul.f32 %v535, %v709
      %v732 = vmul.f32 %v536, %v710
      %v733 = vmul.f32 %v538, %v689
      %v734 = vmul.f32 %v539, %v690
      %v735 = vmul.f32 %v540, %v691
      %v736 = vmul.f32 %v541, %v692
      %v737 = vmul.f32 %v542, %v693
      %v738 = vmul.f32 %v543, %v694
      %v739 = vmul.f32 %v544, %v695
      %v740 = vmul.f32 %v545, %v696
      %v741 = vmul.f32 %v546, %v697
      %v742 = vmul.f32 %v547, %v698
      %v743 = vmul.f32 %v548, %v699
      %v744 = vmul.f32 %v549, %v700
      %v745 = vmul.f32 %v550, %v701
      %v746 = vmul.f32 %v551, %v702
      %v747 = vmul.f32 %v552, %v703
      %v748 = vmul.f32 %v553, %v704
      %v749 = vmul.f32 %v554, %v705
      %v750 = vmul.f32 %v555, %v706
      %v751 = vmul.f32 %v556, %v707
      %v752 = vmul.f32 %v557, %v708
      %v753 = vmul.f32 %v558, %v709
      %v754 = vmul.f32 %v559, %v710
      %v755 = vmul.f32 %v561, %v689
      %v756 = vmul.f32 %v562, %v690
      %v757 = vmul.f32 %v563, %v691
      %v758 = vmul.f32 %v564, %v692
      %v759 = vmul.f32 %v565, %v693
      %v760 = vmul.f32 %v566, %v694
      %v761 = vmul.f32 %v567, %v695
      %v762 = vmul.f32 %v568, %v696
      %v763 = vmul.f32 %v569, %v697
      %v764 = vmul.f32 %v570, %v698
      %v765 = vmul.f32 %v571, %v699
      %v766 = vmul.f32 %v572, %v700
      %v767 = vmul.f32 %v573, %v701
      %v768 = vmul.f32 %v574, %v702
      %v769 = vmul.f32 %v575, %v703
      %v770 = vmul.f32 %v576, %v704
      %v771 = vmul.f32 %v577, %v705
      %v772 = vmul.f32 %v578, %v706
      %v773 = vmul.f32 %v579, %v707
      %v774 = vmul.f32 %v580, %v708
      %v775 = vmul.f32 %v581, %v709
      %v776 = vmul.f32 %v582, %v710
      %v777 = vmul.f32 %v711, %v711
      %v778 = vmul.f32 %v712, %v712
      %v779 = vmul.f32 %v713, %v713
      %v780 = vmul.f32 %v714, %v714
      %v781 = vmul.f32 %v715, %v715
      %v782 = vmul.f32 %v716, %v716
      %v783 = vmul.f32 %v717, %v717
      %v784 = vmul.f32 %v718, %v718
      %v785 = vmul.f32 %v719, %v719
      %v786 = vmul.f32 %v720, %v720
      %v787 = vmul.f32 %v721, %v721
      %v788 = vmul.f32 %v722, %v722
      %v789 = vmul.f32 %v723, %v723
      %v790 = vmul.f32 %v724, %v724
      %v791 = vmul.f32 %v725, %v725
      %v792 = vmul.f32 %v726, %v726
      %v793 = vmul.f32 %v727, %v727
      %v794 = vmul.f32 %v728, %v728
      %v795 = vmul.f32 %v729, %v729
      %v796 = vmul.f32 %v730, %v730
      %v797 = vmul.f32 %v731, %v731
      %v798 = vmul.f32 %v732, %v732
      %v799 = vadd.f32 %v777, %v779
      %v800 = vadd.f32 %v799, %v781
      %v801 = vadd.f32 %v800, %v783
      %v802 = vadd.f32 %v801, %v785
      %v803 = vadd.f32 %v802, %v787
      %v804 = vadd.f32 %v803, %v789
      %v805 = vadd.f32 %v804, %v791
      %v806 = vadd.f32 %v805, %v793
      %v807 = vadd.f32 %v806, %v795
      %vm808 = vcmask 1040384
      %v809 = vsel %vm808, %v797, 0.0
      %v810 = vadd.f32 %v807, %v809
      %v811 = vrot.slane %v810, 4
      %v812 = vadd.f32 %v810, %v811
      %v813 = vrot.slane %v812, 2
      %v814 = vadd.f32 %v812, %v813
      %v815 = vrot.slane %v814, 1
      %v816 = vadd.f32 %v814, %v815
      %v817 = vadd.f32 %v778, %v780
      %v818 = vadd.f32 %v817, %v782
      %v819 = vadd.f32 %v818, %v784
      %v820 = vadd.f32 %v819, %v786
      %v821 = vadd.f32 %v820, %v788
      %v822 = vadd.f32 %v821, %v790
      %v823 = vadd.f32 %v822, %v792
      %v824 = vadd.f32 %v823, %v794
      %v825 = vadd.f32 %v824, %v796
      %v826 = vsel %vm808, %v798, 0.0
      %v827 = vadd.f32 %v825, %v826
      %v828 = vrot.slane %v827, 4
      %v829 = vadd.f32 %v827, %v828
      %v830 = vrot.slane %v829, 2
      %v831 = vadd.f32 %v829, %v830
      %v832 = vrot.slane %v831, 1
      %v833 = vadd.f32 %v831, %v832
      %v834 = vmul.f32 %v711, %v733
      %v835 = vmul.f32 %v712, %v734
      %v836 = vmul.f32 %v713, %v735
      %v837 = vmul.f32 %v714, %v736
      %v838 = vmul.f32 %v715, %v737
      %v839 = vmul.f32 %v716, %v738
      %v840 = vmul.f32 %v717, %v739
      %v841 = vmul.f32 %v718, %v740
      %v842 = vmul.f32 %v719, %v741
      %v843 = vmul.f32 %v720, %v742
      %v844 = vmul.f32 %v721, %v743
      %v845 = vmul.f32 %v722, %v744
      %v846 = vmul.f32 %v723, %v745
      %v847 = vmul.f32 %v724, %v746
      %v848 = vmul.f32 %v725, %v747
      %v849 = vmul.f32 %v726, %v748
      %v850 = vmul.f32 %v727, %v749
      %v851 = vmul.f32 %v728, %v750
      %v852 = vmul.f32 %v729, %v751
      %v853 = vmul.f32 %v730, %v752
      %v854 = vmul.f32 %v731, %v753
      %v855 = vmul.f32 %v732, %v754
      %v856 = vadd.f32 %v834, %v836
      %v857 = vadd.f32 %v856, %v838
      %v858 = vadd.f32 %v857, %v840
      %v859 = vadd.f32 %v858, %v842
      %v860 = vadd.f32 %v859, %v844
      %v861 = vadd.f32 %v860, %v846
      %v862 = vadd.f32 %v861, %v848
      %v863 = vadd.f32 %v862, %v850
      %v864 = vadd.f32 %v863, %v852
      %v865 = vsel %vm808, %v854, 0.0
      %v866 = vadd.f32 %v864, %v865
      %v867 = vrot.slane %v866, 4
      %v868 = vadd.f32 %v866, %v867
      %v869 = vrot.slane %v868, 2
      %v870 = vadd.f32 %v868, %v869
      %v871 = vrot.slane %v870, 1
      %v872 = vadd.f32 %v870, %v871
      %v873 = vadd.f32 %v835, %v837
      %v874 = vadd.f32 %v873, %v839
      %v875 = vadd.f32 %v874, %v841
      %v876 = vadd.f32 %v875, %v843
      %v877 = vadd.f32 %v876, %v845
      %v878 = vadd.f32 %v877, %v847
      %v879 = vadd.f32 %v878, %v849
      %v880 = vadd.f32 %v879, %v851
      %v881 = vadd.f32 %v880, %v853
      %v882 = vsel %vm808, %v855, 0.0
      %v883 = vadd.f32 %v881, %v882
      %v884 = vrot.slane %v883, 4
      %v885 = vadd.f32 %v883, %v884
      %v886 = vrot.slane %v885, 2
      %v887 = vadd.f32 %v885, %v886
      %v888 = vrot.slane %v887, 1
      %v889 = vadd.f32 %v887, %v888
      %v890 = vmul.f32 %v711, %v755
      %v891 = vmul.f32 %v712, %v756
      %v892 = vmul.f32 %v713, %v757
      %v893 = vmul.f32 %v714, %v758
      %v894 = vmul.f32 %v715, %v759
      %v895 = vmul.f32 %v716, %v760
      %v896 = vmul.f32 %v717, %v761
      %v897 = vmul.f32 %v718, %v762
      %v898 = vmul.f32 %v719, %v763
      %v899 = vmul.f32 %v720, %v764
      %v900 = vmul.f32 %v721, %v765
      %v901 = vmul.f32 %v722, %v766
      %v902 = vmul.f32 %v723, %v767
      %v903 = vmul.f32 %v724, %v768
      %v904 = vmul.f32 %v725, %v769
      %v905 = vmul.f32 %v726, %v770
      %v906 = vmul.f32 %v727, %v771
      %v907 = vmul.f32 %v728, %v772
      %v908 = vmul.f32 %v729, %v773
      %v909 = vmul.f32 %v730, %v774
      %v910 = vmul.f32 %v731, %v775
      %v911 = vmul.f32 %v732, %v776
      %v912 = vadd.f32 %v890, %v892
      %v913 = vadd.f32 %v912, %v894
      %v914 = vadd.f32 %v913, %v896
      %v915 = vadd.f32 %v914, %v898
      %v916 = vadd.f32 %v915, %v900
      %v917 = vadd.f32 %v916, %v902
      %v918 = vadd.f32 %v917, %v904
      %v919 = vadd.f32 %v918, %v906
      %v920 = vadd.f32 %v919, %v908
      %v921 = vsel %vm808, %v910, 0.0
      %v922 = vadd.f32 %v920, %v921
      %v923 = vrot.slane %v922, 4
      %v924 = vadd.f32 %v922, %v923
      %v925 = vrot.slane %v924, 2
      %v926 = vadd.f32 %v924, %v925
      %v927 = vrot.slane %v926, 1
      %v928 = vadd.f32 %v926, %v927
      %v929 = vadd.f32 %v891, %v893
      %v930 = vadd.f32 %v929, %v895
      %v931 = vadd.f32 %v930, %v897
      %v932 = vadd.f32 %v931, %v899
      %v933 = vadd.f32 %v932, %v901
      %v934 = vadd.f32 %v933, %v903
      %v935 = vadd.f32 %v934, %v905
      %v936 = vadd.f32 %v935, %v907
      %v937 = vadd.f32 %v936, %v909
      %v938 = vsel %vm808, %v911, 0.0
      %v939 = vadd.f32 %v937, %v938
      %v940 = vrot.slane %v939, 4
      %v941 = vadd.f32 %v939, %v940
      %v942 = vrot.slane %v941, 2
      %v943 = vadd.f32 %v941, %v942
      %v944 = vrot.slane %v943, 1
      %v945 = vadd.f32 %v943, %v944
      %v946 = vmul.f32 %v733, %v733
      %v947 = vmul.f32 %v734, %v734
      %v948 = vmul.f32 %v735, %v735
      %v949 = vmul.f32 %v736, %v736
      %v950 = vmul.f32 %v737, %v737
      %v951 = vmul.f32 %v738, %v738
      %v952 = vmul.f32 %v739, %v739
      %v953 = vmul.f32 %v740, %v740
      %v954 = vmul.f32 %v741, %v741
      %v955 = vmul.f32 %v742, %v742
      %v956 = vmul.f32 %v743, %v743
      %v957 = vmul.f32 %v744, %v744
      %v958 = vmul.f32 %v745, %v745
      %v959 = vmul.f32 %v746, %v746
      %v960 = vmul.f32 %v747, %v747
      %v961 = vmul.f32 %v748, %v748
      %v962 = vmul.f32 %v749, %v749
      %v963 = vmul.f32 %v750, %v750
      %v964 = vmul.f32 %v751, %v751
      %v965 = vmul.f32 %v752, %v752
      %v966 = vmul.f32 %v753, %v753
      %v967 = vmul.f32 %v754, %v754
      %v968 = vadd.f32 %v946, %v948
      %v969 = vadd.f32 %v968, %v950
      %v970 = vadd.f32 %v969, %v952
      %v971 = vadd.f32 %v970, %v954
      %v972 = vadd.f32 %v971, %v956
      %v973 = vadd.f32 %v972, %v958
      %v974 = vadd.f32 %v973, %v960
      %v975 = vadd.f32 %v974, %v962
      %v976 = vadd.f32 %v975, %v964
      %v977 = vsel %vm808, %v966, 0.0
      %v978 = vadd.f32 %v976, %v977
      %v979 = vrot.slane %v978, 4
      %v980 = vadd.f32 %v978, %v979
      %v981 = vrot.slane %v980, 2
      %v982 = vadd.f32 %v980, %v981
      %v983 = vrot.slane %v982, 1
      %v984 = vadd.f32 %v982, %v983
      %v985 = vadd.f32 %v947, %v949
      %v986 = vadd.f32 %v985, %v951
      %v987 = vadd.f32 %v986, %v953
      %v988 = vadd.f32 %v987, %v955
      %v989 = vadd.f32 %v988, %v957
      %v990 = vadd.f32 %v989, %v959
      %v991 = vadd.f32 %v990, %v961
      %v992 = vadd.f32 %v991, %v963
      %v993 = vadd.f32 %v992, %v965
      %v994 = vsel %vm808, %v967, 0.0
      %v995 = vadd.f32 %v993, %v994
      %v996 = vrot.slane %v995, 4
      %v997 = vadd.f32 %v995, %v996
      %v998 = vrot.slane %v997, 2
      %v999 = vadd.f32 %v997, %v998
      %v1000 = vrot.slane %v999, 1
      %v1001 = vadd.f32 %v999, %v1000
      %v1002 = vmul.f32 %v733, %v755
      %v1003 = vmul.f32 %v734, %v756
      %v1004 = vmul.f32 %v735, %v757
      %v1005 = vmul.f32 %v736, %v758
      %v1006 = vmul.f32 %v737, %v759
      %v1007 = vmul.f32 %v738, %v760
      %v1008 = vmul.f32 %v739, %v761
      %v1009 = vmul.f32 %v740, %v762
      %v1010 = vmul.f32 %v741, %v763
      %v1011 = vmul.f32 %v742, %v764
      %v1012 = vmul.f32 %v743, %v765
      %v1013 = vmul.f32 %v744, %v766
      %v1014 = vmul.f32 %v745, %v767
      %v1015 = vmul.f32 %v746, %v768
      %v1016 = vmul.f32 %v747, %v769
      %v1017 = vmul.f32 %v748, %v770
      %v1018 = vmul.f32 %v749, %v771
      %v1019 = vmul.f32 %v750, %v772
      %v1020 = vmul.f32 %v751, %v773
      %v1021 = vmul.f32 %v752, %v774
      %v1022 = vmul.f32 %v753, %v775
      %v1023 = vmul.f32 %v754, %v776
      %v1024 = vadd.f32 %v1002, %v1004
      %v1025 = vadd.f32 %v1024, %v1006
      %v1026 = vadd.f32 %v1025, %v1008
      %v1027 = vadd.f32 %v1026, %v1010
      %v1028 = vadd.f32 %v1027, %v1012
      %v1029 = vadd.f32 %v1028, %v1014
      %v1030 = vadd.f32 %v1029, %v1016
      %v1031 = vadd.f32 %v1030, %v1018
      %v1032 = vadd.f32 %v1031, %v1020
      %v1033 = vsel %vm808, %v1022, 0.0
      %v1034 = vadd.f32 %v1032, %v1033
      %v1035 = vrot.slane %v1034, 4
      %v1036 = vadd.f32 %v1034, %v1035
      %v1037 = vrot.slane %v1036, 2
      %v1038 = vadd.f32 %v1036, %v1037
      %v1039 = vrot.slane %v1038, 1
      %v1040 = vadd.f32 %v1038, %v1039
      %v1041 = vadd.f32 %v1003, %v1005
      %v1042 = vadd.f32 %v1041, %v1007
      %v1043 = vadd.f32 %v1042, %v1009
      %v1044 = vadd.f32 %v1043, %v1011
      %v1045 = vadd.f32 %v1044, %v1013
      %v1046 = vadd.f32 %v1045, %v1015
      %v1047 = vadd.f32 %v1046, %v1017
      %v1048 = vadd.f32 %v1047, %v1019
      %v1049 = vadd.f32 %v1048, %v1021
      %v1050 = vsel %vm808, %v1023, 0.0
      %v1051 = vadd.f32 %v1049, %v1050
      %v1052 = vrot.slane %v1051, 4
      %v1053 = vadd.f32 %v1051, %v1052
      %v1054 = vrot.slane %v1053, 2
      %v1055 = vadd.f32 %v1053, %v1054
      %v1056 = vrot.slane %v1055, 1
      %v1057 = vadd.f32 %v1055, %v1056
      %v1058 = vmul.f32 %v755, %v755
      %v1059 = vmul.f32 %v756, %v756
      %v1060 = vmul.f32 %v757, %v757
      %v1061 = vmul.f32 %v758, %v758
      %v1062 = vmul.f32 %v759, %v759
      %v1063 = vmul.f32 %v760, %v760
      %v1064 = vmul.f32 %v761, %v761
      %v1065 = vmul.f32 %v762, %v762
      %v1066 = vmul.f32 %v763, %v763
      %v1067 = vmul.f32 %v764, %v764
      %v1068 = vmul.f32 %v765, %v765
      %v1069 = vmul.f32 %v766, %v766
      %v1070 = vmul.f32 %v767, %v767
      %v1071 = vmul.f32 %v768, %v768
      %v1072 = vmul.f32 %v769, %v769
      %v1073 = vmul.f32 %v770, %v770
      %v1074 = vmul.f32 %v771, %v771
      %v1075 = vmul.f32 %v772, %v772
      %v1076 = vmul.f32 %v773, %v773
      %v1077 = vmul.f32 %v774, %v774
      %v1078 = vmul.f32 %v775, %v775
      %v1079 = vmul.f32 %v776, %v776
      %v1080 = vadd.f32 %v1058, %v1060
      %v1081 = vadd.f32 %v1080, %v1062
      %v1082 = vadd.f32 %v1081, %v1064
      %v1083 = vadd.f32 %v1082, %v1066
      %v1084 = vadd.f32 %v1083, %v1068
      %v1085 = vadd.f32 %v1084, %v1070
      %v1086 = vadd.f32 %v1085, %v1072
      %v1087 = vadd.f32 %v1086, %v1074
      %v1088 = vadd.f32 %v1087, %v1076
      %v1089 = vsel %vm808, %v1078, 0.0
      %v1090 = vadd.f32 %v1088, %v1089
      %v1091 = vrot.slane %v1090, 4
      %v1092 = vadd.f32 %v1090, %v1091
      %v1093 = vrot.slane %v1092, 2
      %v1094 = vadd.f32 %v1092, %v1093
      %v1095 = vrot.slane %v1094, 1
      %v1096 = vadd.f32 %v1094, %v1095
      %v1097 = vadd.f32 %v1059, %v1061
      %v1098 = vadd.f32 %v1097, %v1063
      %v1099 = vadd.f32 %v1098, %v1065
      %v1100 = vadd.f32 %v1099, %v1067
      %v1101 = vadd.f32 %v1100, %v1069
      %v1102 = vadd.f32 %v1101, %v1071
      %v1103 = vadd.f32 %v1102, %v1073
      %v1104 = vadd.f32 %v1103, %v1075
      %v1105 = vadd.f32 %v1104, %v1077
      %v1106 = vsel %vm808, %v1079, 0.0
      %v1107 = vadd.f32 %v1105, %v1106
      %v1108 = vrot.slane %v1107, 4
      %v1109 = vadd.f32 %v1107, %v1108
      %v1110 = vrot.slane %v1109, 2
      %v1111 = vadd.f32 %v1109, %v1110
      %v1112 = vrot.slane %v1111, 1
      %v1113 = vadd.f32 %v1111, %v1112
      %v1114 = vadd.f32 %v711, %v713
      %v1115 = vadd.f32 %v1114, %v715
      %v1116 = vadd.f32 %v1115, %v717
      %v1117 = vadd.f32 %v1116, %v719
      %v1118 = vadd.f32 %v1117, %v721
      %v1119 = vadd.f32 %v1118, %v723
      %v1120 = vadd.f32 %v1119, %v725
      %v1121 = vadd.f32 %v1120, %v727
      %v1122 = vadd.f32 %v1121, %v729
      %v1123 = vsel %vm808, %v731, 0.0
      %v1124 = vadd.f32 %v1122, %v1123
      %v1125 = vrot.slane %v1124, 4
      %v1126 = vadd.f32 %v1124, %v1125
      %v1127 = vrot.slane %v1126, 2
      %v1128 = vadd.f32 %v1126, %v1127
      %v1129 = vrot.slane %v1128, 1
      %v1130 = vadd.f32 %v1128, %v1129
      %v1131 = vadd.f32 %v712, %v714
      %v1132 = vadd.f32 %v1131, %v716
      %v1133 = vadd.f32 %v1132, %v718
      %v1134 = vadd.f32 %v1133, %v720
      %v1135 = vadd.f32 %v1134, %v722
      %v1136 = vadd.f32 %v1135, %v724
      %v1137 = vadd.f32 %v1136, %v726
      %v1138 = vadd.f32 %v1137, %v728
      %v1139 = vadd.f32 %v1138, %v730
      %v1140 = vsel %vm808, %v732, 0.0
      %v1141 = vadd.f32 %v1139, %v1140
      %v1142 = vrot.slane %v1141, 4
      %v1143 = vadd.f32 %v1141, %v1142
      %v1144 = vrot.slane %v1143, 2
      %v1145 = vadd.f32 %v1143, %v1144
      %v1146 = vrot.slane %v1145, 1
      %v1147 = vadd.f32 %v1145, %v1146
      %v1148 = vadd.f32 %v733, %v735
      %v1149 = vadd.f32 %v1148, %v737
      %v1150 = vadd.f32 %v1149, %v739
      %v1151 = vadd.f32 %v1150, %v741
      %v1152 = vadd.f32 %v1151, %v743
      %v1153 = vadd.f32 %v1152, %v745
      %v1154 = vadd.f32 %v1153, %v747
      %v1155 = vadd.f32 %v1154, %v749
      %v1156 = vadd.f32 %v1155, %v751
      %v1157 = vsel %vm808, %v753, 0.0
      %v1158 = vadd.f32 %v1156, %v1157
      %v1159 = vrot.slane %v1158, 4
      %v1160 = vadd.f32 %v1158, %v1159
      %v1161 = vrot.slane %v1160, 2
      %v1162 = vadd.f32 %v1160, %v1161
      %v1163 = vrot.slane %v1162, 1
      %v1164 = vadd.f32 %v1162, %v1163
      %v1165 = vadd.f32 %v734, %v736
      %v1166 = vadd.f32 %v1165, %v738
      %v1167 = vadd.f32 %v1166, %v740
      %v1168 = vadd.f32 %v1167, %v742
      %v1169 = vadd.f32 %v1168, %v744
      %v1170 = vadd.f32 %v1169, %v746
      %v1171 = vadd.f32 %v1170, %v748
      %v1172 = vadd.f32 %v1171, %v750
      %v1173 = vadd.f32 %v1172, %v752
      %v1174 = vsel %vm808, %v754, 0.0
      %v1175 = vadd.f32 %v1173, %v1174
      %v1176 = vrot.slane %v1175, 4
      %v1177 = vadd.f32 %v1175, %v1176
      %v1178 = vrot.slane %v1177, 2
      %v1179 = vadd.f32 %v1177, %v1178
      %v1180 = vrot.slane %v1179, 1
      %v1181 = vadd.f32 %v1179, %v1180
      %v1182 = vadd.f32 %v755, %v757
      %v1183 = vadd.f32 %v1182, %v759
      %v1184 = vadd.f32 %v1183, %v761
      %v1185 = vadd.f32 %v1184, %v763
      %v1186 = vadd.f32 %v1185, %v765
      %v1187 = vadd.f32 %v1186, %v767
      %v1188 = vadd.f32 %v1187, %v769
      %v1189 = vadd.f32 %v1188, %v771
      %v1190 = vadd.f32 %v1189, %v773
      %v1191 = vsel %vm808, %v775, 0.0
      %v1192 = vadd.f32 %v1190, %v1191
      %v1193 = vrot.slane %v1192, 4
      %v1194 = vadd.f32 %v1192, %v1193
      %v1195 = vrot.slane %v1194, 2
      %v1196 = vadd.f32 %v1194, %v1195
      %v1197 = vrot.slane %v1196, 1
      %v1198 = vadd.f32 %v1196, %v1197
      %v1199 = vadd.f32 %v756, %v758
      %v1200 = vadd.f32 %v1199, %v760
      %v1201 = vadd.f32 %v1200, %v762
      %v1202 = vadd.f32 %v1201, %v764
      %v1203 = vadd.f32 %v1202, %v766
      %v1204 = vadd.f32 %v1203, %v768
      %v1205 = vadd.f32 %v1204, %v770
      %v1206 = vadd.f32 %v1205, %v772
      %v1207 = vadd.f32 %v1206, %v774
      %v1208 = vsel %vm808, %v776, 0.0
      %v1209 = vadd.f32 %v1207, %v1208
      %v1210 = vrot.slane %v1209, 4
      %v1211 = vadd.f32 %v1209, %v1210
      %v1212 = vrot.slane %v1211, 2
      %v1213 = vadd.f32 %v1211, %v1212
      %v1214 = vrot.slane %v1213, 1
      %v1215 = vadd.f32 %v1213, %v1214
      %v1216 = vmul.f32 %v984, %v1096
      %v1217 = vmul.f32 %v1001, %v1113
      %v1218 = vmul.f32 %v1040, %v1040
      %v1219 = vmul.f32 %v1057, %v1057
      %v1220 = vsub.f32 %v1216, %v1218
      %v1221 = vsub.f32 %v1217, %v1219
      %v1222 = vmul.f32 %v928, %v1040
      %v1223 = vmul.f32 %v945, %v1057
      %v1224 = vmul.f32 %v872, %v1096
      %v1225 = vmul.f32 %v889, %v1113
      %v1226 = vsub.f32 %v1222, %v1224
      %v1227 = vsub.f32 %v1223, %v1225
      %v1228 = vmul.f32 %v872, %v1040
      %v1229 = vmul.f32 %v889, %v1057
      %v1230 = vmul.f32 %v928, %v984
      %v1231 = vmul.f32 %v945, %v1001
      %v1232 = vsub.f32 %v1228, %v1230
      %v1233 = vsub.f32 %v1229, %v1231
      %v1234 = vmul.f32 %v816, %v1096
      %v1235 = vmul.f32 %v833, %v1113
      %v1236 = vmul.f32 %v928, %v928
      %v1237 = vmul.f32 %v945, %v945
      %v1238 = vsub.f32 %v1234, %v1236
      %v1239 = vsub.f32 %v1235, %v1237
      %v1240 = vmul.f32 %v872, %v928
      %v1241 = vmul.f32 %v889, %v945
      %v1242 = vmul.f32 %v816, %v1040
      %v1243 = vmul.f32 %v833, %v1057
      %v1244 = vsub.f32 %v1240, %v1242
      %v1245 = vsub.f32 %v1241, %v1243
      %v1246 = vmul.f32 %v816, %v984
      %v1247 = vmul.f32 %v833, %v1001
      %v1248 = vmul.f32 %v872, %v872
      %v1249 = vmul.f32 %v889, %v889
      %v1250 = vsub.f32 %v1246, %v1248
      %v1251 = vsub.f32 %v1247, %v1249
      %v1252 = vmul.f32 %v816, %v1220
      %v1253 = vmul.f32 %v833, %v1221
      %v1254 = vmul.f32 %v872, %v1226
      %v1255 = vmul.f32 %v889, %v1227
      %v1256 = vadd.f32 %v1252, %v1254
      %v1257 = vadd.f32 %v1253, %v1255
      %v1258 = vmul.f32 %v928, %v1232
      %v1259 = vmul.f32 %v945, %v1233
      %v1260 = vadd.f32 %v1256, %v1258
      %v1261 = vadd.f32 %v1257, %v1259
      %vm1262 = vcmp.lt.f32.partialorder %v1260, 1e-05
      %vm1263 = vcmp.lt.f32.partialorder %v1261, 1e-05
      %v1264 = vsel %vm1262, 1.0, %v1260
      %v1265 = vsel %vm1263, 1.0, %v1261
      %v1266 = vrcp.pop %v1264
      %v1267 = vrcp.pop %v1265
      %v1268 = vmul.f32 %v1220, %v1130
      %v1269 = vmul.f32 %v1221, %v1147
      %v1270 = vmul.f32 %v1226, %v1164
      %v1271 = vmul.f32 %v1227, %v1181
      %v1272 = vadd.f32 %v1268, %v1270
      %v1273 = vadd.f32 %v1269, %v1271
      %v1274 = vmul.f32 %v1232, %v1198
      %v1275 = vmul.f32 %v1233, %v1215
      %v1276 = vadd.f32 %v1272, %v1274
      %v1277 = vadd.f32 %v1273, %v1275
      %v1278 = vmul.f32 %v1276, %v1266
      %v1279 = vmul.f32 %v1277, %v1267
      %v1280 = vsel %vm1262, %v1130, %v1278
      %v1281 = vsel %vm1263, %v1147, %v1279
      %v1282 = vmul.f32 %v1226, %v1130
      %v1283 = vmul.f32 %v1227, %v1147
      %v1284 = vmul.f32 %v1238, %v1164
      %v1285 = vmul.f32 %v1239, %v1181
      %v1286 = vadd.f32 %v1282, %v1284
      %v1287 = vadd.f32 %v1283, %v1285
      %v1288 = vmul.f32 %v1244, %v1198
      %v1289 = vmul.f32 %v1245, %v1215
      %v1290 = vadd.f32 %v1286, %v1288
      %v1291 = vadd.f32 %v1287, %v1289
      %v1292 = vmul.f32 %v1290, %v1266
      %v1293 = vmul.f32 %v1291, %v1267
      %v1294 = vsel %vm1262, %v1164, %v1292
      %v1295 = vsel %vm1263, %v1181, %v1293
      %v1296 = vmul.f32 %v1232, %v1130
      %v1297 = vmul.f32 %v1233, %v1147
      %v1298 = vmul.f32 %v1244, %v1164
      %v1299 = vmul.f32 %v1245, %v1181
      %v1300 = vadd.f32 %v1296, %v1298
      %v1301 = vadd.f32 %v1297, %v1299
      %v1302 = vmul.f32 %v1250, %v1198
      %v1303 = vmul.f32 %v1251, %v1215
      %v1304 = vadd.f32 %v1300, %v1302
      %v1305 = vadd.f32 %v1301, %v1303
      %v1306 = vmul.f32 %v1304, %v1266
      %v1307 = vmul.f32 %v1305, %v1267
      %v1308 = vsel %vm1262, %v1198, %v1306
      %v1309 = vsel %vm1263, %v1215, %v1307
      %v1310 = vmul.f32 %v1280, %v1280
      %v1311 = vmul.f32 %v1281, %v1281
      %v1312 = vmul.f32 %v1294, %v1294
      %v1313 = vmul.f32 %v1295, %v1295
      %v1314 = vadd.f32 %v1310, %v1312
      %v1315 = vadd.f32 %v1311, %v1313
      %v1316 = vmul.f32 %v1308, %v1308
      %v1317 = vmul.f32 %v1309, %v1309
      %v1318 = vadd.f32 %v1314, %v1316
      %v1319 = vadd.f32 %v1315, %v1317
      %v1320 = vrsqrt.pop %v1318
      %v1321 = vrsqrt.pop %v1319
      %v1322 = vsel %vm808, %v1280, %v1294
      %v1323 = vsel %vm808, %v1281, %v1295
      %vm1324 = vcmask 1041408
      %v1325 = vsel %vm1324, %v1322, %v1308
      %v1326 = vsel %vm1324, %v1323, %v1309
      %v1327 = vmul.f32 %v1325, %v1320
      %v1328 = vmul.f32 %v1326, %v1321
      %vm1329 = vcmp.ne.f32.partialorder %v1327, %v1327
      %vm1330 = vcmp.ne.f32.partialorder %v1328, %v1328
      %v1331 = vsel %vm1329, 0.0, %v1327
      %v1332 = vsel %vm1330, 0.0, %v1328
      %v1333 = vsub.f32 0.0, %v1331
      %v1334 = vsub.f32 0.0, %v1332
      %v1335 = vld [vmem:[%s2] sm:$0xff]
      %v1336 = vld [vmem:[%s2 + $0x8] sm:$0xff]
      %v1337 = vld [vmem:[%s2 + $0x10] sm:$0x1]
      %v1338 = vld [vmem:[%s2 + $0x18] sm:$0x1]
      %v1339 = vld [vmem:[%s509] sm:$0x77]
      %v1340 = vld [vmem:[%s3] sm:$0xff]
      %v1341 = vld [vmem:[%s3 + $0x8] sm:$0xff]
      %v1342 = vld [vmem:[%s3 + $0x10] sm:$0xff]
      %v1343 = vld [vmem:[%s3 + $0x18] sm:$0xff]
      %v1344 = vld [vmem:[%s3 + $0x20] sm:$0xff]
      %v1345 = vld [vmem:[%s3 + $0x28] sm:$0xff]
      %v1346 = vld [vmem:[%s3 + $0x30] sm:$0xff]
      %v1347 = vld [vmem:[%s3 + $0x38] sm:$0xff]
      %v1348 = vld [vmem:[%s4] sm:$0xff]
      %v1349 = vld [vmem:[%s4 + $0x8] sm:$0xff]
      %v1350 = vld [vmem:[%s4 + $0x10] sm:$0xff]
      %v1351 = vld [vmem:[%s4 + $0x18] sm:$0xff]
      %v1352 = vld [vmem:[%s4 + $0x20] sm:$0xff]
      %v1353 = vld [vmem:[%s4 + $0x28] sm:$0xff]
      %v1354 = vld [vmem:[%s4 + $0x30] sm:$0xff]
      %v1355 = vld [vmem:[%s4 + $0x38] sm:$0xff]
      %1356 = vrot.lane.b32.xlu0 %v1333, 17
      %v1357 = vpop.permute.xlu0 %1356
      %1358 = vrot.lane.b32.xlu0 %v1334, 17
      %v1359 = vpop.permute.xlu0 %1358
      %v1360 = vlaneseq
      %v1361 = vand.u32 %v1360, 127
      %vm1362 = vcmp.lt.s32.totalorder %v1361, 17
      %v1363 = vsel %vm1362, %v1357, %v1359
      %v1364 = vsel %vm1362, %v1359, %v1357
      %v1365 = vlaneseq
      %v1366 = vshrl.u32 %v1365, 7
      %v1367 = vsub.s32 0, %v1366
      %v1368 = vrot.slane %v1335, %v1367
      %v1369 = vlaneseq
      %v1370 = vshrl.u32 %v1369, 7
      %v1371 = vsub.s32 0, %v1370
      %v1372 = vrot.slane %v1336, %v1371
      %v1373 = vmul.f32 %v1364, %v1368
      %v1374 = vmul.f32 %v1363, %v1372
      %1375 = vrot.lane.b32.xlu0 %v1333, 16
      %v1376 = vpop.permute.xlu0 %1375
      %1377 = vrot.lane.b32.xlu0 %v1334, 16
      %v1378 = vpop.permute.xlu0 %1377
      %vm1379 = vcmp.lt.s32.totalorder %v1361, 16
      %v1380 = vsel %vm1379, %v1376, %v1378
      %v1381 = vsel %vm1379, %v1378, %v1376
      %v1382 = vlaneseq
      %v1383 = vshrl.u32 %v1382, 7
      %v1384 = vsub.s32 1, %v1383
      %v1385 = vrot.slane %v1335, %v1384
      %v1386 = vlaneseq
      %v1387 = vshrl.u32 %v1386, 7
      %v1388 = vsub.s32 1, %v1387
      %v1389 = vrot.slane %v1336, %v1388
      %v1390 = vmul.f32 %v1381, %v1385
      %v1391 = vmul.f32 %v1380, %v1389
      %1392 = vrot.lane.b32.xlu0 %v1333, 15
      %v1393 = vpop.permute.xlu0 %1392
      %1394 = vrot.lane.b32.xlu0 %v1334, 15
      %v1395 = vpop.permute.xlu0 %1394
      %vm1396 = vcmp.lt.s32.totalorder %v1361, 15
      %v1397 = vsel %vm1396, %v1393, %v1395
      %v1398 = vsel %vm1396, %v1395, %v1393
      %v1399 = vlaneseq
      %v1400 = vshrl.u32 %v1399, 7
      %v1401 = vsub.s32 2, %v1400
      %v1402 = vrot.slane %v1335, %v1401
      %v1403 = vlaneseq
      %v1404 = vshrl.u32 %v1403, 7
      %v1405 = vsub.s32 2, %v1404
      %v1406 = vrot.slane %v1336, %v1405
      %v1407 = vmul.f32 %v1398, %v1402
      %v1408 = vmul.f32 %v1397, %v1406
      %1409 = vrot.lane.b32.xlu0 %v1333, 1
      %v1410 = vpop.permute.xlu0 %1409
      %1411 = vrot.lane.b32.xlu0 %v1334, 1
      %v1412 = vpop.permute.xlu0 %1411
      %vm1413 = vcmp.lt.s32.totalorder %v1361, 1
      %v1414 = vsel %vm1413, %v1410, %v1412
      %v1415 = vsel %vm1413, %v1412, %v1410
      %v1416 = vlaneseq
      %v1417 = vshrl.u32 %v1416, 7
      %v1418 = vsub.s32 3, %v1417
      %v1419 = vrot.slane %v1335, %v1418
      %v1420 = vlaneseq
      %v1421 = vshrl.u32 %v1420, 7
      %v1422 = vsub.s32 3, %v1421
      %v1423 = vrot.slane %v1336, %v1422
      %v1424 = vmul.f32 %v1415, %v1419
      %v1425 = vmul.f32 %v1414, %v1423
      %1426 = vrot.lane.b32.xlu0 %v1333, 127
      %v1427 = vpop.permute.xlu0 %1426
      %1428 = vrot.lane.b32.xlu0 %v1334, 127
      %v1429 = vpop.permute.xlu0 %1428
      %vm1430 = vcmp.lt.s32.totalorder %v1361, 127
      %v1431 = vsel %vm1430, %v1427, %v1429
      %v1432 = vsel %vm1430, %v1429, %v1427
      %v1433 = vlaneseq
      %v1434 = vshrl.u32 %v1433, 7
      %v1435 = vsub.s32 5, %v1434
      %v1436 = vrot.slane %v1335, %v1435
      %v1437 = vlaneseq
      %v1438 = vshrl.u32 %v1437, 7
      %v1439 = vsub.s32 5, %v1438
      %v1440 = vrot.slane %v1336, %v1439
      %v1441 = vmul.f32 %v1431, %v1436
      %v1442 = vmul.f32 %v1432, %v1440
      %1443 = vrot.lane.b32.xlu0 %v1333, 113
      %v1444 = vpop.permute.xlu0 %1443
      %1445 = vrot.lane.b32.xlu0 %v1334, 113
      %v1446 = vpop.permute.xlu0 %1445
      %vm1447 = vcmp.lt.s32.totalorder %v1361, 113
      %v1448 = vsel %vm1447, %v1444, %v1446
      %v1449 = vsel %vm1447, %v1446, %v1444
      %v1450 = vlaneseq
      %v1451 = vshrl.u32 %v1450, 7
      %v1452 = vsub.s32 6, %v1451
      %v1453 = vrot.slane %v1335, %v1452
      %v1454 = vlaneseq
      %v1455 = vshrl.u32 %v1454, 7
      %v1456 = vsub.s32 6, %v1455
      %v1457 = vrot.slane %v1336, %v1456
      %v1458 = vmul.f32 %v1448, %v1453
      %v1459 = vmul.f32 %v1449, %v1457
      %1460 = vrot.lane.b32.xlu0 %v1333, 112
      %v1461 = vpop.permute.xlu0 %1460
      %1462 = vrot.lane.b32.xlu0 %v1334, 112
      %v1463 = vpop.permute.xlu0 %1462
      %vm1464 = vcmp.lt.s32.totalorder %v1361, 112
      %v1465 = vsel %vm1464, %v1461, %v1463
      %v1466 = vsel %vm1464, %v1463, %v1461
      %v1467 = vlaneseq
      %v1468 = vshrl.u32 %v1467, 7
      %v1469 = vsub.s32 7, %v1468
      %v1470 = vrot.slane %v1335, %v1469
      %v1471 = vlaneseq
      %v1472 = vshrl.u32 %v1471, 7
      %v1473 = vsub.s32 7, %v1472
      %v1474 = vrot.slane %v1336, %v1473
      %v1475 = vmul.f32 %v1465, %v1470
      %v1476 = vmul.f32 %v1466, %v1474
      %1477 = vrot.lane.b32.xlu0 %v1333, 111
      %v1478 = vpop.permute.xlu0 %1477
      %1479 = vrot.lane.b32.xlu0 %v1334, 111
      %v1480 = vpop.permute.xlu0 %1479
      %vm1481 = vcmp.lt.s32.totalorder %v1361, 111
      %v1482 = vsel %vm1481, %v1478, %v1480
      %v1483 = vsel %vm1481, %v1480, %v1478
      %v1484 = vlaneseq
      %v1485 = vshrl.u32 %v1484, 7
      %v1486 = vsub.s32 0, %v1485
      %v1487 = vrot.slane %v1337, %v1486
      %v1488 = vlaneseq
      %v1489 = vshrl.u32 %v1488, 7
      %v1490 = vsub.s32 0, %v1489
      %v1491 = vrot.slane %v1338, %v1490
      %v1492 = vmul.f32 %v1482, %v1487
      %v1493 = vmul.f32 %v1483, %v1491
      %v1496 = vrot.slane %v1390, 5
      %v1497 = vrot.slane %v1391, 5
      %v1502 = vrot.slane %v1407, 2
      %v1503 = vrot.slane %v1408, 2
      %v1508 = vrot.slane %v1424, 7
      %v1509 = vrot.slane %v1425, 7
      %v1514 = vrot.slane %v1333, 4
      %v1515 = vrot.slane %v1334, 4
      %v1520 = vrot.slane %v1441, 1
      %v1521 = vrot.slane %v1442, 1
      %v1526 = vrot.slane %v1458, 6
      %v1527 = vrot.slane %v1459, 6
      %v1532 = vrot.slane %v1475, 3
      %v1533 = vrot.slane %v1476, 3
      %vm1536 = vcmask 1042432
      %v1537 = vsel %vm1536, %v1373, %v1496
      %v1538 = vsel %vm1536, %v1374, %v1497
      %vm1539 = vcmask 1045504
      %v1540 = vsel %vm1539, %v1537, %v1502
      %v1541 = vsel %vm1539, %v1538, %v1503
      %v1542 = vsel %vm808, %v1502, %v1508
      %v1543 = vsel %vm808, %v1503, %v1509
      %vm1544 = vcmask 1043456
      %v1545 = vsel %vm1544, %v1542, %v1514
      %v1546 = vsel %vm1544, %v1543, %v1515
      %vm1547 = vcmask 1046528
      %v1548 = vsel %vm1547, %v1545, %v1520
      %v1549 = vsel %vm1547, %v1546, %v1521
      %v1550 = vsel %vm1324, %v1520, %v1526
      %v1551 = vsel %vm1324, %v1521, %v1527
      %vm1552 = vcmask 1044480
      %v1553 = vsel %vm1552, %v1550, %v1532
      %v1554 = vsel %vm1552, %v1551, %v1533
      %1556 = vset.pattern.permute.xlu0 0
      %1557 = vperm.xlu0 %1556, %v1348
      %v1558 = vpop.permute.xlu0 %1557
      %1561 = vset.pattern.permute.xlu0 0
      %1562 = vperm.xlu0 %1561, %v1349
      %v1563 = vpop.permute.xlu0 %1562
      %1566 = vset.pattern.permute.xlu0 0
      %1567 = vperm.xlu0 %1566, %v1350
      %v1568 = vpop.permute.xlu0 %1567
      %1571 = vset.pattern.permute.xlu0 0
      %1572 = vperm.xlu0 %1571, %v1351
      %v1573 = vpop.permute.xlu0 %1572
      %1576 = vset.pattern.permute.xlu0 0
      %1577 = vperm.xlu0 %1576, %v1352
      %v1578 = vpop.permute.xlu0 %1577
      %1581 = vset.pattern.permute.xlu0 0
      %1582 = vperm.xlu0 %1581, %v1353
      %v1583 = vpop.permute.xlu0 %1582
      %1586 = vset.pattern.permute.xlu0 0
      %1587 = vperm.xlu0 %1586, %v1354
      %v1588 = vpop.permute.xlu0 %1587
      %1591 = vset.pattern.permute.xlu0 0
      %1592 = vperm.xlu0 %1591, %v1355
      %v1593 = vpop.permute.xlu0 %1592
      %vm1595 = vcmask 220160
      %v1597 = vsel %vm1595, %v1340, 0
      %v1600 = vsel %vm1595, %v1341, 0
      %v1603 = vsel %vm1595, %v1342, 0
      %v1606 = vsel %vm1595, %v1343, 0
      %v1609 = vsel %vm1595, %v1344, 0
      %v1612 = vsel %vm1595, %v1345, 0
      %v1615 = vsel %vm1595, %v1346, 0
      %v1618 = vsel %vm1595, %v1347, 0
      %v1621 = vsel %vm1536, %v1492, 0
      %v1624 = vsel %vm1536, %v1493, 0
      %1626 = vmatprep.subr.mxu0 %v1541
      %1627 = vmatpush1.msra.mxu0 %v1540
      %1628 = vmatprep.subr.mxu0 %v1549
      %1629 = vmatpush1.msra.mxu0 %v1548
      %1630 = vmatprep.subr.mxu0 %v1554
      %1631 = vmatpush1.msra.mxu0 %v1553
      %1632 = vmatprep.subr.mxu0 %v1624
      %1633 = vmatpush1.msra.mxu0 %v1621
      %1634 = vmatprep.subr.mxu0 0.0
      %1635 = vmatpush1.msra.mxu0 0.0
      %1636 = vmatprep.subr.mxu0 0.0
      %1637 = vmatpush1.msra.mxu0 0.0
      %1638 = vmatprep.subr.mxu0 0.0
      %1639 = vmatpush1.msra.mxu0 0.0
      %1640 = vmatprep.subr.mxu0 0.0
      %1641 = vmatpush1.msra.mxu0 0.0
      %1642 = vmatprep.subr.mxu0 0.0
      %1643 = vmatpush1.msra.mxu0 0.0
      %1644 = vmatprep.subr.mxu0 0.0
      %1645 = vmatpush1.msra.mxu0 0.0
      %1646 = vmatprep.subr.mxu0 0.0
      %1647 = vmatpush1.msra.mxu0 0.0
      %1648 = vmatprep.subr.mxu0 0.0
      %1649 = vmatpush1.msra.mxu0 0.0
      %1650 = vmatprep.subr.mxu0 0.0
      %1651 = vmatpush1.msra.mxu0 0.0
      %1652 = vmatprep.subr.mxu0 0.0
      %1653 = vmatpush1.msra.mxu0 0.0
      %1654 = vmatprep.subr.mxu0 0.0
      %1655 = vmatpush1.msra.mxu0 0.0
      %1656 = vmatprep.subr.mxu0 0.0
      %1657 = vmatpush1.msra.mxu0 0.0
      %1658 = vmatprep.subr.mxu0 0.0
      %1659 = vmatpush1.msra.mxu0 0.0
      %1660 = vmatprep.subr.mxu0 0.0
      %1661 = vmatpush1.msra.mxu0 0.0
      %1662 = vmatprep.subr.mxu0 0.0
      %1663 = vmatpush1.msra.mxu0 0.0
      %1664 = vmatprep.subr.mxu0 0.0
      %1665 = vmatpush1.msra.mxu0 0.0
      %1666 = vmatprep.subr.mxu0 0.0
      %1667 = vmatpush1.msra.mxu0 0.0
      %1668 = vmatprep.subr.mxu0 0.0
      %1669 = vmatpush1.msra.mxu0 0.0
      %1670 = vmatprep.subr.mxu0 0.0
      %1671 = vmatpush1.msra.mxu0 0.0
      %1672 = vmatprep.subr.mxu0 0.0
      %1673 = vmatpush1.msra.mxu0 0.0
      %1674 = vmatprep.subr.mxu0 0.0
      %1675 = vmatpush1.msra.mxu0 0.0
      %1676 = vmatprep.subr.mxu0 0.0
      %1677 = vmatpush1.msra.mxu0 0.0
      %1678 = vmatprep.subr.mxu0 0.0
      %1679 = vmatpush1.msra.mxu0 0.0
      %1680 = vmatprep.subr.mxu0 0.0
      %1681 = vmatpush1.msra.mxu0 0.0
      %1682 = vmatprep.subr.mxu0 0.0
      %1683 = vmatpush1.msra.mxu0 0.0
      %1684 = vmatprep.subr.mxu0 0.0
      %1685 = vmatpush1.msra.mxu0 0.0
      %1686 = vmatprep.subr.mxu0 0.0
      %1687 = vmatpush1.msra.mxu0 0.0
      %1688 = vmatprep.subr.mxu0 0.0
      %1689 = vmatpush1.msra.mxu0 0.0
      %1690 = vmatprep.mubr.f32.mxu0 0.0
      %1691 = vmatmul.mubr.f32.gmra.mrb[0].mxu0 %v1597
      %v1692 = vpop.f32.mrb[0].mxu0
      %v1693 = vadd.f32 %v1558, %v1692
      %v1694 = vpop.f32.mrb[0].mxu0
      %v1695 = vadd.f32 %v1558, %v1694
      %1696 = vmatprep.mubr.f32.mxu0 0.0
      %1697 = vmatmul.mubr.f32.gmra.mrb[0].mxu0 %v1600
      %v1698 = vpop.f32.mrb[0].mxu0
      %v1699 = vadd.f32 %v1563, %v1698
      %v1700 = vpop.f32.mrb[0].mxu0
      %v1701 = vadd.f32 %v1563, %v1700
      %1702 = vmatprep.mubr.f32.mxu0 0.0
      %1703 = vmatmul.mubr.f32.gmra.mrb[0].mxu0 %v1603
      %v1704 = vpop.f32.mrb[0].mxu0
      %v1705 = vadd.f32 %v1568, %v1704
      %v1706 = vpop.f32.mrb[0].mxu0
      %v1707 = vadd.f32 %v1568, %v1706
      %1708 = vmatprep.mubr.f32.mxu0 0.0
      %1709 = vmatmul.mubr.f32.gmra.mrb[0].mxu0 %v1606
      %v1710 = vpop.f32.mrb[0].mxu0
      %v1711 = vadd.f32 %v1573, %v1710
      %v1712 = vpop.f32.mrb[0].mxu0
      %v1713 = vadd.f32 %v1573, %v1712
      %1714 = vmatprep.mubr.f32.mxu0 0.0
      %1715 = vmatmul.mubr.f32.gmra.mrb[0].mxu0 %v1609
      %v1716 = vpop.f32.mrb[0].mxu0
      %v1717 = vadd.f32 %v1578, %v1716
      %v1718 = vpop.f32.mrb[0].mxu0
      %v1719 = vadd.f32 %v1578, %v1718
      %1720 = vmatprep.mubr.f32.mxu0 0.0
      %1721 = vmatmul.mubr.f32.gmra.mrb[0].mxu0 %v1612
      %v1722 = vpop.f32.mrb[0].mxu0
      %v1723 = vadd.f32 %v1583, %v1722
      %v1724 = vpop.f32.mrb[0].mxu0
      %v1725 = vadd.f32 %v1583, %v1724
      %1726 = vmatprep.mubr.f32.mxu0 0.0
      %1727 = vmatmul.mubr.f32.gmra.mrb[0].mxu0 %v1615
      %v1728 = vpop.f32.mrb[0].mxu0
      %v1729 = vadd.f32 %v1588, %v1728
      %v1730 = vpop.f32.mrb[0].mxu0
      %v1731 = vadd.f32 %v1588, %v1730
      %1732 = vmatprep.mubr.f32.mxu0 0.0
      %1733 = vmatmul.mubr.f32.gmra.mrb[0].mxu0 %v1618
      %v1734 = vpop.f32.mrb[0].mxu0
      %v1735 = vadd.f32 %v1593, %v1734
      %v1736 = vpop.f32.mrb[0].mxu0
      %v1737 = vadd.f32 %v1593, %v1736
      %1738 = vdwg.mxu0
      %v1739 = vmax.f32 %v1693, 0.0
      %v1740 = vmax.f32 %v1695, 0.0
      %v1741 = vmax.f32 %v1699, 0.0
      %v1742 = vmax.f32 %v1701, 0.0
      %v1743 = vmax.f32 %v1705, 0.0
      %v1744 = vmax.f32 %v1707, 0.0
      %v1745 = vmax.f32 %v1711, 0.0
      %v1746 = vmax.f32 %v1713, 0.0
      %v1747 = vmax.f32 %v1717, 0.0
      %v1748 = vmax.f32 %v1719, 0.0
      %v1749 = vmax.f32 %v1723, 0.0
      %v1750 = vmax.f32 %v1725, 0.0
      %v1751 = vmax.f32 %v1729, 0.0
      %v1752 = vmax.f32 %v1731, 0.0
      %v1753 = vmax.f32 %v1735, 0.0
      %v1754 = vmax.f32 %v1737, 0.0
      %v1755 = vld [vmem:[%s5] sm:$0xff]
      %v1756 = vld [vmem:[%s5 + $0x8] sm:$0xff]
      %v1757 = vld [vmem:[%s5 + $0x10] sm:$0xff]
      %v1758 = vld [vmem:[%s5 + $0x18] sm:$0xff]
      %v1759 = vld [vmem:[%s5 + $0x20] sm:$0xff]
      %v1760 = vld [vmem:[%s5 + $0x28] sm:$0xff]
      %v1761 = vld [vmem:[%s5 + $0x30] sm:$0xff]
      %v1762 = vld [vmem:[%s5 + $0x38] sm:$0xff]
      %v1763 = vld [vmem:[%s6] sm:$0xff]
      %v1764 = vld [vmem:[%s6 + $0x8] sm:$0xff]
      %v1765 = vld [vmem:[%s6 + $0x10] sm:$0xff]
      %v1766 = vld [vmem:[%s6 + $0x18] sm:$0xff]
      %v1767 = vld [vmem:[%s6 + $0x20] sm:$0xff]
      %v1768 = vld [vmem:[%s6 + $0x28] sm:$0xff]
      %v1769 = vld [vmem:[%s6 + $0x30] sm:$0xff]
      %v1770 = vld [vmem:[%s6 + $0x38] sm:$0xff]
      %v1771 = vadd.f32 %v1739, %v1740
      %1772 = vadd.xlane.f32.xlu0 %v1771
      %v1773 = vpop.xlane.xlu0 %1772
      %v1774 = vadd.f32 %v1741, %v1742
      %1775 = vadd.xlane.f32.xlu0 %v1774
      %v1776 = vpop.xlane.xlu0 %1775
      %v1777 = vadd.f32 %v1743, %v1744
      %1778 = vadd.xlane.f32.xlu0 %v1777
      %v1779 = vpop.xlane.xlu0 %1778
      %v1780 = vadd.f32 %v1745, %v1746
      %1781 = vadd.xlane.f32.xlu0 %v1780
      %v1782 = vpop.xlane.xlu0 %1781
      %v1783 = vadd.f32 %v1747, %v1748
      %1784 = vadd.xlane.f32.xlu0 %v1783
      %v1785 = vpop.xlane.xlu0 %1784
      %v1786 = vadd.f32 %v1749, %v1750
      %1787 = vadd.xlane.f32.xlu0 %v1786
      %v1788 = vpop.xlane.xlu0 %1787
      %v1789 = vadd.f32 %v1751, %v1752
      %1790 = vadd.xlane.f32.xlu0 %v1789
      %v1791 = vpop.xlane.xlu0 %1790
      %v1792 = vadd.f32 %v1753, %v1754
      %1793 = vadd.xlane.f32.xlu0 %v1792
      %v1794 = vpop.xlane.xlu0 %1793
      %v1795 = vmul.f32 %v1739, %v1739
      %v1796 = vmul.f32 %v1740, %v1740
      %v1797 = vmul.f32 %v1741, %v1741
      %v1798 = vmul.f32 %v1742, %v1742
      %v1799 = vmul.f32 %v1743, %v1743
      %v1800 = vmul.f32 %v1744, %v1744
      %v1801 = vmul.f32 %v1745, %v1745
      %v1802 = vmul.f32 %v1746, %v1746
      %v1803 = vmul.f32 %v1747, %v1747
      %v1804 = vmul.f32 %v1748, %v1748
      %v1805 = vmul.f32 %v1749, %v1749
      %v1806 = vmul.f32 %v1750, %v1750
      %v1807 = vmul.f32 %v1751, %v1751
      %v1808 = vmul.f32 %v1752, %v1752
      %v1809 = vmul.f32 %v1753, %v1753
      %v1810 = vmul.f32 %v1754, %v1754
      %v1811 = vadd.f32 %v1795, %v1796
      %1812 = vadd.xlane.f32.xlu0 %v1811
      %v1813 = vpop.xlane.xlu0 %1812
      %v1814 = vadd.f32 %v1797, %v1798
      %1815 = vadd.xlane.f32.xlu0 %v1814
      %v1816 = vpop.xlane.xlu0 %1815
      %v1817 = vadd.f32 %v1799, %v1800
      %1818 = vadd.xlane.f32.xlu0 %v1817
      %v1819 = vpop.xlane.xlu0 %1818
      %v1820 = vadd.f32 %v1801, %v1802
      %1821 = vadd.xlane.f32.xlu0 %v1820
      %v1822 = vpop.xlane.xlu0 %1821
      %v1823 = vadd.f32 %v1803, %v1804
      %1824 = vadd.xlane.f32.xlu0 %v1823
      %v1825 = vpop.xlane.xlu0 %1824
      %v1826 = vadd.f32 %v1805, %v1806
      %1827 = vadd.xlane.f32.xlu0 %v1826
      %v1828 = vpop.xlane.xlu0 %1827
      %v1829 = vadd.f32 %v1807, %v1808
      %1830 = vadd.xlane.f32.xlu0 %v1829
      %v1831 = vpop.xlane.xlu0 %1830
      %v1832 = vadd.f32 %v1809, %v1810
      %1833 = vadd.xlane.f32.xlu0 %v1832
      %v1834 = vpop.xlane.xlu0 %1833
      %vm1835 = vcmask 7168
      %v1836 = vsel %vm1835, %v1773, 0.0
      %1837 = vadd.xlane.f32.xlu0 %v1836
      %v1838 = vpop.xlane.xlu0 %1837
      %v1839 = vrot.slane %v1838, 4
      %v1840 = vadd.f32 %v1838, %v1839
      %v1841 = vrot.slane %v1840, 2
      %v1842 = vadd.f32 %v1840, %v1841
      %v1843 = vrot.slane %v1842, 1
      %v1844 = vadd.f32 %v1842, %v1843
      %s1845 = vtos %v1844
      %v1846 = vstv %s1845
      %v1847 = vmul.f32 %v1846, 0.00048828125
      %v1848 = vsel %vm1835, %v1813, 0.0
      %1849 = vadd.xlane.f32.xlu0 %v1848
      %v1850 = vpop.xlane.xlu0 %1849
      %v1851 = vrot.slane %v1850, 4
      %v1852 = vadd.f32 %v1850, %v1851
      %v1853 = vrot.slane %v1852, 2
      %v1854 = vadd.f32 %v1852, %v1853
      %v1855 = vrot.slane %v1854, 1
      %v1856 = vadd.f32 %v1854, %v1855
      %s1857 = vtos %v1856
      %v1858 = vstv %s1857
      %v1859 = vmul.f32 %v1858, 0.00048828125
      %v1860 = vmul.f32 %v1847, %v1847
      %v1861 = vsub.f32 %v1859, %v1860
      %v1862 = vadd.f32 %v1861, 1e-05
      %v1863 = vrsqrt.pop %v1862
      %v1864 = vsub.f32 %v1739, %v1847
      %v1865 = vsub.f32 %v1740, %v1847
      %v1866 = vmul.f32 %v1864, %v1863
      %v1867 = vmul.f32 %v1865, %v1863
      %1869 = vset.pattern.permute.xlu0 0
      %1870 = vperm.xlu0 %1869, %v1755
      %v1871 = vpop.permute.xlu0 %1870
      %v1873 = vmul.f32 %v1866, %v1871
      %v1874 = vmul.f32 %v1867, %v1871
      %1876 = vset.pattern.permute.xlu0 0
      %1877 = vperm.xlu0 %1876, %v1763
      %v1878 = vpop.permute.xlu0 %1877
      %v1880 = vadd.f32 %v1873, %v1878
      %v1881 = vadd.f32 %v1874, %v1878
      %v1882 = vsel %vm1835, %v1776, 0.0
      %1883 = vadd.xlane.f32.xlu0 %v1882
      %v1884 = vpop.xlane.xlu0 %1883
      %v1885 = vrot.slane %v1884, 4
      %v1886 = vadd.f32 %v1884, %v1885
      %v1887 = vrot.slane %v1886, 2
      %v1888 = vadd.f32 %v1886, %v1887
      %v1889 = vrot.slane %v1888, 1
      %v1890 = vadd.f32 %v1888, %v1889
      %s1891 = vtos %v1890
      %v1892 = vstv %s1891
      %v1893 = vmul.f32 %v1892, 0.00048828125
      %v1894 = vsel %vm1835, %v1816, 0.0
      %1895 = vadd.xlane.f32.xlu0 %v1894
      %v1896 = vpop.xlane.xlu0 %1895
      %v1897 = vrot.slane %v1896, 4
      %v1898 = vadd.f32 %v1896, %v1897
      %v1899 = vrot.slane %v1898, 2
      %v1900 = vadd.f32 %v1898, %v1899
      %v1901 = vrot.slane %v1900, 1
      %v1902 = vadd.f32 %v1900, %v1901
      %s1903 = vtos %v1902
      %v1904 = vstv %s1903
      %v1905 = vmul.f32 %v1904, 0.00048828125
      %v1906 = vmul.f32 %v1893, %v1893
      %v1907 = vsub.f32 %v1905, %v1906
      %v1908 = vadd.f32 %v1907, 1e-05
      %v1909 = vrsqrt.pop %v1908
      %v1910 = vsub.f32 %v1741, %v1893
      %v1911 = vsub.f32 %v1742, %v1893
      %v1912 = vmul.f32 %v1910, %v1909
      %v1913 = vmul.f32 %v1911, %v1909
      %1915 = vset.pattern.permute.xlu0 0
      %1916 = vperm.xlu0 %1915, %v1756
      %v1917 = vpop.permute.xlu0 %1916
      %v1919 = vmul.f32 %v1912, %v1917
      %v1920 = vmul.f32 %v1913, %v1917
      %1922 = vset.pattern.permute.xlu0 0
      %1923 = vperm.xlu0 %1922, %v1764
      %v1924 = vpop.permute.xlu0 %1923
      %v1926 = vadd.f32 %v1919, %v1924
      %v1927 = vadd.f32 %v1920, %v1924
      %v1928 = vsel %vm1835, %v1779, 0.0
      %1929 = vadd.xlane.f32.xlu0 %v1928
      %v1930 = vpop.xlane.xlu0 %1929
      %v1931 = vrot.slane %v1930, 4
      %v1932 = vadd.f32 %v1930, %v1931
      %v1933 = vrot.slane %v1932, 2
      %v1934 = vadd.f32 %v1932, %v1933
      %v1935 = vrot.slane %v1934, 1
      %v1936 = vadd.f32 %v1934, %v1935
      %s1937 = vtos %v1936
      %v1938 = vstv %s1937
      %v1939 = vmul.f32 %v1938, 0.00048828125
      %v1940 = vsel %vm1835, %v1819, 0.0
      %1941 = vadd.xlane.f32.xlu0 %v1940
      %v1942 = vpop.xlane.xlu0 %1941
      %v1943 = vrot.slane %v1942, 4
      %v1944 = vadd.f32 %v1942, %v1943
      %v1945 = vrot.slane %v1944, 2
      %v1946 = vadd.f32 %v1944, %v1945
      %v1947 = vrot.slane %v1946, 1
      %v1948 = vadd.f32 %v1946, %v1947
      %s1949 = vtos %v1948
      %v1950 = vstv %s1949
      %v1951 = vmul.f32 %v1950, 0.00048828125
      %v1952 = vmul.f32 %v1939, %v1939
      %v1953 = vsub.f32 %v1951, %v1952
      %v1954 = vadd.f32 %v1953, 1e-05
      %v1955 = vrsqrt.pop %v1954
      %v1956 = vsub.f32 %v1743, %v1939
      %v1957 = vsub.f32 %v1744, %v1939
      %v1958 = vmul.f32 %v1956, %v1955
      %v1959 = vmul.f32 %v1957, %v1955
      %1961 = vset.pattern.permute.xlu0 0
      %1962 = vperm.xlu0 %1961, %v1757
      %v1963 = vpop.permute.xlu0 %1962
      %v1965 = vmul.f32 %v1958, %v1963
      %v1966 = vmul.f32 %v1959, %v1963
      %1968 = vset.pattern.permute.xlu0 0
      %1969 = vperm.xlu0 %1968, %v1765
      %v1970 = vpop.permute.xlu0 %1969
      %v1972 = vadd.f32 %v1965, %v1970
      %v1973 = vadd.f32 %v1966, %v1970
      %v1974 = vsel %vm1835, %v1782, 0.0
      %1975 = vadd.xlane.f32.xlu0 %v1974
      %v1976 = vpop.xlane.xlu0 %1975
      %v1977 = vrot.slane %v1976, 4
      %v1978 = vadd.f32 %v1976, %v1977
      %v1979 = vrot.slane %v1978, 2
      %v1980 = vadd.f32 %v1978, %v1979
      %v1981 = vrot.slane %v1980, 1
      %v1982 = vadd.f32 %v1980, %v1981
      %s1983 = vtos %v1982
      %v1984 = vstv %s1983
      %v1985 = vmul.f32 %v1984, 0.00048828125
      %v1986 = vsel %vm1835, %v1822, 0.0
      %1987 = vadd.xlane.f32.xlu0 %v1986
      %v1988 = vpop.xlane.xlu0 %1987
      %v1989 = vrot.slane %v1988, 4
      %v1990 = vadd.f32 %v1988, %v1989
      %v1991 = vrot.slane %v1990, 2
      %v1992 = vadd.f32 %v1990, %v1991
      %v1993 = vrot.slane %v1992, 1
      %v1994 = vadd.f32 %v1992, %v1993
      %s1995 = vtos %v1994
      %v1996 = vstv %s1995
      %v1997 = vmul.f32 %v1996, 0.00048828125
      %v1998 = vmul.f32 %v1985, %v1985
      %v1999 = vsub.f32 %v1997, %v1998
      %v2000 = vadd.f32 %v1999, 1e-05
      %v2001 = vrsqrt.pop %v2000
      %v2002 = vsub.f32 %v1745, %v1985
      %v2003 = vsub.f32 %v1746, %v1985
      %v2004 = vmul.f32 %v2002, %v2001
      %v2005 = vmul.f32 %v2003, %v2001
      %2007 = vset.pattern.permute.xlu0 0
      %2008 = vperm.xlu0 %2007, %v1758
      %v2009 = vpop.permute.xlu0 %2008
      %v2011 = vmul.f32 %v2004, %v2009
      %v2012 = vmul.f32 %v2005, %v2009
      %2014 = vset.pattern.permute.xlu0 0
      %2015 = vperm.xlu0 %2014, %v1766
      %v2016 = vpop.permute.xlu0 %2015
      %v2018 = vadd.f32 %v2011, %v2016
      %v2019 = vadd.f32 %v2012, %v2016
      %v2020 = vsel %vm1835, %v1785, 0.0
      %2021 = vadd.xlane.f32.xlu0 %v2020
      %v2022 = vpop.xlane.xlu0 %2021
      %v2023 = vrot.slane %v2022, 4
      %v2024 = vadd.f32 %v2022, %v2023
      %v2025 = vrot.slane %v2024, 2
      %v2026 = vadd.f32 %v2024, %v2025
      %v2027 = vrot.slane %v2026, 1
      %v2028 = vadd.f32 %v2026, %v2027
      %s2029 = vtos %v2028
      %v2030 = vstv %s2029
      %v2031 = vmul.f32 %v2030, 0.00048828125
      %v2032 = vsel %vm1835, %v1825, 0.0
      %2033 = vadd.xlane.f32.xlu0 %v2032
      %v2034 = vpop.xlane.xlu0 %2033
      %v2035 = vrot.slane %v2034, 4
      %v2036 = vadd.f32 %v2034, %v2035
      %v2037 = vrot.slane %v2036, 2
      %v2038 = vadd.f32 %v2036, %v2037
      %v2039 = vrot.slane %v2038, 1
      %v2040 = vadd.f32 %v2038, %v2039
      %s2041 = vtos %v2040
      %v2042 = vstv %s2041
      %v2043 = vmul.f32 %v2042, 0.00048828125
      %v2044 = vmul.f32 %v2031, %v2031
      %v2045 = vsub.f32 %v2043, %v2044
      %v2046 = vadd.f32 %v2045, 1e-05
      %v2047 = vrsqrt.pop %v2046
      %v2048 = vsub.f32 %v1747, %v2031
      %v2049 = vsub.f32 %v1748, %v2031
      %v2050 = vmul.f32 %v2048, %v2047
      %v2051 = vmul.f32 %v2049, %v2047
      %2053 = vset.pattern.permute.xlu0 0
      %2054 = vperm.xlu0 %2053, %v1759
      %v2055 = vpop.permute.xlu0 %2054
      %v2057 = vmul.f32 %v2050, %v2055
      %v2058 = vmul.f32 %v2051, %v2055
      %2060 = vset.pattern.permute.xlu0 0
      %2061 = vperm.xlu0 %2060, %v1767
      %v2062 = vpop.permute.xlu0 %2061
      %v2064 = vadd.f32 %v2057, %v2062
      %v2065 = vadd.f32 %v2058, %v2062
      %v2066 = vsel %vm1835, %v1788, 0.0
      %2067 = vadd.xlane.f32.xlu0 %v2066
      %v2068 = vpop.xlane.xlu0 %2067
      %v2069 = vrot.slane %v2068, 4
      %v2070 = vadd.f32 %v2068, %v2069
      %v2071 = vrot.slane %v2070, 2
      %v2072 = vadd.f32 %v2070, %v2071
      %v2073 = vrot.slane %v2072, 1
      %v2074 = vadd.f32 %v2072, %v2073
      %s2075 = vtos %v2074
      %v2076 = vstv %s2075
      %v2077 = vmul.f32 %v2076, 0.00048828125
      %v2078 = vsel %vm1835, %v1828, 0.0
      %2079 = vadd.xlane.f32.xlu0 %v2078
      %v2080 = vpop.xlane.xlu0 %2079
      %v2081 = vrot.slane %v2080, 4
      %v2082 = vadd.f32 %v2080, %v2081
      %v2083 = vrot.slane %v2082, 2
      %v2084 = vadd.f32 %v2082, %v2083
      %v2085 = vrot.slane %v2084, 1
      %v2086 = vadd.f32 %v2084, %v2085
      %s2087 = vtos %v2086
      %v2088 = vstv %s2087
      %v2089 = vmul.f32 %v2088, 0.00048828125
      %v2090 = vmul.f32 %v2077, %v2077
      %v2091 = vsub.f32 %v2089, %v2090
      %v2092 = vadd.f32 %v2091, 1e-05
      %v2093 = vrsqrt.pop %v2092
      %v2094 = vsub.f32 %v1749, %v2077
      %v2095 = vsub.f32 %v1750, %v2077
      %v2096 = vmul.f32 %v2094, %v2093
      %v2097 = vmul.f32 %v2095, %v2093
      %2099 = vset.pattern.permute.xlu0 0
      %2100 = vperm.xlu0 %2099, %v1760
      %v2101 = vpop.permute.xlu0 %2100
      %v2103 = vmul.f32 %v2096, %v2101
      %v2104 = vmul.f32 %v2097, %v2101
      %2106 = vset.pattern.permute.xlu0 0
      %2107 = vperm.xlu0 %2106, %v1768
      %v2108 = vpop.permute.xlu0 %2107
      %v2110 = vadd.f32 %v2103, %v2108
      %v2111 = vadd.f32 %v2104, %v2108
      %v2112 = vsel %vm1835, %v1791, 0.0
      %2113 = vadd.xlane.f32.xlu0 %v2112
      %v2114 = vpop.xlane.xlu0 %2113
      %v2115 = vrot.slane %v2114, 4
      %v2116 = vadd.f32 %v2114, %v2115
      %v2117 = vrot.slane %v2116, 2
      %v2118 = vadd.f32 %v2116, %v2117
      %v2119 = vrot.slane %v2118, 1
      %v2120 = vadd.f32 %v2118, %v2119
      %s2121 = vtos %v2120
      %v2122 = vstv %s2121
      %v2123 = vmul.f32 %v2122, 0.00048828125
      %v2124 = vsel %vm1835, %v1831, 0.0
      %2125 = vadd.xlane.f32.xlu0 %v2124
      %v2126 = vpop.xlane.xlu0 %2125
      %v2127 = vrot.slane %v2126, 4
      %v2128 = vadd.f32 %v2126, %v2127
      %v2129 = vrot.slane %v2128, 2
      %v2130 = vadd.f32 %v2128, %v2129
      %v2131 = vrot.slane %v2130, 1
      %v2132 = vadd.f32 %v2130, %v2131
      %s2133 = vtos %v2132
      %v2134 = vstv %s2133
      %v2135 = vmul.f32 %v2134, 0.00048828125
      %v2136 = vmul.f32 %v2123, %v2123
      %v2137 = vsub.f32 %v2135, %v2136
      %v2138 = vadd.f32 %v2137, 1e-05
      %v2139 = vrsqrt.pop %v2138
      %v2140 = vsub.f32 %v1751, %v2123
      %v2141 = vsub.f32 %v1752, %v2123
      %v2142 = vmul.f32 %v2140, %v2139
      %v2143 = vmul.f32 %v2141, %v2139
      %2145 = vset.pattern.permute.xlu0 0
      %2146 = vperm.xlu0 %2145, %v1761
      %v2147 = vpop.permute.xlu0 %2146
      %v2149 = vmul.f32 %v2142, %v2147
      %v2150 = vmul.f32 %v2143, %v2147
      %2152 = vset.pattern.permute.xlu0 0
      %2153 = vperm.xlu0 %2152, %v1769
      %v2154 = vpop.permute.xlu0 %2153
      %v2156 = vadd.f32 %v2149, %v2154
      %v2157 = vadd.f32 %v2150, %v2154
      %v2158 = vsel %vm1835, %v1794, 0.0
      %2159 = vadd.xlane.f32.xlu0 %v2158
      %v2160 = vpop.xlane.xlu0 %2159
      %v2161 = vrot.slane %v2160, 4
      %v2162 = vadd.f32 %v2160, %v2161
      %v2163 = vrot.slane %v2162, 2
      %v2164 = vadd.f32 %v2162, %v2163
      %v2165 = vrot.slane %v2164, 1
      %v2166 = vadd.f32 %v2164, %v2165
      %s2167 = vtos %v2166
      %v2168 = vstv %s2167
      %v2169 = vmul.f32 %v2168, 0.00048828125
      %v2170 = vsel %vm1835, %v1834, 0.0
      %2171 = vadd.xlane.f32.xlu0 %v2170
      %v2172 = vpop.xlane.xlu0 %2171
      %v2173 = vrot.slane %v2172, 4
      %v2174 = vadd.f32 %v2172, %v2173
      %v2175 = vrot.slane %v2174, 2
      %v2176 = vadd.f32 %v2174, %v2175
      %v2177 = vrot.slane %v2176, 1
      %v2178 = vadd.f32 %v2176, %v2177
      %s2179 = vtos %v2178
      %v2180 = vstv %s2179
      %v2181 = vmul.f32 %v2180, 0.00048828125
      %v2182 = vmul.f32 %v2169, %v2169
      %v2183 = vsub.f32 %v2181, %v2182
      %v2184 = vadd.f32 %v2183, 1e-05
      %v2185 = vrsqrt.pop %v2184
      %v2186 = vsub.f32 %v1753, %v2169
      %v2187 = vsub.f32 %v1754, %v2169
      %v2188 = vmul.f32 %v2186, %v2185
      %v2189 = vmul.f32 %v2187, %v2185
      %2191 = vset.pattern.permute.xlu0 0
      %2192 = vperm.xlu0 %2191, %v1762
      %v2193 = vpop.permute.xlu0 %2192
      %v2195 = vmul.f32 %v2188, %v2193
      %v2196 = vmul.f32 %v2189, %v2193
      %2198 = vset.pattern.permute.xlu0 0
      %2199 = vperm.xlu0 %2198, %v1770
      %v2200 = vpop.permute.xlu0 %2199
      %v2202 = vadd.f32 %v2195, %v2200
      %v2203 = vadd.f32 %v2196, %v2200
      %v2204 = vld [vmem:[%s7] sm:$0xff]
      %v2205 = vld [vmem:[%s7 + $0x8] sm:$0xff]
      %v2206 = vld [vmem:[%s7 + $0x10] sm:$0xff]
      %v2207 = vld [vmem:[%s7 + $0x18] sm:$0xff]
      %v2208 = vld [vmem:[%s7 + $0x20] sm:$0xff]
      %v2209 = vld [vmem:[%s7 + $0x28] sm:$0xff]
      %v2210 = vld [vmem:[%s7 + $0x30] sm:$0xff]
      %v2211 = vld [vmem:[%s7 + $0x38] sm:$0xff]
      %v2212 = vld [vmem:[%s7 + $0x40] sm:$0xff]
      %v2213 = vld [vmem:[%s7 + $0x48] sm:$0xff]
      %v2214 = vld [vmem:[%s7 + $0x50] sm:$0xff]
      %v2215 = vld [vmem:[%s7 + $0x58] sm:$0xff]
      %v2216 = vld [vmem:[%s7 + $0x60] sm:$0xff]
      %v2217 = vld [vmem:[%s7 + $0x68] sm:$0xff]
      %v2218 = vld [vmem:[%s7 + $0x70] sm:$0xff]
      %v2219 = vld [vmem:[%s7 + $0x78] sm:$0xff]
      %v2220 = vld [vmem:[%s7 + $0x80] sm:$0xff]
      %v2221 = vld [vmem:[%s7 + $0x88] sm:$0xff]
      %v2222 = vld [vmem:[%s7 + $0x90] sm:$0xff]
      %v2223 = vld [vmem:[%s7 + $0x98] sm:$0xff]
      %v2224 = vld [vmem:[%s7 + $0xa0] sm:$0xff]
      %v2225 = vld [vmem:[%s7 + $0xa8] sm:$0xff]
      %v2226 = vld [vmem:[%s7 + $0xb0] sm:$0xff]
      %v2227 = vld [vmem:[%s7 + $0xb8] sm:$0xff]
      %v2228 = vld [vmem:[%s7 + $0xc0] sm:$0xff]
      %v2229 = vld [vmem:[%s7 + $0xc8] sm:$0xff]
      %v2230 = vld [vmem:[%s7 + $0xd0] sm:$0xff]
      %v2231 = vld [vmem:[%s7 + $0xd8] sm:$0xff]
      %v2232 = vld [vmem:[%s7 + $0xe0] sm:$0xff]
      %v2233 = vld [vmem:[%s7 + $0xe8] sm:$0xff]
      %v2234 = vld [vmem:[%s7 + $0xf0] sm:$0xff]
      %v2235 = vld [vmem:[%s7 + $0xf8] sm:$0xff]
      %v2236 = vld [vmem:[%s7 + $0x100] sm:$0xff]
      %v2237 = vld [vmem:[%s7 + $0x108] sm:$0xff]
      %v2238 = vld [vmem:[%s7 + $0x110] sm:$0xff]
      %v2239 = vld [vmem:[%s7 + $0x118] sm:$0xff]
      %v2240 = vld [vmem:[%s7 + $0x120] sm:$0xff]
      %v2241 = vld [vmem:[%s7 + $0x128] sm:$0xff]
      %v2242 = vld [vmem:[%s7 + $0x130] sm:$0xff]
      %v2243 = vld [vmem:[%s7 + $0x138] sm:$0xff]
      %v2244 = vld [vmem:[%s8] sm:$0xff]
      %v2245 = vld [vmem:[%s8 + $0x8] sm:$0xff]
      %v2246 = vld [vmem:[%s8 + $0x10] sm:$0xff]
      %v2247 = vld [vmem:[%s8 + $0x18] sm:$0xff]
      %v2248 = vld [vmem:[%s8 + $0x20] sm:$0xff]
      %v2249 = vld [vmem:[%s8 + $0x28] sm:$0xff]
      %v2250 = vld [vmem:[%s8 + $0x30] sm:$0xff]
      %v2251 = vld [vmem:[%s8 + $0x38] sm:$0xff]
      %2252 = vrot.lane.b32.xlu0 %v1880, 17
      %v2253 = vpop.permute.xlu0 %2252
      %2254 = vrot.lane.b32.xlu0 %v1926, 17
      %v2255 = vpop.permute.xlu0 %2254
      %2256 = vrot.lane.b32.xlu0 %v1972, 17
      %v2257 = vpop.permute.xlu0 %2256
      %2258 = vrot.lane.b32.xlu0 %v2018, 17
      %v2259 = vpop.permute.xlu0 %2258
      %2260 = vrot.lane.b32.xlu0 %v2064, 17
      %v2261 = vpop.permute.xlu0 %2260
      %2262 = vrot.lane.b32.xlu0 %v2110, 17
      %v2263 = vpop.permute.xlu0 %2262
      %2264 = vrot.lane.b32.xlu0 %v2156, 17
      %v2265 = vpop.permute.xlu0 %2264
      %2266 = vrot.lane.b32.xlu0 %v2202, 17
      %v2267 = vpop.permute.xlu0 %2266
      %2268 = vrot.lane.b32.xlu0 %v1881, 17
      %v2269 = vpop.permute.xlu0 %2268
      %2270 = vrot.lane.b32.xlu0 %v1927, 17
      %v2271 = vpop.permute.xlu0 %2270
      %2272 = vrot.lane.b32.xlu0 %v1973, 17
      %v2273 = vpop.permute.xlu0 %2272
      %2274 = vrot.lane.b32.xlu0 %v2019, 17
      %v2275 = vpop.permute.xlu0 %2274
      %2276 = vrot.lane.b32.xlu0 %v2065, 17
      %v2277 = vpop.permute.xlu0 %2276
      %2278 = vrot.lane.b32.xlu0 %v2111, 17
      %v2279 = vpop.permute.xlu0 %2278
      %2280 = vrot.lane.b32.xlu0 %v2157, 17
      %v2281 = vpop.permute.xlu0 %2280
      %2282 = vrot.lane.b32.xlu0 %v2203, 17
      %v2283 = vpop.permute.xlu0 %2282
      %v2284 = vsel %vm1362, %v2253, %v2269
      %v2285 = vsel %vm1362, %v2255, %v2271
      %v2286 = vsel %vm1362, %v2257, %v2273
      %v2287 = vsel %vm1362, %v2259, %v2275
      %v2288 = vsel %vm1362, %v2261, %v2277
      %v2289 = vsel %vm1362, %v2263, %v2279
      %v2290 = vsel %vm1362, %v2265, %v2281
      %v2291 = vsel %vm1362, %v2267, %v2283
      %v2292 = vsel %vm1362, %v2269, %v2253
      %v2293 = vsel %vm1362, %v2271, %v2255
      %v2294 = vsel %vm1362, %v2273, %v2257
      %v2295 = vsel %vm1362, %v2275, %v2259
      %v2296 = vsel %vm1362, %v2277, %v2261
      %v2297 = vsel %vm1362, %v2279, %v2263
      %v2298 = vsel %vm1362, %v2281, %v2265
      %v2299 = vsel %vm1362, %v2283, %v2267
      %v2300 = vmul.f32 %v2292, %v1368
      %v2301 = vmul.f32 %v2284, %v1372
      %v2302 = vmul.f32 %v2293, %v1368
      %v2303 = vmul.f32 %v2285, %v1372
      %v2304 = vmul.f32 %v2294, %v1368
      %v2305 = vmul.f32 %v2286, %v1372
      %v2306 = vmul.f32 %v2295, %v1368
      %v2307 = vmul.f32 %v2287, %v1372
      %v2308 = vmul.f32 %v2296, %v1368
      %v2309 = vmul.f32 %v2288, %v1372
      %v2310 = vmul.f32 %v2297, %v1368
      %v2311 = vmul.f32 %v2289, %v1372
      %v2312 = vmul.f32 %v2298, %v1368
      %v2313 = vmul.f32 %v2290, %v1372
      %v2314 = vmul.f32 %v2299, %v1368
      %v2315 = vmul.f32 %v2291, %v1372
      %2316 = vrot.lane.b32.xlu0 %v1880, 16
      %v2317 = vpop.permute.xlu0 %2316
      %2318 = vrot.lane.b32.xlu0 %v1926, 16
      %v2319 = vpop.permute.xlu0 %2318
      %2320 = vrot.lane.b32.xlu0 %v1972, 16
      %v2321 = vpop.permute.xlu0 %2320
      %2322 = vrot.lane.b32.xlu0 %v2018, 16
      %v2323 = vpop.permute.xlu0 %2322
      %2324 = vrot.lane.b32.xlu0 %v2064, 16
      %v2325 = vpop.permute.xlu0 %2324
      %2326 = vrot.lane.b32.xlu0 %v2110, 16
      %v2327 = vpop.permute.xlu0 %2326
      %2328 = vrot.lane.b32.xlu0 %v2156, 16
      %v2329 = vpop.permute.xlu0 %2328
      %2330 = vrot.lane.b32.xlu0 %v2202, 16
      %v2331 = vpop.permute.xlu0 %2330
      %2332 = vrot.lane.b32.xlu0 %v1881, 16
      %v2333 = vpop.permute.xlu0 %2332
      %2334 = vrot.lane.b32.xlu0 %v1927, 16
      %v2335 = vpop.permute.xlu0 %2334
      %2336 = vrot.lane.b32.xlu0 %v1973, 16
      %v2337 = vpop.permute.xlu0 %2336
      %2338 = vrot.lane.b32.xlu0 %v2019, 16
      %v2339 = vpop.permute.xlu0 %2338
      %2340 = vrot.lane.b32.xlu0 %v2065, 16
      %v2341 = vpop.permute.xlu0 %2340
      %2342 = vrot.lane.b32.xlu0 %v2111, 16
      %v2343 = vpop.permute.xlu0 %2342
      %2344 = vrot.lane.b32.xlu0 %v2157, 16
      %v2345 = vpop.permute.xlu0 %2344
      %2346 = vrot.lane.b32.xlu0 %v2203, 16
      %v2347 = vpop.permute.xlu0 %2346
      %v2348 = vsel %vm1379, %v2317, %v2333
      %v2349 = vsel %vm1379, %v2319, %v2335
      %v2350 = vsel %vm1379, %v2321, %v2337
      %v2351 = vsel %vm1379, %v2323, %v2339
      %v2352 = vsel %vm1379, %v2325, %v2341
      %v2353 = vsel %vm1379, %v2327, %v2343
      %v2354 = vsel %vm1379, %v2329, %v2345
      %v2355 = vsel %vm1379, %v2331, %v2347
      %v2356 = vsel %vm1379, %v2333, %v2317
      %v2357 = vsel %vm1379, %v2335, %v2319
      %v2358 = vsel %vm1379, %v2337, %v2321
      %v2359 = vsel %vm1379, %v2339, %v2323
      %v2360 = vsel %vm1379, %v2341, %v2325
      %v2361 = vsel %vm1379, %v2343, %v2327
      %v2362 = vsel %vm1379, %v2345, %v2329
      %v2363 = vsel %vm1379, %v2347, %v2331
      %v2364 = vmul.f32 %v2356, %v1385
      %v2365 = vmul.f32 %v2348, %v1389
      %v2366 = vmul.f32 %v2357, %v1385
      %v2367 = vmul.f32 %v2349, %v1389
      %v2368 = vmul.f32 %v2358, %v1385
      %v2369 = vmul.f32 %v2350, %v1389
      %v2370 = vmul.f32 %v2359, %v1385
      %v2371 = vmul.f32 %v2351, %v1389
      %v2372 = vmul.f32 %v2360, %v1385
      %v2373 = vmul.f32 %v2352, %v1389
      %v2374 = vmul.f32 %v2361, %v1385
      %v2375 = vmul.f32 %v2353, %v1389
      %v2376 = vmul.f32 %v2362, %v1385
      %v2377 = vmul.f32 %v2354, %v1389
      %v2378 = vmul.f32 %v2363, %v1385
      %v2379 = vmul.f32 %v2355, %v1389
      %2380 = vrot.lane.b32.xlu0 %v1880, 15
      %v2381 = vpop.permute.xlu0 %2380
      %2382 = vrot.lane.b32.xlu0 %v1926, 15
      %v2383 = vpop.permute.xlu0 %2382
      %2384 = vrot.lane.b32.xlu0 %v1972, 15
      %v2385 = vpop.permute.xlu0 %2384
      %2386 = vrot.lane.b32.xlu0 %v2018, 15
      %v2387 = vpop.permute.xlu0 %2386
      %2388 = vrot.lane.b32.xlu0 %v2064, 15
      %v2389 = vpop.permute.xlu0 %2388
      %2390 = vrot.lane.b32.xlu0 %v2110, 15
      %v2391 = vpop.permute.xlu0 %2390
      %2392 = vrot.lane.b32.xlu0 %v2156, 15
      %v2393 = vpop.permute.xlu0 %2392
      %2394 = vrot.lane.b32.xlu0 %v2202, 15
      %v2395 = vpop.permute.xlu0 %2394
      %2396 = vrot.lane.b32.xlu0 %v1881, 15
      %v2397 = vpop.permute.xlu0 %2396
      %2398 = vrot.lane.b32.xlu0 %v1927, 15
      %v2399 = vpop.permute.xlu0 %2398
      %2400 = vrot.lane.b32.xlu0 %v1973, 15
      %v2401 = vpop.permute.xlu0 %2400
      %2402 = vrot.lane.b32.xlu0 %v2019, 15
      %v2403 = vpop.permute.xlu0 %2402
      %2404 = vrot.lane.b32.xlu0 %v2065, 15
      %v2405 = vpop.permute.xlu0 %2404
      %2406 = vrot.lane.b32.xlu0 %v2111, 15
      %v2407 = vpop.permute.xlu0 %2406
      %2408 = vrot.lane.b32.xlu0 %v2157, 15
      %v2409 = vpop.permute.xlu0 %2408
      %2410 = vrot.lane.b32.xlu0 %v2203, 15
      %v2411 = vpop.permute.xlu0 %2410
      %v2412 = vsel %vm1396, %v2381, %v2397
      %v2413 = vsel %vm1396, %v2383, %v2399
      %v2414 = vsel %vm1396, %v2385, %v2401
      %v2415 = vsel %vm1396, %v2387, %v2403
      %v2416 = vsel %vm1396, %v2389, %v2405
      %v2417 = vsel %vm1396, %v2391, %v2407
      %v2418 = vsel %vm1396, %v2393, %v2409
      %v2419 = vsel %vm1396, %v2395, %v2411
      %v2420 = vsel %vm1396, %v2397, %v2381
      %v2421 = vsel %vm1396, %v2399, %v2383
      %v2422 = vsel %vm1396, %v2401, %v2385
      %v2423 = vsel %vm1396, %v2403, %v2387
      %v2424 = vsel %vm1396, %v2405, %v2389
      %v2425 = vsel %vm1396, %v2407, %v2391
      %v2426 = vsel %vm1396, %v2409, %v2393
      %v2427 = vsel %vm1396, %v2411, %v2395
      %v2428 = vmul.f32 %v2420, %v1402
      %v2429 = vmul.f32 %v2412, %v1406
      %v2430 = vmul.f32 %v2421, %v1402
      %v2431 = vmul.f32 %v2413, %v1406
      %v2432 = vmul.f32 %v2422, %v1402
      %v2433 = vmul.f32 %v2414, %v1406
      %v2434 = vmul.f32 %v2423, %v1402
      %v2435 = vmul.f32 %v2415, %v1406
      %v2436 = vmul.f32 %v2424, %v1402
      %v2437 = vmul.f32 %v2416, %v1406
      %v2438 = vmul.f32 %v2425, %v1402
      %v2439 = vmul.f32 %v2417, %v1406
      %v2440 = vmul.f32 %v2426, %v1402
      %v2441 = vmul.f32 %v2418, %v1406
      %v2442 = vmul.f32 %v2427, %v1402
      %v2443 = vmul.f32 %v2419, %v1406
      %2444 = vrot.lane.b32.xlu0 %v1880, 1
      %v2445 = vpop.permute.xlu0 %2444
      %2446 = vrot.lane.b32.xlu0 %v1926, 1
      %v2447 = vpop.permute.xlu0 %2446
      %2448 = vrot.lane.b32.xlu0 %v1972, 1
      %v2449 = vpop.permute.xlu0 %2448
      %2450 = vrot.lane.b32.xlu0 %v2018, 1
      %v2451 = vpop.permute.xlu0 %2450
      %2452 = vrot.lane.b32.xlu0 %v2064, 1
      %v2453 = vpop.permute.xlu0 %2452
      %2454 = vrot.lane.b32.xlu0 %v2110, 1
      %v2455 = vpop.permute.xlu0 %2454
      %2456 = vrot.lane.b32.xlu0 %v2156, 1
      %v2457 = vpop.permute.xlu0 %2456
      %2458 = vrot.lane.b32.xlu0 %v2202, 1
      %v2459 = vpop.permute.xlu0 %2458
      %2460 = vrot.lane.b32.xlu0 %v1881, 1
      %v2461 = vpop.permute.xlu0 %2460
      %2462 = vrot.lane.b32.xlu0 %v1927, 1
      %v2463 = vpop.permute.xlu0 %2462
      %2464 = vrot.lane.b32.xlu0 %v1973, 1
      %v2465 = vpop.permute.xlu0 %2464
      %2466 = vrot.lane.b32.xlu0 %v2019, 1
      %v2467 = vpop.permute.xlu0 %2466
      %2468 = vrot.lane.b32.xlu0 %v2065, 1
      %v2469 = vpop.permute.xlu0 %2468
      %2470 = vrot.lane.b32.xlu0 %v2111, 1
      %v2471 = vpop.permute.xlu0 %2470
      %2472 = vrot.lane.b32.xlu0 %v2157, 1
      %v2473 = vpop.permute.xlu0 %2472
      %2474 = vrot.lane.b32.xlu0 %v2203, 1
      %v2475 = vpop.permute.xlu0 %2474
      %v2476 = vsel %vm1413, %v2445, %v2461
      %v2477 = vsel %vm1413, %v2447, %v2463
      %v2478 = vsel %vm1413, %v2449, %v2465
      %v2479 = vsel %vm1413, %v2451, %v2467
      %v2480 = vsel %vm1413, %v2453, %v2469
      %v2481 = vsel %vm1413, %v2455, %v2471
      %v2482 = vsel %vm1413, %v2457, %v2473
      %v2483 = vsel %vm1413, %v2459, %v2475
      %v2484 = vsel %vm1413, %v2461, %v2445
      %v2485 = vsel %vm1413, %v2463, %v2447
      %v2486 = vsel %vm1413, %v2465, %v2449
      %v2487 = vsel %vm1413, %v2467, %v2451
      %v2488 = vsel %vm1413, %v2469, %v2453
      %v2489 = vsel %vm1413, %v2471, %v2455
      %v2490 = vsel %vm1413, %v2473, %v2457
      %v2491 = vsel %vm1413, %v2475, %v2459
      %v2492 = vmul.f32 %v2484, %v1419
      %v2493 = vmul.f32 %v2476, %v1423
      %v2494 = vmul.f32 %v2485, %v1419
      %v2495 = vmul.f32 %v2477, %v1423
      %v2496 = vmul.f32 %v2486, %v1419
      %v2497 = vmul.f32 %v2478, %v1423
      %v2498 = vmul.f32 %v2487, %v1419
      %v2499 = vmul.f32 %v2479, %v1423
      %v2500 = vmul.f32 %v2488, %v1419
      %v2501 = vmul.f32 %v2480, %v1423
      %v2502 = vmul.f32 %v2489, %v1419
      %v2503 = vmul.f32 %v2481, %v1423
      %v2504 = vmul.f32 %v2490, %v1419
      %v2505 = vmul.f32 %v2482, %v1423
      %v2506 = vmul.f32 %v2491, %v1419
      %v2507 = vmul.f32 %v2483, %v1423
      %2508 = vrot.lane.b32.xlu0 %v1880, 127
      %v2509 = vpop.permute.xlu0 %2508
      %2510 = vrot.lane.b32.xlu0 %v1926, 127
      %v2511 = vpop.permute.xlu0 %2510
      %2512 = vrot.lane.b32.xlu0 %v1972, 127
      %v2513 = vpop.permute.xlu0 %2512
      %2514 = vrot.lane.b32.xlu0 %v2018, 127
      %v2515 = vpop.permute.xlu0 %2514
      %2516 = vrot.lane.b32.xlu0 %v2064, 127
      %v2517 = vpop.permute.xlu0 %2516
      %2518 = vrot.lane.b32.xlu0 %v2110, 127
      %v2519 = vpop.permute.xlu0 %2518
      %2520 = vrot.lane.b32.xlu0 %v2156, 127
      %v2521 = vpop.permute.xlu0 %2520
      %2522 = vrot.lane.b32.xlu0 %v2202, 127
      %v2523 = vpop.permute.xlu0 %2522
      %2524 = vrot.lane.b32.xlu0 %v1881, 127
      %v2525 = vpop.permute.xlu0 %2524
      %2526 = vrot.lane.b32.xlu0 %v1927, 127
      %v2527 = vpop.permute.xlu0 %2526
      %2528 = vrot.lane.b32.xlu0 %v1973, 127
      %v2529 = vpop.permute.xlu0 %2528
      %2530 = vrot.lane.b32.xlu0 %v2019, 127
      %v2531 = vpop.permute.xlu0 %2530
      %2532 = vrot.lane.b32.xlu0 %v2065, 127
      %v2533 = vpop.permute.xlu0 %2532
      %2534 = vrot.lane.b32.xlu0 %v2111, 127
      %v2535 = vpop.permute.xlu0 %2534
      %2536 = vrot.lane.b32.xlu0 %v2157, 127
      %v2537 = vpop.permute.xlu0 %2536
      %2538 = vrot.lane.b32.xlu0 %v2203, 127
      %v2539 = vpop.permute.xlu0 %2538
      %v2540 = vsel %vm1430, %v2509, %v2525
      %v2541 = vsel %vm1430, %v2511, %v2527
      %v2542 = vsel %vm1430, %v2513, %v2529
      %v2543 = vsel %vm1430, %v2515, %v2531
      %v2544 = vsel %vm1430, %v2517, %v2533
      %v2545 = vsel %vm1430, %v2519, %v2535
      %v2546 = vsel %vm1430, %v2521, %v2537
      %v2547 = vsel %vm1430, %v2523, %v2539
      %v2548 = vsel %vm1430, %v2525, %v2509
      %v2549 = vsel %vm1430, %v2527, %v2511
      %v2550 = vsel %vm1430, %v2529, %v2513
      %v2551 = vsel %vm1430, %v2531, %v2515
      %v2552 = vsel %vm1430, %v2533, %v2517
      %v2553 = vsel %vm1430, %v2535, %v2519
      %v2554 = vsel %vm1430, %v2537, %v2521
      %v2555 = vsel %vm1430, %v2539, %v2523
      %v2556 = vmul.f32 %v2540, %v1436
      %v2557 = vmul.f32 %v2548, %v1440
      %v2558 = vmul.f32 %v2541, %v1436
      %v2559 = vmul.f32 %v2549, %v1440
      %v2560 = vmul.f32 %v2542, %v1436
      %v2561 = vmul.f32 %v2550, %v1440
      %v2562 = vmul.f32 %v2543, %v1436
      %v2563 = vmul.f32 %v2551, %v1440
      %v2564 = vmul.f32 %v2544, %v1436
      %v2565 = vmul.f32 %v2552, %v1440
      %v2566 = vmul.f32 %v2545, %v1436
      %v2567 = vmul.f32 %v2553, %v1440
      %v2568 = vmul.f32 %v2546, %v1436
      %v2569 = vmul.f32 %v2554, %v1440
      %v2570 = vmul.f32 %v2547, %v1436
      %v2571 = vmul.f32 %v2555, %v1440
      %2572 = vrot.lane.b32.xlu0 %v1880, 113
      %v2573 = vpop.permute.xlu0 %2572
      %2574 = vrot.lane.b32.xlu0 %v1926, 113
      %v2575 = vpop.permute.xlu0 %2574
      %2576 = vrot.lane.b32.xlu0 %v1972, 113
      %v2577 = vpop.permute.xlu0 %2576
      %2578 = vrot.lane.b32.xlu0 %v2018, 113
      %v2579 = vpop.permute.xlu0 %2578
      %2580 = vrot.lane.b32.xlu0 %v2064, 113
      %v2581 = vpop.permute.xlu0 %2580
      %2582 = vrot.lane.b32.xlu0 %v2110, 113
      %v2583 = vpop.permute.xlu0 %2582
      %2584 = vrot.lane.b32.xlu0 %v2156, 113
      %v2585 = vpop.permute.xlu0 %2584
      %2586 = vrot.lane.b32.xlu0 %v2202, 113
      %v2587 = vpop.permute.xlu0 %2586
      %2588 = vrot.lane.b32.xlu0 %v1881, 113
      %v2589 = vpop.permute.xlu0 %2588
      %2590 = vrot.lane.b32.xlu0 %v1927, 113
      %v2591 = vpop.permute.xlu0 %2590
      %2592 = vrot.lane.b32.xlu0 %v1973, 113
      %v2593 = vpop.permute.xlu0 %2592
      %2594 = vrot.lane.b32.xlu0 %v2019, 113
      %v2595 = vpop.permute.xlu0 %2594
      %2596 = vrot.lane.b32.xlu0 %v2065, 113
      %v2597 = vpop.permute.xlu0 %2596
      %2598 = vrot.lane.b32.xlu0 %v2111, 113
      %v2599 = vpop.permute.xlu0 %2598
      %2600 = vrot.lane.b32.xlu0 %v2157, 113
      %v2601 = vpop.permute.xlu0 %2600
      %2602 = vrot.lane.b32.xlu0 %v2203, 113
      %v2603 = vpop.permute.xlu0 %2602
      %v2604 = vsel %vm1447, %v2573, %v2589
      %v2605 = vsel %vm1447, %v2575, %v2591
      %v2606 = vsel %vm1447, %v2577, %v2593
      %v2607 = vsel %vm1447, %v2579, %v2595
      %v2608 = vsel %vm1447, %v2581, %v2597
      %v2609 = vsel %vm1447, %v2583, %v2599
      %v2610 = vsel %vm1447, %v2585, %v2601
      %v2611 = vsel %vm1447, %v2587, %v2603
      %v2612 = vsel %vm1447, %v2589, %v2573
      %v2613 = vsel %vm1447, %v2591, %v2575
      %v2614 = vsel %vm1447, %v2593, %v2577
      %v2615 = vsel %vm1447, %v2595, %v2579
      %v2616 = vsel %vm1447, %v2597, %v2581
      %v2617 = vsel %vm1447, %v2599, %v2583
      %v2618 = vsel %vm1447, %v2601, %v2585
      %v2619 = vsel %vm1447, %v2603, %v2587
      %v2620 = vmul.f32 %v2604, %v1453
      %v2621 = vmul.f32 %v2612, %v1457
      %v2622 = vmul.f32 %v2605, %v1453
      %v2623 = vmul.f32 %v2613, %v1457
      %v2624 = vmul.f32 %v2606, %v1453
      %v2625 = vmul.f32 %v2614, %v1457
      %v2626 = vmul.f32 %v2607, %v1453
      %v2627 = vmul.f32 %v2615, %v1457
      %v2628 = vmul.f32 %v2608, %v1453
      %v2629 = vmul.f32 %v2616, %v1457
      %v2630 = vmul.f32 %v2609, %v1453
      %v2631 = vmul.f32 %v2617, %v1457
      %v2632 = vmul.f32 %v2610, %v1453
      %v2633 = vmul.f32 %v2618, %v1457
      %v2634 = vmul.f32 %v2611, %v1453
      %v2635 = vmul.f32 %v2619, %v1457
      %2636 = vrot.lane.b32.xlu0 %v1880, 112
      %v2637 = vpop.permute.xlu0 %2636
      %2638 = vrot.lane.b32.xlu0 %v1926, 112
      %v2639 = vpop.permute.xlu0 %2638
      %2640 = vrot.lane.b32.xlu0 %v1972, 112
      %v2641 = vpop.permute.xlu0 %2640
      %2642 = vrot.lane.b32.xlu0 %v2018, 112
      %v2643 = vpop.permute.xlu0 %2642
      %2644 = vrot.lane.b32.xlu0 %v2064, 112
      %v2645 = vpop.permute.xlu0 %2644
      %2646 = vrot.lane.b32.xlu0 %v2110, 112
      %v2647 = vpop.permute.xlu0 %2646
      %2648 = vrot.lane.b32.xlu0 %v2156, 112
      %v2649 = vpop.permute.xlu0 %2648
      %2650 = vrot.lane.b32.xlu0 %v2202, 112
      %v2651 = vpop.permute.xlu0 %2650
      %2652 = vrot.lane.b32.xlu0 %v1881, 112
      %v2653 = vpop.permute.xlu0 %2652
      %2654 = vrot.lane.b32.xlu0 %v1927, 112
      %v2655 = vpop.permute.xlu0 %2654
      %2656 = vrot.lane.b32.xlu0 %v1973, 112
      %v2657 = vpop.permute.xlu0 %2656
      %2658 = vrot.lane.b32.xlu0 %v2019, 112
      %v2659 = vpop.permute.xlu0 %2658
      %2660 = vrot.lane.b32.xlu0 %v2065, 112
      %v2661 = vpop.permute.xlu0 %2660
      %2662 = vrot.lane.b32.xlu0 %v2111, 112
      %v2663 = vpop.permute.xlu0 %2662
      %2664 = vrot.lane.b32.xlu0 %v2157, 112
      %v2665 = vpop.permute.xlu0 %2664
      %2666 = vrot.lane.b32.xlu0 %v2203, 112
      %v2667 = vpop.permute.xlu0 %2666
      %v2668 = vsel %vm1464, %v2637, %v2653
      %v2669 = vsel %vm1464, %v2639, %v2655
      %v2670 = vsel %vm1464, %v2641, %v2657
      %v2671 = vsel %vm1464, %v2643, %v2659
      %v2672 = vsel %vm1464, %v2645, %v2661
      %v2673 = vsel %vm1464, %v2647, %v2663
      %v2674 = vsel %vm1464, %v2649, %v2665
      %v2675 = vsel %vm1464, %v2651, %v2667
      %v2676 = vsel %vm1464, %v2653, %v2637
      %v2677 = vsel %vm1464, %v2655, %v2639
      %v2678 = vsel %vm1464, %v2657, %v2641
      %v2679 = vsel %vm1464, %v2659, %v2643
      %v2680 = vsel %vm1464, %v2661, %v2645
      %v2681 = vsel %vm1464, %v2663, %v2647
      %v2682 = vsel %vm1464, %v2665, %v2649
      %v2683 = vsel %vm1464, %v2667, %v2651
      %v2684 = vmul.f32 %v2668, %v1470
      %v2685 = vmul.f32 %v2676, %v1474
      %v2686 = vmul.f32 %v2669, %v1470
      %v2687 = vmul.f32 %v2677, %v1474
      %v2688 = vmul.f32 %v2670, %v1470
      %v2689 = vmul.f32 %v2678, %v1474
      %v2690 = vmul.f32 %v2671, %v1470
      %v2691 = vmul.f32 %v2679, %v1474
      %v2692 = vmul.f32 %v2672, %v1470
      %v2693 = vmul.f32 %v2680, %v1474
      %v2694 = vmul.f32 %v2673, %v1470
      %v2695 = vmul.f32 %v2681, %v1474
      %v2696 = vmul.f32 %v2674, %v1470
      %v2697 = vmul.f32 %v2682, %v1474
      %v2698 = vmul.f32 %v2675, %v1470
      %v2699 = vmul.f32 %v2683, %v1474
      %2700 = vrot.lane.b32.xlu0 %v1880, 111
      %v2701 = vpop.permute.xlu0 %2700
      %2702 = vrot.lane.b32.xlu0 %v1926, 111
      %v2703 = vpop.permute.xlu0 %2702
      %2704 = vrot.lane.b32.xlu0 %v1972, 111
      %v2705 = vpop.permute.xlu0 %2704
      %2706 = vrot.lane.b32.xlu0 %v2018, 111
      %v2707 = vpop.permute.xlu0 %2706
      %2708 = vrot.lane.b32.xlu0 %v2064, 111
      %v2709 = vpop.permute.xlu0 %2708
      %2710 = vrot.lane.b32.xlu0 %v2110, 111
      %v2711 = vpop.permute.xlu0 %2710
      %2712 = vrot.lane.b32.xlu0 %v2156, 111
      %v2713 = vpop.permute.xlu0 %2712
      %2714 = vrot.lane.b32.xlu0 %v2202, 111
      %v2715 = vpop.permute.xlu0 %2714
      %2716 = vrot.lane.b32.xlu0 %v1881, 111
      %v2717 = vpop.permute.xlu0 %2716
      %2718 = vrot.lane.b32.xlu0 %v1927, 111
      %v2719 = vpop.permute.xlu0 %2718
      %2720 = vrot.lane.b32.xlu0 %v1973, 111
      %v2721 = vpop.permute.xlu0 %2720
      %2722 = vrot.lane.b32.xlu0 %v2019, 111
      %v2723 = vpop.permute.xlu0 %2722
      %2724 = vrot.lane.b32.xlu0 %v2065, 111
      %v2725 = vpop.permute.xlu0 %2724
      %2726 = vrot.lane.b32.xlu0 %v2111, 111
      %v2727 = vpop.permute.xlu0 %2726
      %2728 = vrot.lane.b32.xlu0 %v2157, 111
      %v2729 = vpop.permute.xlu0 %2728
      %2730 = vrot.lane.b32.xlu0 %v2203, 111
      %v2731 = vpop.permute.xlu0 %2730
      %v2732 = vsel %vm1481, %v2701, %v2717
      %v2733 = vsel %vm1481, %v2703, %v2719
      %v2734 = vsel %vm1481, %v2705, %v2721
      %v2735 = vsel %vm1481, %v2707, %v2723
      %v2736 = vsel %vm1481, %v2709, %v2725
      %v2737 = vsel %vm1481, %v2711, %v2727
      %v2738 = vsel %vm1481, %v2713, %v2729
      %v2739 = vsel %vm1481, %v2715, %v2731
      %v2740 = vsel %vm1481, %v2717, %v2701
      %v2741 = vsel %vm1481, %v2719, %v2703
      %v2742 = vsel %vm1481, %v2721, %v2705
      %v2743 = vsel %vm1481, %v2723, %v2707
      %v2744 = vsel %vm1481, %v2725, %v2709
      %v2745 = vsel %vm1481, %v2727, %v2711
      %v2746 = vsel %vm1481, %v2729, %v2713
      %v2747 = vsel %vm1481, %v2731, %v2715
      %v2748 = vmul.f32 %v2732, %v1487
      %v2749 = vmul.f32 %v2740, %v1491
      %v2750 = vmul.f32 %v2733, %v1487
      %v2751 = vmul.f32 %v2741, %v1491
      %v2752 = vmul.f32 %v2734, %v1487
      %v2753 = vmul.f32 %v2742, %v1491
      %v2754 = vmul.f32 %v2735, %v1487
      %v2755 = vmul.f32 %v2743, %v1491
      %v2756 = vmul.f32 %v2736, %v1487
      %v2757 = vmul.f32 %v2744, %v1491
      %v2758 = vmul.f32 %v2737, %v1487
      %v2759 = vmul.f32 %v2745, %v1491
      %v2760 = vmul.f32 %v2738, %v1487
      %v2761 = vmul.f32 %v2746, %v1491
      %v2762 = vmul.f32 %v2739, %v1487
      %v2763 = vmul.f32 %v2747, %v1491
      %2765 = vset.pattern.permute.xlu0 0
      %2766 = vperm.xlu0 %2765, %v2244
      %v2767 = vpop.permute.xlu0 %2766
      %2770 = vset.pattern.permute.xlu0 0
      %2771 = vperm.xlu0 %2770, %v2245
      %v2772 = vpop.permute.xlu0 %2771
      %2775 = vset.pattern.permute.xlu0 0
      %2776 = vperm.xlu0 %2775, %v2246
      %v2777 = vpop.permute.xlu0 %2776
      %2780 = vset.pattern.permute.xlu0 0
      %2781 = vperm.xlu0 %2780, %v2247
      %v2782 = vpop.permute.xlu0 %2781
      %2785 = vset.pattern.permute.xlu0 0
      %2786 = vperm.xlu0 %2785, %v2248
      %v2787 = vpop.permute.xlu0 %2786
      %2790 = vset.pattern.permute.xlu0 0
      %2791 = vperm.xlu0 %2790, %v2249
      %v2792 = vpop.permute.xlu0 %2791
      %2795 = vset.pattern.permute.xlu0 0
      %2796 = vperm.xlu0 %2795, %v2250
      %v2797 = vpop.permute.xlu0 %2796
      %2800 = vset.pattern.permute.xlu0 0
      %2801 = vperm.xlu0 %2800, %v2251
      %v2802 = vpop.permute.xlu0 %2801
      %vm2804 = vcmask 523264
      %v2806 = vsel %vm2804, %v2208, 0
      %v2809 = vsel %vm2804, %v2213, 0
      %v2812 = vsel %vm2804, %v2218, 0
      %v2815 = vsel %vm2804, %v2223, 0
      %v2818 = vsel %vm2804, %v2228, 0
      %v2821 = vsel %vm2804, %v2233, 0
      %v2824 = vsel %vm2804, %v2238, 0
      %v2827 = vsel %vm2804, %v2243, 0
      %2829 = vmatprep.subr.mxu0 %v2301
      %2830 = vmatpush1.msra.mxu0 %v2300
      %2831 = vmatprep.subr.mxu0 %v2303
      %2832 = vmatpush1.msra.mxu0 %v2302
      %2833 = vmatprep.subr.mxu0 %v2305
      %2834 = vmatpush1.msra.mxu0 %v2304
      %2835 = vmatprep.subr.mxu0 %v2307
      %2836 = vmatpush1.msra.mxu0 %v2306
      %2837 = vmatprep.subr.mxu0 %v2309
      %2838 = vmatpush1.msra.mxu0 %v2308
      %2839 = vmatprep.subr.mxu0 %v2311
      %2840 = vmatpush1.msra.mxu0 %v2310
      %2841 = vmatprep.subr.mxu0 %v2313
      %2842 = vmatpush1.msra.mxu0 %v2312
      %2843 = vmatprep.subr.mxu0 %v2315
      %2844 = vmatpush1.msra.mxu0 %v2314
      %2845 = vmatprep.subr.mxu0 %v2365
      %2846 = vmatpush1.msra.mxu0 %v2364
      %2847 = vmatprep.subr.mxu0 %v2367
      %2848 = vmatpush1.msra.mxu0 %v2366
      %2849 = vmatprep.subr.mxu0 %v2369
      %2850 = vmatpush1.msra.mxu0 %v2368
      %2851 = vmatprep.subr.mxu0 %v2371
      %2852 = vmatpush1.msra.mxu0 %v2370
      %2853 = vmatprep.subr.mxu0 %v2373
      %2854 = vmatpush1.msra.mxu0 %v2372
      %2855 = vmatprep.subr.mxu0 %v2375
      %2856 = vmatpush1.msra.mxu0 %v2374
      %2857 = vmatprep.subr.mxu0 %v2377
      %2858 = vmatpush1.msra.mxu0 %v2376
      %2859 = vmatprep.subr.mxu0 %v2379
      %2860 = vmatpush1.msra.mxu0 %v2378
      %2861 = vmatprep.subr.mxu0 %v2429
      %2862 = vmatpush1.msra.mxu0 %v2428
      %2863 = vmatprep.subr.mxu0 %v2431
      %2864 = vmatpush1.msra.mxu0 %v2430
      %2865 = vmatprep.subr.mxu0 %v2433
      %2866 = vmatpush1.msra.mxu0 %v2432
      %2867 = vmatprep.subr.mxu0 %v2435
      %2868 = vmatpush1.msra.mxu0 %v2434
      %2869 = vmatprep.subr.mxu0 %v2437
      %2870 = vmatpush1.msra.mxu0 %v2436
      %2871 = vmatprep.subr.mxu0 %v2439
      %2872 = vmatpush1.msra.mxu0 %v2438
      %2873 = vmatprep.subr.mxu0 %v2441
      %2874 = vmatpush1.msra.mxu0 %v2440
      %2875 = vmatprep.subr.mxu0 %v2443
      %2876 = vmatpush1.msra.mxu0 %v2442
      %2877 = vmatprep.subr.mxu0 %v2493
      %2878 = vmatpush1.msra.mxu0 %v2492
      %2879 = vmatprep.subr.mxu0 %v2495
      %2880 = vmatpush1.msra.mxu0 %v2494
      %2881 = vmatprep.subr.mxu0 %v2497
      %2882 = vmatpush1.msra.mxu0 %v2496
      %2883 = vmatprep.subr.mxu0 %v2499
      %2884 = vmatpush1.msra.mxu0 %v2498
      %2885 = vmatprep.subr.mxu0 %v2501
      %2886 = vmatpush1.msra.mxu0 %v2500
      %2887 = vmatprep.subr.mxu0 %v2503
      %2888 = vmatpush1.msra.mxu0 %v2502
      %2889 = vmatprep.subr.mxu0 %v2505
      %2890 = vmatpush1.msra.mxu0 %v2504
      %2891 = vmatprep.subr.mxu0 %v2507
      %2892 = vmatpush1.msra.mxu0 %v2506
      %2893 = vmatprep.mubr.f32.mxu0 %v2205
      %2894 = vmatmul.mubr.f32.gmra.mrb[0].mxu0 %v2204
      %v2895 = vpop.f32.mrb[0].mxu0
      %v2896 = vadd.f32 %v2767, %v2895
      %v2897 = vpop.f32.mrb[0].mxu0
      %v2898 = vadd.f32 %v2767, %v2897
      %2899 = vmatprep.mubr.f32.mxu0 %v2210
      %2900 = vmatmul.mubr.f32.gmra.mrb[0].mxu0 %v2209
      %v2901 = vpop.f32.mrb[0].mxu0
      %v2902 = vadd.f32 %v2772, %v2901
      %v2903 = vpop.f32.mrb[0].mxu0
      %v2904 = vadd.f32 %v2772, %v2903
      %2905 = vmatprep.mubr.f32.mxu0 %v2215
      %2906 = vmatmul.mubr.f32.gmra.mrb[0].mxu0 %v2214
      %v2907 = vpop.f32.mrb[0].mxu0
      %v2908 = vadd.f32 %v2777, %v2907
      %v2909 = vpop.f32.mrb[0].mxu0
      %v2910 = vadd.f32 %v2777, %v2909
      %2911 = vmatprep.mubr.f32.mxu0 %v2220
      %2912 = vmatmul.mubr.f32.gmra.mrb[0].mxu0 %v2219
      %v2913 = vpop.f32.mrb[0].mxu0
      %v2914 = vadd.f32 %v2782, %v2913
      %v2915 = vpop.f32.mrb[0].mxu0
      %v2916 = vadd.f32 %v2782, %v2915
      %2917 = vmatprep.mubr.f32.mxu0 %v2225
      %2918 = vmatmul.mubr.f32.gmra.mrb[0].mxu0 %v2224
      %v2919 = vpop.f32.mrb[0].mxu0
      %v2920 = vadd.f32 %v2787, %v2919
      %v2921 = vpop.f32.mrb[0].mxu0
      %v2922 = vadd.f32 %v2787, %v2921
      %2923 = vmatprep.mubr.f32.mxu0 %v2230
      %2924 = vmatmul.mubr.f32.gmra.mrb[0].mxu0 %v2229
      %v2925 = vpop.f32.mrb[0].mxu0
      %v2926 = vadd.f32 %v2792, %v2925
      %v2927 = vpop.f32.mrb[0].mxu0
      %v2928 = vadd.f32 %v2792, %v2927
      %2929 = vmatprep.mubr.f32.mxu0 %v2235
      %2930 = vmatmul.mubr.f32.gmra.mrb[0].mxu0 %v2234
      %v2931 = vpop.f32.mrb[0].mxu0
      %v2932 = vadd.f32 %v2797, %v2931
      %v2933 = vpop.f32.mrb[0].mxu0
      %v2934 = vadd.f32 %v2797, %v2933
      %2935 = vmatprep.mubr.f32.mxu0 %v2240
      %2936 = vmatmul.mubr.f32.gmra.mrb[0].mxu0 %v2239
      %v2937 = vpop.f32.mrb[0].mxu0
      %v2938 = vadd.f32 %v2802, %v2937
      %v2939 = vpop.f32.mrb[0].mxu0
      %v2940 = vadd.f32 %v2802, %v2939
      %2941 = vdwg.mxu0
      %2942 = vmatprep.subr.mxu0 %v1881
      %2943 = vmatpush1.msra.mxu0 %v1880
      %2944 = vmatprep.subr.mxu0 %v1927
      %2945 = vmatpush1.msra.mxu0 %v1926
      %2946 = vmatprep.subr.mxu0 %v1973
      %2947 = vmatpush1.msra.mxu0 %v1972
      %2948 = vmatprep.subr.mxu0 %v2019
      %2949 = vmatpush1.msra.mxu0 %v2018
      %2950 = vmatprep.subr.mxu0 %v2065
      %2951 = vmatpush1.msra.mxu0 %v2064
      %2952 = vmatprep.subr.mxu0 %v2111
      %2953 = vmatpush1.msra.mxu0 %v2110
      %2954 = vmatprep.subr.mxu0 %v2157
      %2955 = vmatpush1.msra.mxu0 %v2156
      %2956 = vmatprep.subr.mxu0 %v2203
      %2957 = vmatpush1.msra.mxu0 %v2202
      %2958 = vmatprep.subr.mxu0 %v2557
      %2959 = vmatpush1.msra.mxu0 %v2556
      %2960 = vmatprep.subr.mxu0 %v2559
      %2961 = vmatpush1.msra.mxu0 %v2558
      %2962 = vmatprep.subr.mxu0 %v2561
      %2963 = vmatpush1.msra.mxu0 %v2560
      %2964 = vmatprep.subr.mxu0 %v2563
      %2965 = vmatpush1.msra.mxu0 %v2562
      %2966 = vmatprep.subr.mxu0 %v2565
      %2967 = vmatpush1.msra.mxu0 %v2564
      %2968 = vmatprep.subr.mxu0 %v2567
      %2969 = vmatpush1.msra.mxu0 %v2566
      %2970 = vmatprep.subr.mxu0 %v2569
      %2971 = vmatpush1.msra.mxu0 %v2568
      %2972 = vmatprep.subr.mxu0 %v2571
      %2973 = vmatpush1.msra.mxu0 %v2570
      %2974 = vmatprep.subr.mxu0 %v2621
      %2975 = vmatpush1.msra.mxu0 %v2620
      %2976 = vmatprep.subr.mxu0 %v2623
      %2977 = vmatpush1.msra.mxu0 %v2622
      %2978 = vmatprep.subr.mxu0 %v2625
      %2979 = vmatpush1.msra.mxu0 %v2624
      %2980 = vmatprep.subr.mxu0 %v2627
      %2981 = vmatpush1.msra.mxu0 %v2626
      %2982 = vmatprep.subr.mxu0 %v2629
      %2983 = vmatpush1.msra.mxu0 %v2628
      %2984 = vmatprep.subr.mxu0 %v2631
      %2985 = vmatpush1.msra.mxu0 %v2630
      %2986 = vmatprep.subr.mxu0 %v2633
      %2987 = vmatpush1.msra.mxu0 %v2632
      %2988 = vmatprep.subr.mxu0 %v2635
      %2989 = vmatpush1.msra.mxu0 %v2634
      %2990 = vmatprep.subr.mxu0 %v2685
      %2991 = vmatpush1.msra.mxu0 %v2684
      %2992 = vmatprep.subr.mxu0 %v2687
      %2993 = vmatpush1.msra.mxu0 %v2686
      %2994 = vmatprep.subr.mxu0 %v2689
      %2995 = vmatpush1.msra.mxu0 %v2688
      %2996 = vmatprep.subr.mxu0 %v2691
      %2997 = vmatpush1.msra.mxu0 %v2690
      %2998 = vmatprep.subr.mxu0 %v2693
      %2999 = vmatpush1.msra.mxu0 %v2692
      %3000 = vmatprep.subr.mxu0 %v2695
      %3001 = vmatpush1.msra.mxu0 %v2694
      %3002 = vmatprep.subr.mxu0 %v2697
      %3003 = vmatpush1.msra.mxu0 %v2696
      %3004 = vmatprep.subr.mxu0 %v2699
      %3005 = vmatpush1.msra.mxu0 %v2698
      %3006 = vmatprep.mubr.f32.mxu0 %v2207
      %3007 = vmatmul.mubr.f32.gmra.mrb[0].mxu0 %v2206
      %v3008 = vpop.f32.mrb[0].mxu0
      %v3009 = vadd.f32 %v2896, %v3008
      %v3010 = vpop.f32.mrb[0].mxu0
      %v3011 = vadd.f32 %v2898, %v3010
      %3012 = vmatprep.mubr.f32.mxu0 %v2212
      %3013 = vmatmul.mubr.f32.gmra.mrb[0].mxu0 %v2211
      %v3014 = vpop.f32.mrb[0].mxu0
      %v3015 = vadd.f32 %v2902, %v3014
      %v3016 = vpop.f32.mrb[0].mxu0
      %v3017 = vadd.f32 %v2904, %v3016
      %3018 = vmatprep.mubr.f32.mxu0 %v2217
      %3019 = vmatmul.mubr.f32.gmra.mrb[0].mxu0 %v2216
      %v3020 = vpop.f32.mrb[0].mxu0
      %v3021 = vadd.f32 %v2908, %v3020
      %v3022 = vpop.f32.mrb[0].mxu0
      %v3023 = vadd.f32 %v2910, %v3022
      %3024 = vmatprep.mubr.f32.mxu0 %v2222
      %3025 = vmatmul.mubr.f32.gmra.mrb[0].mxu0 %v2221
      %v3026 = vpop.f32.mrb[0].mxu0
      %v3027 = vadd.f32 %v2914, %v3026
      %v3028 = vpop.f32.mrb[0].mxu0
      %v3029 = vadd.f32 %v2916, %v3028
      %3030 = vmatprep.mubr.f32.mxu0 %v2227
      %3031 = vmatmul.mubr.f32.gmra.mrb[0].mxu0 %v2226
      %v3032 = vpop.f32.mrb[0].mxu0
      %v3033 = vadd.f32 %v2920, %v3032
      %v3034 = vpop.f32.mrb[0].mxu0
      %v3035 = vadd.f32 %v2922, %v3034
      %3036 = vmatprep.mubr.f32.mxu0 %v2232
      %3037 = vmatmul.mubr.f32.gmra.mrb[0].mxu0 %v2231
      %v3038 = vpop.f32.mrb[0].mxu0
      %v3039 = vadd.f32 %v2926, %v3038
      %v3040 = vpop.f32.mrb[0].mxu0
      %v3041 = vadd.f32 %v2928, %v3040
      %3042 = vmatprep.mubr.f32.mxu0 %v2237
      %3043 = vmatmul.mubr.f32.gmra.mrb[0].mxu0 %v2236
      %v3044 = vpop.f32.mrb[0].mxu0
      %v3045 = vadd.f32 %v2932, %v3044
      %v3046 = vpop.f32.mrb[0].mxu0
      %v3047 = vadd.f32 %v2934, %v3046
      %3048 = vmatprep.mubr.f32.mxu0 %v2242
      %3049 = vmatmul.mubr.f32.gmra.mrb[0].mxu0 %v2241
      %v3050 = vpop.f32.mrb[0].mxu0
      %v3051 = vadd.f32 %v2938, %v3050
      %v3052 = vpop.f32.mrb[0].mxu0
      %v3053 = vadd.f32 %v2940, %v3052
      %3054 = vdwg.mxu0
      %3055 = vmatprep.subr.mxu0 %v2749
      %3056 = vmatpush1.msra.mxu0 %v2748
      %3057 = vmatprep.subr.mxu0 %v2751
      %3058 = vmatpush1.msra.mxu0 %v2750
      %3059 = vmatprep.subr.mxu0 %v2753
      %3060 = vmatpush1.msra.mxu0 %v2752
      %3061 = vmatprep.subr.mxu0 %v2755
      %3062 = vmatpush1.msra.mxu0 %v2754
      %3063 = vmatprep.subr.mxu0 %v2757
      %3064 = vmatpush1.msra.mxu0 %v2756
      %3065 = vmatprep.subr.mxu0 %v2759
      %3066 = vmatpush1.msra.mxu0 %v2758
      %3067 = vmatprep.subr.mxu0 %v2761
      %3068 = vmatpush1.msra.mxu0 %v2760
      %3069 = vmatprep.subr.mxu0 %v2763
      %3070 = vmatpush1.msra.mxu0 %v2762
      %3071 = vmatprep.subr.mxu0 0.0
      %3072 = vmatpush1.msra.mxu0 0.0
      %3073 = vmatprep.subr.mxu0 0.0
      %3074 = vmatpush1.msra.mxu0 0.0
      %3075 = vmatprep.subr.mxu0 0.0
      %3076 = vmatpush1.msra.mxu0 0.0
      %3077 = vmatprep.subr.mxu0 0.0
      %3078 = vmatpush1.msra.mxu0 0.0
      %3079 = vmatprep.subr.mxu0 0.0
      %3080 = vmatpush1.msra.mxu0 0.0
      %3081 = vmatprep.subr.mxu0 0.0
      %3082 = vmatpush1.msra.mxu0 0.0
      %3083 = vmatprep.subr.mxu0 0.0
      %3084 = vmatpush1.msra.mxu0 0.0
      %3085 = vmatprep.subr.mxu0 0.0
      %3086 = vmatpush1.msra.mxu0 0.0
      %3087 = vmatprep.subr.mxu0 0.0
      %3088 = vmatpush1.msra.mxu0 0.0
      %3089 = vmatprep.subr.mxu0 0.0
      %3090 = vmatpush1.msra.mxu0 0.0
      %3091 = vmatprep.subr.mxu0 0.0
      %3092 = vmatpush1.msra.mxu0 0.0
      %3093 = vmatprep.subr.mxu0 0.0
      %3094 = vmatpush1.msra.mxu0 0.0
      %3095 = vmatprep.subr.mxu0 0.0
      %3096 = vmatpush1.msra.mxu0 0.0
      %3097 = vmatprep.subr.mxu0 0.0
      %3098 = vmatpush1.msra.mxu0 0.0
      %3099 = vmatprep.subr.mxu0 0.0
      %3100 = vmatpush1.msra.mxu0 0.0
      %3101 = vmatprep.subr.mxu0 0.0
      %3102 = vmatpush1.msra.mxu0 0.0
      %3103 = vmatprep.subr.mxu0 0.0
      %3104 = vmatpush1.msra.mxu0 0.0
      %3105 = vmatprep.subr.mxu0 0.0
      %3106 = vmatpush1.msra.mxu0 0.0
      %3107 = vmatprep.subr.mxu0 0.0
      %3108 = vmatpush1.msra.mxu0 0.0
      %3109 = vmatprep.subr.mxu0 0.0
      %3110 = vmatpush1.msra.mxu0 0.0
      %3111 = vmatprep.subr.mxu0 0.0
      %3112 = vmatpush1.msra.mxu0 0.0
      %3113 = vmatprep.subr.mxu0 0.0
      %3114 = vmatpush1.msra.mxu0 0.0
      %3115 = vmatprep.subr.mxu0 0.0
      %3116 = vmatpush1.msra.mxu0 0.0
      %3117 = vmatprep.subr.mxu0 0.0
      %3118 = vmatpush1.msra.mxu0 0.0
      %3119 = vmatprep.mubr.f32.mxu0 0.0
      %3120 = vmatmul.mubr.f32.gmra.mrb[0].mxu0 %v2806
      %v3121 = vpop.f32.mrb[0].mxu0
      %v3122 = vadd.f32 %v3009, %v3121
      %v3123 = vpop.f32.mrb[0].mxu0
      %v3124 = vadd.f32 %v3011, %v3123
      %3125 = vmatprep.mubr.f32.mxu0 0.0
      %3126 = vmatmul.mubr.f32.gmra.mrb[0].mxu0 %v2809
      %v3127 = vpop.f32.mrb[0].mxu0
      %v3128 = vadd.f32 %v3015, %v3127
      %v3129 = vpop.f32.mrb[0].mxu0
      %v3130 = vadd.f32 %v3017, %v3129
      %3131 = vmatprep.mubr.f32.mxu0 0.0
      %3132 = vmatmul.mubr.f32.gmra.mrb[0].mxu0 %v2812
      %v3133 = vpop.f32.mrb[0].mxu0
      %v3134 = vadd.f32 %v3021, %v3133
      %v3135 = vpop.f32.mrb[0].mxu0
      %v3136 = vadd.f32 %v3023, %v3135
      %3137 = vmatprep.mubr.f32.mxu0 0.0
      %3138 = vmatmul.mubr.f32.gmra.mrb[0].mxu0 %v2815
      %v3139 = vpop.f32.mrb[0].mxu0
      %v3140 = vadd.f32 %v3027, %v3139
      %v3141 = vpop.f32.mrb[0].mxu0
      %v3142 = vadd.f32 %v3029, %v3141
      %3143 = vmatprep.mubr.f32.mxu0 0.0
      %3144 = vmatmul.mubr.f32.gmra.mrb[0].mxu0 %v2818
      %v3145 = vpop.f32.mrb[0].mxu0
      %v3146 = vadd.f32 %v3033, %v3145
      %v3147 = vpop.f32.mrb[0].mxu0
      %v3148 = vadd.f32 %v3035, %v3147
      %3149 = vmatprep.mubr.f32.mxu0 0.0
      %3150 = vmatmul.mubr.f32.gmra.mrb[0].mxu0 %v2821
      %v3151 = vpop.f32.mrb[0].mxu0
      %v3152 = vadd.f32 %v3039, %v3151
      %v3153 = vpop.f32.mrb[0].mxu0
      %v3154 = vadd.f32 %v3041, %v3153
      %3155 = vmatprep.mubr.f32.mxu0 0.0
      %3156 = vmatmul.mubr.f32.gmra.mrb[0].mxu0 %v2824
      %v3157 = vpop.f32.mrb[0].mxu0
      %v3158 = vadd.f32 %v3045, %v3157
      %v3159 = vpop.f32.mrb[0].mxu0
      %v3160 = vadd.f32 %v3047, %v3159
      %3161 = vmatprep.mubr.f32.mxu0 0.0
      %3162 = vmatmul.mubr.f32.gmra.mrb[0].mxu0 %v2827
      %v3163 = vpop.f32.mrb[0].mxu0
      %v3164 = vadd.f32 %v3051, %v3163
      %v3165 = vpop.f32.mrb[0].mxu0
      %v3166 = vadd.f32 %v3053, %v3165
      %3167 = vdwg.mxu0
      %v3168 = vmax.f32 %v3122, 0.0
      %v3169 = vmax.f32 %v3124, 0.0
      %v3170 = vmax.f32 %v3128, 0.0
      %v3171 = vmax.f32 %v3130, 0.0
      %v3172 = vmax.f32 %v3134, 0.0
      %v3173 = vmax.f32 %v3136, 0.0
      %v3174 = vmax.f32 %v3140, 0.0
      %v3175 = vmax.f32 %v3142, 0.0
      %v3176 = vmax.f32 %v3146, 0.0
      %v3177 = vmax.f32 %v3148, 0.0
      %v3178 = vmax.f32 %v3152, 0.0
      %v3179 = vmax.f32 %v3154, 0.0
      %v3180 = vmax.f32 %v3158, 0.0
      %v3181 = vmax.f32 %v3160, 0.0
      %v3182 = vmax.f32 %v3164, 0.0
      %v3183 = vmax.f32 %v3166, 0.0
      %v3184 = vld [vmem:[%s9] sm:$0xff]
      %v3185 = vld [vmem:[%s9 + $0x8] sm:$0xff]
      %v3186 = vld [vmem:[%s9 + $0x10] sm:$0xff]
      %v3187 = vld [vmem:[%s9 + $0x18] sm:$0xff]
      %v3188 = vld [vmem:[%s9 + $0x20] sm:$0xff]
      %v3189 = vld [vmem:[%s9 + $0x28] sm:$0xff]
      %v3190 = vld [vmem:[%s9 + $0x30] sm:$0xff]
      %v3191 = vld [vmem:[%s9 + $0x38] sm:$0xff]
      %v3192 = vld [vmem:[%s10] sm:$0xff]
      %v3193 = vld [vmem:[%s10 + $0x8] sm:$0xff]
      %v3194 = vld [vmem:[%s10 + $0x10] sm:$0xff]
      %v3195 = vld [vmem:[%s10 + $0x18] sm:$0xff]
      %v3196 = vld [vmem:[%s10 + $0x20] sm:$0xff]
      %v3197 = vld [vmem:[%s10 + $0x28] sm:$0xff]
      %v3198 = vld [vmem:[%s10 + $0x30] sm:$0xff]
      %v3199 = vld [vmem:[%s10 + $0x38] sm:$0xff]
      %v3200 = vadd.f32 %v3168, %v3169
      %3201 = vadd.xlane.f32.xlu0 %v3200
      %v3202 = vpop.xlane.xlu0 %3201
      %v3203 = vadd.f32 %v3170, %v3171
      %3204 = vadd.xlane.f32.xlu0 %v3203
      %v3205 = vpop.xlane.xlu0 %3204
      %v3206 = vadd.f32 %v3172, %v3173
      %3207 = vadd.xlane.f32.xlu0 %v3206
      %v3208 = vpop.xlane.xlu0 %3207
      %v3209 = vadd.f32 %v3174, %v3175
      %3210 = vadd.xlane.f32.xlu0 %v3209
      %v3211 = vpop.xlane.xlu0 %3210
      %v3212 = vadd.f32 %v3176, %v3177
      %3213 = vadd.xlane.f32.xlu0 %v3212
      %v3214 = vpop.xlane.xlu0 %3213
      %v3215 = vadd.f32 %v3178, %v3179
      %3216 = vadd.xlane.f32.xlu0 %v3215
      %v3217 = vpop.xlane.xlu0 %3216
      %v3218 = vadd.f32 %v3180, %v3181
      %3219 = vadd.xlane.f32.xlu0 %v3218
      %v3220 = vpop.xlane.xlu0 %3219
      %v3221 = vadd.f32 %v3182, %v3183
      %3222 = vadd.xlane.f32.xlu0 %v3221
      %v3223 = vpop.xlane.xlu0 %3222
      %v3224 = vmul.f32 %v3168, %v3168
      %v3225 = vmul.f32 %v3169, %v3169
      %v3226 = vmul.f32 %v3170, %v3170
      %v3227 = vmul.f32 %v3171, %v3171
      %v3228 = vmul.f32 %v3172, %v3172
      %v3229 = vmul.f32 %v3173, %v3173
      %v3230 = vmul.f32 %v3174, %v3174
      %v3231 = vmul.f32 %v3175, %v3175
      %v3232 = vmul.f32 %v3176, %v3176
      %v3233 = vmul.f32 %v3177, %v3177
      %v3234 = vmul.f32 %v3178, %v3178
      %v3235 = vmul.f32 %v3179, %v3179
      %v3236 = vmul.f32 %v3180, %v3180
      %v3237 = vmul.f32 %v3181, %v3181
      %v3238 = vmul.f32 %v3182, %v3182
      %v3239 = vmul.f32 %v3183, %v3183
      %v3240 = vadd.f32 %v3224, %v3225
      %3241 = vadd.xlane.f32.xlu0 %v3240
      %v3242 = vpop.xlane.xlu0 %3241
      %v3243 = vadd.f32 %v3226, %v3227
      %3244 = vadd.xlane.f32.xlu0 %v3243
      %v3245 = vpop.xlane.xlu0 %3244
      %v3246 = vadd.f32 %v3228, %v3229
      %3247 = vadd.xlane.f32.xlu0 %v3246
      %v3248 = vpop.xlane.xlu0 %3247
      %v3249 = vadd.f32 %v3230, %v3231
      %3250 = vadd.xlane.f32.xlu0 %v3249
      %v3251 = vpop.xlane.xlu0 %3250
      %v3252 = vadd.f32 %v3232, %v3233
      %3253 = vadd.xlane.f32.xlu0 %v3252
      %v3254 = vpop.xlane.xlu0 %3253
      %v3255 = vadd.f32 %v3234, %v3235
      %3256 = vadd.xlane.f32.xlu0 %v3255
      %v3257 = vpop.xlane.xlu0 %3256
      %v3258 = vadd.f32 %v3236, %v3237
      %3259 = vadd.xlane.f32.xlu0 %v3258
      %v3260 = vpop.xlane.xlu0 %3259
      %v3261 = vadd.f32 %v3238, %v3239
      %3262 = vadd.xlane.f32.xlu0 %v3261
      %v3263 = vpop.xlane.xlu0 %3262
      %v3264 = vsel %vm1835, %v3202, 0.0
      %3265 = vadd.xlane.f32.xlu0 %v3264
      %v3266 = vpop.xlane.xlu0 %3265
      %v3267 = vrot.slane %v3266, 4
      %v3268 = vadd.f32 %v3266, %v3267
      %v3269 = vrot.slane %v3268, 2
      %v3270 = vadd.f32 %v3268, %v3269
      %v3271 = vrot.slane %v3270, 1
      %v3272 = vadd.f32 %v3270, %v3271
      %s3273 = vtos %v3272
      %v3274 = vstv %s3273
      %v3275 = vmul.f32 %v3274, 0.00048828125
      %v3276 = vsel %vm1835, %v3242, 0.0
      %3277 = vadd.xlane.f32.xlu0 %v3276
      %v3278 = vpop.xlane.xlu0 %3277
      %v3279 = vrot.slane %v3278, 4
      %v3280 = vadd.f32 %v3278, %v3279
      %v3281 = vrot.slane %v3280, 2
      %v3282 = vadd.f32 %v3280, %v3281
      %v3283 = vrot.slane %v3282, 1
      %v3284 = vadd.f32 %v3282, %v3283
      %s3285 = vtos %v3284
      %v3286 = vstv %s3285
      %v3287 = vmul.f32 %v3286, 0.00048828125
      %v3288 = vmul.f32 %v3275, %v3275
      %v3289 = vsub.f32 %v3287, %v3288
      %v3290 = vadd.f32 %v3289, 1e-05
      %v3291 = vrsqrt.pop %v3290
      %v3292 = vsub.f32 %v3168, %v3275
      %v3293 = vsub.f32 %v3169, %v3275
      %v3294 = vmul.f32 %v3292, %v3291
      %v3295 = vmul.f32 %v3293, %v3291
      %3297 = vset.pattern.permute.xlu0 0
      %3298 = vperm.xlu0 %3297, %v3184
      %v3299 = vpop.permute.xlu0 %3298
      %v3301 = vmul.f32 %v3294, %v3299
      %v3302 = vmul.f32 %v3295, %v3299
      %3304 = vset.pattern.permute.xlu0 0
      %3305 = vperm.xlu0 %3304, %v3192
      %v3306 = vpop.permute.xlu0 %3305
      %v3308 = vadd.f32 %v3301, %v3306
      %v3309 = vadd.f32 %v3302, %v3306
      %v3310 = vsel %vm1835, %v3205, 0.0
      %3311 = vadd.xlane.f32.xlu0 %v3310
      %v3312 = vpop.xlane.xlu0 %3311
      %v3313 = vrot.slane %v3312, 4
      %v3314 = vadd.f32 %v3312, %v3313
      %v3315 = vrot.slane %v3314, 2
      %v3316 = vadd.f32 %v3314, %v3315
      %v3317 = vrot.slane %v3316, 1
      %v3318 = vadd.f32 %v3316, %v3317
      %s3319 = vtos %v3318
      %v3320 = vstv %s3319
      %v3321 = vmul.f32 %v3320, 0.00048828125
      %v3322 = vsel %vm1835, %v3245, 0.0
      %3323 = vadd.xlane.f32.xlu0 %v3322
      %v3324 = vpop.xlane.xlu0 %3323
      %v3325 = vrot.slane %v3324, 4
      %v3326 = vadd.f32 %v3324, %v3325
      %v3327 = vrot.slane %v3326, 2
      %v3328 = vadd.f32 %v3326, %v3327
      %v3329 = vrot.slane %v3328, 1
      %v3330 = vadd.f32 %v3328, %v3329
      %s3331 = vtos %v3330
      %v3332 = vstv %s3331
      %v3333 = vmul.f32 %v3332, 0.00048828125
      %v3334 = vmul.f32 %v3321, %v3321
      %v3335 = vsub.f32 %v3333, %v3334
      %v3336 = vadd.f32 %v3335, 1e-05
      %v3337 = vrsqrt.pop %v3336
      %v3338 = vsub.f32 %v3170, %v3321
      %v3339 = vsub.f32 %v3171, %v3321
      %v3340 = vmul.f32 %v3338, %v3337
      %v3341 = vmul.f32 %v3339, %v3337
      %3343 = vset.pattern.permute.xlu0 0
      %3344 = vperm.xlu0 %3343, %v3185
      %v3345 = vpop.permute.xlu0 %3344
      %v3347 = vmul.f32 %v3340, %v3345
      %v3348 = vmul.f32 %v3341, %v3345
      %3350 = vset.pattern.permute.xlu0 0
      %3351 = vperm.xlu0 %3350, %v3193
      %v3352 = vpop.permute.xlu0 %3351
      %v3354 = vadd.f32 %v3347, %v3352
      %v3355 = vadd.f32 %v3348, %v3352
      %v3356 = vsel %vm1835, %v3208, 0.0
      %3357 = vadd.xlane.f32.xlu0 %v3356
      %v3358 = vpop.xlane.xlu0 %3357
      %v3359 = vrot.slane %v3358, 4
      %v3360 = vadd.f32 %v3358, %v3359
      %v3361 = vrot.slane %v3360, 2
      %v3362 = vadd.f32 %v3360, %v3361
      %v3363 = vrot.slane %v3362, 1
      %v3364 = vadd.f32 %v3362, %v3363
      %s3365 = vtos %v3364
      %v3366 = vstv %s3365
      %v3367 = vmul.f32 %v3366, 0.00048828125
      %v3368 = vsel %vm1835, %v3248, 0.0
      %3369 = vadd.xlane.f32.xlu0 %v3368
      %v3370 = vpop.xlane.xlu0 %3369
      %v3371 = vrot.slane %v3370, 4
      %v3372 = vadd.f32 %v3370, %v3371
      %v3373 = vrot.slane %v3372, 2
      %v3374 = vadd.f32 %v3372, %v3373
      %v3375 = vrot.slane %v3374, 1
      %v3376 = vadd.f32 %v3374, %v3375
      %s3377 = vtos %v3376
      %v3378 = vstv %s3377
      %v3379 = vmul.f32 %v3378, 0.00048828125
      %v3380 = vmul.f32 %v3367, %v3367
      %v3381 = vsub.f32 %v3379, %v3380
      %v3382 = vadd.f32 %v3381, 1e-05
      %v3383 = vrsqrt.pop %v3382
      %v3384 = vsub.f32 %v3172, %v3367
      %v3385 = vsub.f32 %v3173, %v3367
      %v3386 = vmul.f32 %v3384, %v3383
      %v3387 = vmul.f32 %v3385, %v3383
      %3389 = vset.pattern.permute.xlu0 0
      %3390 = vperm.xlu0 %3389, %v3186
      %v3391 = vpop.permute.xlu0 %3390
      %v3393 = vmul.f32 %v3386, %v3391
      %v3394 = vmul.f32 %v3387, %v3391
      %3396 = vset.pattern.permute.xlu0 0
      %3397 = vperm.xlu0 %3396, %v3194
      %v3398 = vpop.permute.xlu0 %3397
      %v3400 = vadd.f32 %v3393, %v3398
      %v3401 = vadd.f32 %v3394, %v3398
      %v3402 = vsel %vm1835, %v3211, 0.0
      %3403 = vadd.xlane.f32.xlu0 %v3402
      %v3404 = vpop.xlane.xlu0 %3403
      %v3405 = vrot.slane %v3404, 4
      %v3406 = vadd.f32 %v3404, %v3405
      %v3407 = vrot.slane %v3406, 2
      %v3408 = vadd.f32 %v3406, %v3407
      %v3409 = vrot.slane %v3408, 1
      %v3410 = vadd.f32 %v3408, %v3409
      %s3411 = vtos %v3410
      %v3412 = vstv %s3411
      %v3413 = vmul.f32 %v3412, 0.00048828125
      %v3414 = vsel %vm1835, %v3251, 0.0
      %3415 = vadd.xlane.f32.xlu0 %v3414
      %v3416 = vpop.xlane.xlu0 %3415
      %v3417 = vrot.slane %v3416, 4
      %v3418 = vadd.f32 %v3416, %v3417
      %v3419 = vrot.slane %v3418, 2
      %v3420 = vadd.f32 %v3418, %v3419
      %v3421 = vrot.slane %v3420, 1
      %v3422 = vadd.f32 %v3420, %v3421
      %s3423 = vtos %v3422
      %v3424 = vstv %s3423
      %v3425 = vmul.f32 %v3424, 0.00048828125
      %v3426 = vmul.f32 %v3413, %v3413
      %v3427 = vsub.f32 %v3425, %v3426
      %v3428 = vadd.f32 %v3427, 1e-05
      %v3429 = vrsqrt.pop %v3428
      %v3430 = vsub.f32 %v3174, %v3413
      %v3431 = vsub.f32 %v3175, %v3413
      %v3432 = vmul.f32 %v3430, %v3429
      %v3433 = vmul.f32 %v3431, %v3429
      %3435 = vset.pattern.permute.xlu0 0
      %3436 = vperm.xlu0 %3435, %v3187
      %v3437 = vpop.permute.xlu0 %3436
      %v3439 = vmul.f32 %v3432, %v3437
      %v3440 = vmul.f32 %v3433, %v3437
      %3442 = vset.pattern.permute.xlu0 0
      %3443 = vperm.xlu0 %3442, %v3195
      %v3444 = vpop.permute.xlu0 %3443
      %v3446 = vadd.f32 %v3439, %v3444
      %v3447 = vadd.f32 %v3440, %v3444
      %v3448 = vsel %vm1835, %v3214, 0.0
      %3449 = vadd.xlane.f32.xlu0 %v3448
      %v3450 = vpop.xlane.xlu0 %3449
      %v3451 = vrot.slane %v3450, 4
      %v3452 = vadd.f32 %v3450, %v3451
      %v3453 = vrot.slane %v3452, 2
      %v3454 = vadd.f32 %v3452, %v3453
      %v3455 = vrot.slane %v3454, 1
      %v3456 = vadd.f32 %v3454, %v3455
      %s3457 = vtos %v3456
      %v3458 = vstv %s3457
      %v3459 = vmul.f32 %v3458, 0.00048828125
      %v3460 = vsel %vm1835, %v3254, 0.0
      %3461 = vadd.xlane.f32.xlu0 %v3460
      %v3462 = vpop.xlane.xlu0 %3461
      %v3463 = vrot.slane %v3462, 4
      %v3464 = vadd.f32 %v3462, %v3463
      %v3465 = vrot.slane %v3464, 2
      %v3466 = vadd.f32 %v3464, %v3465
      %v3467 = vrot.slane %v3466, 1
      %v3468 = vadd.f32 %v3466, %v3467
      %s3469 = vtos %v3468
      %v3470 = vstv %s3469
      %v3471 = vmul.f32 %v3470, 0.00048828125
      %v3472 = vmul.f32 %v3459, %v3459
      %v3473 = vsub.f32 %v3471, %v3472
      %v3474 = vadd.f32 %v3473, 1e-05
      %v3475 = vrsqrt.pop %v3474
      %v3476 = vsub.f32 %v3176, %v3459
      %v3477 = vsub.f32 %v3177, %v3459
      %v3478 = vmul.f32 %v3476, %v3475
      %v3479 = vmul.f32 %v3477, %v3475
      %3481 = vset.pattern.permute.xlu0 0
      %3482 = vperm.xlu0 %3481, %v3188
      %v3483 = vpop.permute.xlu0 %3482
      %v3485 = vmul.f32 %v3478, %v3483
      %v3486 = vmul.f32 %v3479, %v3483
      %3488 = vset.pattern.permute.xlu0 0
      %3489 = vperm.xlu0 %3488, %v3196
      %v3490 = vpop.permute.xlu0 %3489
      %v3492 = vadd.f32 %v3485, %v3490
      %v3493 = vadd.f32 %v3486, %v3490
      %v3494 = vsel %vm1835, %v3217, 0.0
      %3495 = vadd.xlane.f32.xlu0 %v3494
      %v3496 = vpop.xlane.xlu0 %3495
      %v3497 = vrot.slane %v3496, 4
      %v3498 = vadd.f32 %v3496, %v3497
      %v3499 = vrot.slane %v3498, 2
      %v3500 = vadd.f32 %v3498, %v3499
      %v3501 = vrot.slane %v3500, 1
      %v3502 = vadd.f32 %v3500, %v3501
      %s3503 = vtos %v3502
      %v3504 = vstv %s3503
      %v3505 = vmul.f32 %v3504, 0.00048828125
      %v3506 = vsel %vm1835, %v3257, 0.0
      %3507 = vadd.xlane.f32.xlu0 %v3506
      %v3508 = vpop.xlane.xlu0 %3507
      %v3509 = vrot.slane %v3508, 4
      %v3510 = vadd.f32 %v3508, %v3509
      %v3511 = vrot.slane %v3510, 2
      %v3512 = vadd.f32 %v3510, %v3511
      %v3513 = vrot.slane %v3512, 1
      %v3514 = vadd.f32 %v3512, %v3513
      %s3515 = vtos %v3514
      %v3516 = vstv %s3515
      %v3517 = vmul.f32 %v3516, 0.00048828125
      %v3518 = vmul.f32 %v3505, %v3505
      %v3519 = vsub.f32 %v3517, %v3518
      %v3520 = vadd.f32 %v3519, 1e-05
      %v3521 = vrsqrt.pop %v3520
      %v3522 = vsub.f32 %v3178, %v3505
      %v3523 = vsub.f32 %v3179, %v3505
      %v3524 = vmul.f32 %v3522, %v3521
      %v3525 = vmul.f32 %v3523, %v3521
      %3527 = vset.pattern.permute.xlu0 0
      %3528 = vperm.xlu0 %3527, %v3189
      %v3529 = vpop.permute.xlu0 %3528
      %v3531 = vmul.f32 %v3524, %v3529
      %v3532 = vmul.f32 %v3525, %v3529
      %3534 = vset.pattern.permute.xlu0 0
      %3535 = vperm.xlu0 %3534, %v3197
      %v3536 = vpop.permute.xlu0 %3535
      %v3538 = vadd.f32 %v3531, %v3536
      %v3539 = vadd.f32 %v3532, %v3536
      %v3540 = vsel %vm1835, %v3220, 0.0
      %3541 = vadd.xlane.f32.xlu0 %v3540
      %v3542 = vpop.xlane.xlu0 %3541
      %v3543 = vrot.slane %v3542, 4
      %v3544 = vadd.f32 %v3542, %v3543
      %v3545 = vrot.slane %v3544, 2
      %v3546 = vadd.f32 %v3544, %v3545
      %v3547 = vrot.slane %v3546, 1
      %v3548 = vadd.f32 %v3546, %v3547
      %s3549 = vtos %v3548
      %v3550 = vstv %s3549
      %v3551 = vmul.f32 %v3550, 0.00048828125
      %v3552 = vsel %vm1835, %v3260, 0.0
      %3553 = vadd.xlane.f32.xlu0 %v3552
      %v3554 = vpop.xlane.xlu0 %3553
      %v3555 = vrot.slane %v3554, 4
      %v3556 = vadd.f32 %v3554, %v3555
      %v3557 = vrot.slane %v3556, 2
      %v3558 = vadd.f32 %v3556, %v3557
      %v3559 = vrot.slane %v3558, 1
      %v3560 = vadd.f32 %v3558, %v3559
      %s3561 = vtos %v3560
      %v3562 = vstv %s3561
      %v3563 = vmul.f32 %v3562, 0.00048828125
      %v3564 = vmul.f32 %v3551, %v3551
      %v3565 = vsub.f32 %v3563, %v3564
      %v3566 = vadd.f32 %v3565, 1e-05
      %v3567 = vrsqrt.pop %v3566
      %v3568 = vsub.f32 %v3180, %v3551
      %v3569 = vsub.f32 %v3181, %v3551
      %v3570 = vmul.f32 %v3568, %v3567
      %v3571 = vmul.f32 %v3569, %v3567
      %3573 = vset.pattern.permute.xlu0 0
      %3574 = vperm.xlu0 %3573, %v3190
      %v3575 = vpop.permute.xlu0 %3574
      %v3577 = vmul.f32 %v3570, %v3575
      %v3578 = vmul.f32 %v3571, %v3575
      %3580 = vset.pattern.permute.xlu0 0
      %3581 = vperm.xlu0 %3580, %v3198
      %v3582 = vpop.permute.xlu0 %3581
      %v3584 = vadd.f32 %v3577, %v3582
      %v3585 = vadd.f32 %v3578, %v3582
      %v3586 = vsel %vm1835, %v3223, 0.0
      %3587 = vadd.xlane.f32.xlu0 %v3586
      %v3588 = vpop.xlane.xlu0 %3587
      %v3589 = vrot.slane %v3588, 4
      %v3590 = vadd.f32 %v3588, %v3589
      %v3591 = vrot.slane %v3590, 2
      %v3592 = vadd.f32 %v3590, %v3591
      %v3593 = vrot.slane %v3592, 1
      %v3594 = vadd.f32 %v3592, %v3593
      %s3595 = vtos %v3594
      %v3596 = vstv %s3595
      %v3597 = vmul.f32 %v3596, 0.00048828125
      %v3598 = vsel %vm1835, %v3263, 0.0
      %3599 = vadd.xlane.f32.xlu0 %v3598
      %v3600 = vpop.xlane.xlu0 %3599
      %v3601 = vrot.slane %v3600, 4
      %v3602 = vadd.f32 %v3600, %v3601
      %v3603 = vrot.slane %v3602, 2
      %v3604 = vadd.f32 %v3602, %v3603
      %v3605 = vrot.slane %v3604, 1
      %v3606 = vadd.f32 %v3604, %v3605
      %s3607 = vtos %v3606
      %v3608 = vstv %s3607
      %v3609 = vmul.f32 %v3608, 0.00048828125
      %v3610 = vmul.f32 %v3597, %v3597
      %v3611 = vsub.f32 %v3609, %v3610
      %v3612 = vadd.f32 %v3611, 1e-05
      %v3613 = vrsqrt.pop %v3612
      %v3614 = vsub.f32 %v3182, %v3597
      %v3615 = vsub.f32 %v3183, %v3597
      %v3616 = vmul.f32 %v3614, %v3613
      %v3617 = vmul.f32 %v3615, %v3613
      %3619 = vset.pattern.permute.xlu0 0
      %3620 = vperm.xlu0 %3619, %v3191
      %v3621 = vpop.permute.xlu0 %3620
      %v3623 = vmul.f32 %v3616, %v3621
      %v3624 = vmul.f32 %v3617, %v3621
      %3626 = vset.pattern.permute.xlu0 0
      %3627 = vperm.xlu0 %3626, %v3199
      %v3628 = vpop.permute.xlu0 %3627
      %v3630 = vadd.f32 %v3623, %v3628
      %v3631 = vadd.f32 %v3624, %v3628
      %v3632 = vld [vmem:[%s11] sm:$0x77]
      %v3633 = vld [vmem:[%s11 + $0x8] sm:$0x77]
      %v3634 = vld [vmem:[%s11 + $0x10] sm:$0x7]
      %v3635 = vld [vmem:[%s12] sm:$0x7]
      %3636 = vrot.lane.b32.xlu0 %v3308, 17
      %v3637 = vpop.permute.xlu0 %3636
      %3638 = vrot.lane.b32.xlu0 %v3354, 17
      %v3639 = vpop.permute.xlu0 %3638
      %3640 = vrot.lane.b32.xlu0 %v3400, 17
      %v3641 = vpop.permute.xlu0 %3640
      %3642 = vrot.lane.b32.xlu0 %v3446, 17
      %v3643 = vpop.permute.xlu0 %3642
      %3644 = vrot.lane.b32.xlu0 %v3492, 17
      %v3645 = vpop.permute.xlu0 %3644
      %3646 = vrot.lane.b32.xlu0 %v3538, 17
      %v3647 = vpop.permute.xlu0 %3646
      %3648 = vrot.lane.b32.xlu0 %v3584, 17
      %v3649 = vpop.permute.xlu0 %3648
      %3650 = vrot.lane.b32.xlu0 %v3630, 17
      %v3651 = vpop.permute.xlu0 %3650
      %3652 = vrot.lane.b32.xlu0 %v3309, 17
      %v3653 = vpop.permute.xlu0 %3652
      %3654 = vrot.lane.b32.xlu0 %v3355, 17
      %v3655 = vpop.permute.xlu0 %3654
      %3656 = vrot.lane.b32.xlu0 %v3401, 17
      %v3657 = vpop.permute.xlu0 %3656
      %3658 = vrot.lane.b32.xlu0 %v3447, 17
      %v3659 = vpop.permute.xlu0 %3658
      %3660 = vrot.lane.b32.xlu0 %v3493, 17
      %v3661 = vpop.permute.xlu0 %3660
      %3662 = vrot.lane.b32.xlu0 %v3539, 17
      %v3663 = vpop.permute.xlu0 %3662
      %3664 = vrot.lane.b32.xlu0 %v3585, 17
      %v3665 = vpop.permute.xlu0 %3664
      %3666 = vrot.lane.b32.xlu0 %v3631, 17
      %v3667 = vpop.permute.xlu0 %3666
      %v3668 = vsel %vm1362, %v3637, %v3653
      %v3669 = vsel %vm1362, %v3639, %v3655
      %v3670 = vsel %vm1362, %v3641, %v3657
      %v3671 = vsel %vm1362, %v3643, %v3659
      %v3672 = vsel %vm1362, %v3645, %v3661
      %v3673 = vsel %vm1362, %v3647, %v3663
      %v3674 = vsel %vm1362, %v3649, %v3665
      %v3675 = vsel %vm1362, %v3651, %v3667
      %v3676 = vsel %vm1362, %v3653, %v3637
      %v3677 = vsel %vm1362, %v3655, %v3639
      %v3678 = vsel %vm1362, %v3657, %v3641
      %v3679 = vsel %vm1362, %v3659, %v3643
      %v3680 = vsel %vm1362, %v3661, %v3645
      %v3681 = vsel %vm1362, %v3663, %v3647
      %v3682 = vsel %vm1362, %v3665, %v3649
      %v3683 = vsel %vm1362, %v3667, %v3651
      %v3684 = vmul.f32 %v3676, %v1368
      %v3685 = vmul.f32 %v3668, %v1372
      %v3686 = vmul.f32 %v3677, %v1368
      %v3687 = vmul.f32 %v3669, %v1372
      %v3688 = vmul.f32 %v3678, %v1368
      %v3689 = vmul.f32 %v3670, %v1372
      %v3690 = vmul.f32 %v3679, %v1368
      %v3691 = vmul.f32 %v3671, %v1372
      %v3692 = vmul.f32 %v3680, %v1368
      %v3693 = vmul.f32 %v3672, %v1372
      %v3694 = vmul.f32 %v3681, %v1368
      %v3695 = vmul.f32 %v3673, %v1372
      %v3696 = vmul.f32 %v3682, %v1368
      %v3697 = vmul.f32 %v3674, %v1372
      %v3698 = vmul.f32 %v3683, %v1368
      %v3699 = vmul.f32 %v3675, %v1372
      %3700 = vrot.lane.b32.xlu0 %v3308, 16
      %v3701 = vpop.permute.xlu0 %3700
      %3702 = vrot.lane.b32.xlu0 %v3354, 16
      %v3703 = vpop.permute.xlu0 %3702
      %3704 = vrot.lane.b32.xlu0 %v3400, 16
      %v3705 = vpop.permute.xlu0 %3704
      %3706 = vrot.lane.b32.xlu0 %v3446, 16
      %v3707 = vpop.permute.xlu0 %3706
      %3708 = vrot.lane.b32.xlu0 %v3492, 16
      %v3709 = vpop.permute.xlu0 %3708
      %3710 = vrot.lane.b32.xlu0 %v3538, 16
      %v3711 = vpop.permute.xlu0 %3710
      %3712 = vrot.lane.b32.xlu0 %v3584, 16
      %v3713 = vpop.permute.xlu0 %3712
      %3714 = vrot.lane.b32.xlu0 %v3630, 16
      %v3715 = vpop.permute.xlu0 %3714
      %3716 = vrot.lane.b32.xlu0 %v3309, 16
      %v3717 = vpop.permute.xlu0 %3716
      %3718 = vrot.lane.b32.xlu0 %v3355, 16
      %v3719 = vpop.permute.xlu0 %3718
      %3720 = vrot.lane.b32.xlu0 %v3401, 16
      %v3721 = vpop.permute.xlu0 %3720
      %3722 = vrot.lane.b32.xlu0 %v3447, 16
      %v3723 = vpop.permute.xlu0 %3722
      %3724 = vrot.lane.b32.xlu0 %v3493, 16
      %v3725 = vpop.permute.xlu0 %3724
      %3726 = vrot.lane.b32.xlu0 %v3539, 16
      %v3727 = vpop.permute.xlu0 %3726
      %3728 = vrot.lane.b32.xlu0 %v3585, 16
      %v3729 = vpop.permute.xlu0 %3728
      %3730 = vrot.lane.b32.xlu0 %v3631, 16
      %v3731 = vpop.permute.xlu0 %3730
      %v3732 = vsel %vm1379, %v3701, %v3717
      %v3733 = vsel %vm1379, %v3703, %v3719
      %v3734 = vsel %vm1379, %v3705, %v3721
      %v3735 = vsel %vm1379, %v3707, %v3723
      %v3736 = vsel %vm1379, %v3709, %v3725
      %v3737 = vsel %vm1379, %v3711, %v3727
      %v3738 = vsel %vm1379, %v3713, %v3729
      %v3739 = vsel %vm1379, %v3715, %v3731
      %v3740 = vsel %vm1379, %v3717, %v3701
      %v3741 = vsel %vm1379, %v3719, %v3703
      %v3742 = vsel %vm1379, %v3721, %v3705
      %v3743 = vsel %vm1379, %v3723, %v3707
      %v3744 = vsel %vm1379, %v3725, %v3709
      %v3745 = vsel %vm1379, %v3727, %v3711
      %v3746 = vsel %vm1379, %v3729, %v3713
      %v3747 = vsel %vm1379, %v3731, %v3715
      %v3748 = vmul.f32 %v3740, %v1385
      %v3749 = vmul.f32 %v3732, %v1389
      %v3750 = vmul.f32 %v3741, %v1385
      %v3751 = vmul.f32 %v3733, %v1389
      %v3752 = vmul.f32 %v3742, %v1385
      %v3753 = vmul.f32 %v3734, %v1389
      %v3754 = vmul.f32 %v3743, %v1385
      %v3755 = vmul.f32 %v3735, %v1389
      %v3756 = vmul.f32 %v3744, %v1385
      %v3757 = vmul.f32 %v3736, %v1389
      %v3758 = vmul.f32 %v3745, %v1385
      %v3759 = vmul.f32 %v3737, %v1389
      %v3760 = vmul.f32 %v3746, %v1385
      %v3761 = vmul.f32 %v3738, %v1389
      %v3762 = vmul.f32 %v3747, %v1385
      %v3763 = vmul.f32 %v3739, %v1389
      %3764 = vrot.lane.b32.xlu0 %v3308, 15
      %v3765 = vpop.permute.xlu0 %3764
      %3766 = vrot.lane.b32.xlu0 %v3354, 15
      %v3767 = vpop.permute.xlu0 %3766
      %3768 = vrot.lane.b32.xlu0 %v3400, 15
      %v3769 = vpop.permute.xlu0 %3768
      %3770 = vrot.lane.b32.xlu0 %v3446, 15
      %v3771 = vpop.permute.xlu0 %3770
      %3772 = vrot.lane.b32.xlu0 %v3492, 15
      %v3773 = vpop.permute.xlu0 %3772
      %3774 = vrot.lane.b32.xlu0 %v3538, 15
      %v3775 = vpop.permute.xlu0 %3774
      %3776 = vrot.lane.b32.xlu0 %v3584, 15
      %v3777 = vpop.permute.xlu0 %3776
      %3778 = vrot.lane.b32.xlu0 %v3630, 15
      %v3779 = vpop.permute.xlu0 %3778
      %3780 = vrot.lane.b32.xlu0 %v3309, 15
      %v3781 = vpop.permute.xlu0 %3780
      %3782 = vrot.lane.b32.xlu0 %v3355, 15
      %v3783 = vpop.permute.xlu0 %3782
      %3784 = vrot.lane.b32.xlu0 %v3401, 15
      %v3785 = vpop.permute.xlu0 %3784
      %3786 = vrot.lane.b32.xlu0 %v3447, 15
      %v3787 = vpop.permute.xlu0 %3786
      %3788 = vrot.lane.b32.xlu0 %v3493, 15
      %v3789 = vpop.permute.xlu0 %3788
      %3790 = vrot.lane.b32.xlu0 %v3539, 15
      %v3791 = vpop.permute.xlu0 %3790
      %3792 = vrot.lane.b32.xlu0 %v3585, 15
      %v3793 = vpop.permute.xlu0 %3792
      %3794 = vrot.lane.b32.xlu0 %v3631, 15
      %v3795 = vpop.permute.xlu0 %3794
      %v3796 = vsel %vm1396, %v3765, %v3781
      %v3797 = vsel %vm1396, %v3767, %v3783
      %v3798 = vsel %vm1396, %v3769, %v3785
      %v3799 = vsel %vm1396, %v3771, %v3787
      %v3800 = vsel %vm1396, %v3773, %v3789
      %v3801 = vsel %vm1396, %v3775, %v3791
      %v3802 = vsel %vm1396, %v3777, %v3793
      %v3803 = vsel %vm1396, %v3779, %v3795
      %v3804 = vsel %vm1396, %v3781, %v3765
      %v3805 = vsel %vm1396, %v3783, %v3767
      %v3806 = vsel %vm1396, %v3785, %v3769
      %v3807 = vsel %vm1396, %v3787, %v3771
      %v3808 = vsel %vm1396, %v3789, %v3773
      %v3809 = vsel %vm1396, %v3791, %v3775
      %v3810 = vsel %vm1396, %v3793, %v3777
      %v3811 = vsel %vm1396, %v3795, %v3779
      %v3812 = vmul.f32 %v3804, %v1402
      %v3813 = vmul.f32 %v3796, %v1406
      %v3814 = vmul.f32 %v3805, %v1402
      %v3815 = vmul.f32 %v3797, %v1406
      %v3816 = vmul.f32 %v3806, %v1402
      %v3817 = vmul.f32 %v3798, %v1406
      %v3818 = vmul.f32 %v3807, %v1402
      %v3819 = vmul.f32 %v3799, %v1406
      %v3820 = vmul.f32 %v3808, %v1402
      %v3821 = vmul.f32 %v3800, %v1406
      %v3822 = vmul.f32 %v3809, %v1402
      %v3823 = vmul.f32 %v3801, %v1406
      %v3824 = vmul.f32 %v3810, %v1402
      %v3825 = vmul.f32 %v3802, %v1406
      %v3826 = vmul.f32 %v3811, %v1402
      %v3827 = vmul.f32 %v3803, %v1406
      %3828 = vrot.lane.b32.xlu0 %v3308, 1
      %v3829 = vpop.permute.xlu0 %3828
      %3830 = vrot.lane.b32.xlu0 %v3354, 1
      %v3831 = vpop.permute.xlu0 %3830
      %3832 = vrot.lane.b32.xlu0 %v3400, 1
      %v3833 = vpop.permute.xlu0 %3832
      %3834 = vrot.lane.b32.xlu0 %v3446, 1
      %v3835 = vpop.permute.xlu0 %3834
      %3836 = vrot.lane.b32.xlu0 %v3492, 1
      %v3837 = vpop.permute.xlu0 %3836
      %3838 = vrot.lane.b32.xlu0 %v3538, 1
      %v3839 = vpop.permute.xlu0 %3838
      %3840 = vrot.lane.b32.xlu0 %v3584, 1
      %v3841 = vpop.permute.xlu0 %3840
      %3842 = vrot.lane.b32.xlu0 %v3630, 1
      %v3843 = vpop.permute.xlu0 %3842
      %3844 = vrot.lane.b32.xlu0 %v3309, 1
      %v3845 = vpop.permute.xlu0 %3844
      %3846 = vrot.lane.b32.xlu0 %v3355, 1
      %v3847 = vpop.permute.xlu0 %3846
      %3848 = vrot.lane.b32.xlu0 %v3401, 1
      %v3849 = vpop.permute.xlu0 %3848
      %3850 = vrot.lane.b32.xlu0 %v3447, 1
      %v3851 = vpop.permute.xlu0 %3850
      %3852 = vrot.lane.b32.xlu0 %v3493, 1
      %v3853 = vpop.permute.xlu0 %3852
      %3854 = vrot.lane.b32.xlu0 %v3539, 1
      %v3855 = vpop.permute.xlu0 %3854
      %3856 = vrot.lane.b32.xlu0 %v3585, 1
      %v3857 = vpop.permute.xlu0 %3856
      %3858 = vrot.lane.b32.xlu0 %v3631, 1
      %v3859 = vpop.permute.xlu0 %3858
      %v3860 = vsel %vm1413, %v3829, %v3845
      %v3861 = vsel %vm1413, %v3831, %v3847
      %v3862 = vsel %vm1413, %v3833, %v3849
      %v3863 = vsel %vm1413, %v3835, %v3851
      %v3864 = vsel %vm1413, %v3837, %v3853
      %v3865 = vsel %vm1413, %v3839, %v3855
      %v3866 = vsel %vm1413, %v3841, %v3857
      %v3867 = vsel %vm1413, %v3843, %v3859
      %v3868 = vsel %vm1413, %v3845, %v3829
      %v3869 = vsel %vm1413, %v3847, %v3831
      %v3870 = vsel %vm1413, %v3849, %v3833
      %v3871 = vsel %vm1413, %v3851, %v3835
      %v3872 = vsel %vm1413, %v3853, %v3837
      %v3873 = vsel %vm1413, %v3855, %v3839
      %v3874 = vsel %vm1413, %v3857, %v3841
      %v3875 = vsel %vm1413, %v3859, %v3843
      %v3876 = vmul.f32 %v3868, %v1419
      %v3877 = vmul.f32 %v3860, %v1423
      %v3878 = vmul.f32 %v3869, %v1419
      %v3879 = vmul.f32 %v3861, %v1423
      %v3880 = vmul.f32 %v3870, %v1419
      %v3881 = vmul.f32 %v3862, %v1423
      %v3882 = vmul.f32 %v3871, %v1419
      %v3883 = vmul.f32 %v3863, %v1423
      %v3884 = vmul.f32 %v3872, %v1419
      %v3885 = vmul.f32 %v3864, %v1423
      %v3886 = vmul.f32 %v3873, %v1419
      %v3887 = vmul.f32 %v3865, %v1423
      %v3888 = vmul.f32 %v3874, %v1419
      %v3889 = vmul.f32 %v3866, %v1423
      %v3890 = vmul.f32 %v3875, %v1419
      %v3891 = vmul.f32 %v3867, %v1423
      %3892 = vrot.lane.b32.xlu0 %v3308, 127
      %v3893 = vpop.permute.xlu0 %3892
      %3894 = vrot.lane.b32.xlu0 %v3354, 127
      %v3895 = vpop.permute.xlu0 %3894
      %3896 = vrot.lane.b32.xlu0 %v3400, 127
      %v3897 = vpop.permute.xlu0 %3896
      %3898 = vrot.lane.b32.xlu0 %v3446, 127
      %v3899 = vpop.permute.xlu0 %3898
      %3900 = vrot.lane.b32.xlu0 %v3492, 127
      %v3901 = vpop.permute.xlu0 %3900
      %3902 = vrot.lane.b32.xlu0 %v3538, 127
      %v3903 = vpop.permute.xlu0 %3902
      %3904 = vrot.lane.b32.xlu0 %v3584, 127
      %v3905 = vpop.permute.xlu0 %3904
      %3906 = vrot.lane.b32.xlu0 %v3630, 127
      %v3907 = vpop.permute.xlu0 %3906
      %3908 = vrot.lane.b32.xlu0 %v3309, 127
      %v3909 = vpop.permute.xlu0 %3908
      %3910 = vrot.lane.b32.xlu0 %v3355, 127
      %v3911 = vpop.permute.xlu0 %3910
      %3912 = vrot.lane.b32.xlu0 %v3401, 127
      %v3913 = vpop.permute.xlu0 %3912
      %3914 = vrot.lane.b32.xlu0 %v3447, 127
      %v3915 = vpop.permute.xlu0 %3914
      %3916 = vrot.lane.b32.xlu0 %v3493, 127
      %v3917 = vpop.permute.xlu0 %3916
      %3918 = vrot.lane.b32.xlu0 %v3539, 127
      %v3919 = vpop.permute.xlu0 %3918
      %3920 = vrot.lane.b32.xlu0 %v3585, 127
      %v3921 = vpop.permute.xlu0 %3920
      %3922 = vrot.lane.b32.xlu0 %v3631, 127
      %v3923 = vpop.permute.xlu0 %3922
      %v3924 = vsel %vm1430, %v3893, %v3909
      %v3925 = vsel %vm1430, %v3895, %v3911
      %v3926 = vsel %vm1430, %v3897, %v3913
      %v3927 = vsel %vm1430, %v3899, %v3915
      %v3928 = vsel %vm1430, %v3901, %v3917
      %v3929 = vsel %vm1430, %v3903, %v3919
      %v3930 = vsel %vm1430, %v3905, %v3921
      %v3931 = vsel %vm1430, %v3907, %v3923
      %v3932 = vsel %vm1430, %v3909, %v3893
      %v3933 = vsel %vm1430, %v3911, %v3895
      %v3934 = vsel %vm1430, %v3913, %v3897
      %v3935 = vsel %vm1430, %v3915, %v3899
      %v3936 = vsel %vm1430, %v3917, %v3901
      %v3937 = vsel %vm1430, %v3919, %v3903
      %v3938 = vsel %vm1430, %v3921, %v3905
      %v3939 = vsel %vm1430, %v3923, %v3907
      %v3940 = vmul.f32 %v3924, %v1436
      %v3941 = vmul.f32 %v3932, %v1440
      %v3942 = vmul.f32 %v3925, %v1436
      %v3943 = vmul.f32 %v3933, %v1440
      %v3944 = vmul.f32 %v3926, %v1436
      %v3945 = vmul.f32 %v3934, %v1440
      %v3946 = vmul.f32 %v3927, %v1436
      %v3947 = vmul.f32 %v3935, %v1440
      %v3948 = vmul.f32 %v3928, %v1436
      %v3949 = vmul.f32 %v3936, %v1440
      %v3950 = vmul.f32 %v3929, %v1436
      %v3951 = vmul.f32 %v3937, %v1440
      %v3952 = vmul.f32 %v3930, %v1436
      %v3953 = vmul.f32 %v3938, %v1440
      %v3954 = vmul.f32 %v3931, %v1436
      %v3955 = vmul.f32 %v3939, %v1440
      %3956 = vrot.lane.b32.xlu0 %v3308, 113
      %v3957 = vpop.permute.xlu0 %3956
      %3958 = vrot.lane.b32.xlu0 %v3354, 113
      %v3959 = vpop.permute.xlu0 %3958
      %3960 = vrot.lane.b32.xlu0 %v3400, 113
      %v3961 = vpop.permute.xlu0 %3960
      %3962 = vrot.lane.b32.xlu0 %v3446, 113
      %v3963 = vpop.permute.xlu0 %3962
      %3964 = vrot.lane.b32.xlu0 %v3492, 113
      %v3965 = vpop.permute.xlu0 %3964
      %3966 = vrot.lane.b32.xlu0 %v3538, 113
      %v3967 = vpop.permute.xlu0 %3966
      %3968 = vrot.lane.b32.xlu0 %v3584, 113
      %v3969 = vpop.permute.xlu0 %3968
      %3970 = vrot.lane.b32.xlu0 %v3630, 113
      %v3971 = vpop.permute.xlu0 %3970
      %3972 = vrot.lane.b32.xlu0 %v3309, 113
      %v3973 = vpop.permute.xlu0 %3972
      %3974 = vrot.lane.b32.xlu0 %v3355, 113
      %v3975 = vpop.permute.xlu0 %3974
      %3976 = vrot.lane.b32.xlu0 %v3401, 113
      %v3977 = vpop.permute.xlu0 %3976
      %3978 = vrot.lane.b32.xlu0 %v3447, 113
      %v3979 = vpop.permute.xlu0 %3978
      %3980 = vrot.lane.b32.xlu0 %v3493, 113
      %v3981 = vpop.permute.xlu0 %3980
      %3982 = vrot.lane.b32.xlu0 %v3539, 113
      %v3983 = vpop.permute.xlu0 %3982
      %3984 = vrot.lane.b32.xlu0 %v3585, 113
      %v3985 = vpop.permute.xlu0 %3984
      %3986 = vrot.lane.b32.xlu0 %v3631, 113
      %v3987 = vpop.permute.xlu0 %3986
      %v3988 = vsel %vm1447, %v3957, %v3973
      %v3989 = vsel %vm1447, %v3959, %v3975
      %v3990 = vsel %vm1447, %v3961, %v3977
      %v3991 = vsel %vm1447, %v3963, %v3979
      %v3992 = vsel %vm1447, %v3965, %v3981
      %v3993 = vsel %vm1447, %v3967, %v3983
      %v3994 = vsel %vm1447, %v3969, %v3985
      %v3995 = vsel %vm1447, %v3971, %v3987
      %v3996 = vsel %vm1447, %v3973, %v3957
      %v3997 = vsel %vm1447, %v3975, %v3959
      %v3998 = vsel %vm1447, %v3977, %v3961
      %v3999 = vsel %vm1447, %v3979, %v3963
      %v4000 = vsel %vm1447, %v3981, %v3965
      %v4001 = vsel %vm1447, %v3983, %v3967
      %v4002 = vsel %vm1447, %v3985, %v3969
      %v4003 = vsel %vm1447, %v3987, %v3971
      %v4004 = vmul.f32 %v3988, %v1453
      %v4005 = vmul.f32 %v3996, %v1457
      %v4006 = vmul.f32 %v3989, %v1453
      %v4007 = vmul.f32 %v3997, %v1457
      %v4008 = vmul.f32 %v3990, %v1453
      %v4009 = vmul.f32 %v3998, %v1457
      %v4010 = vmul.f32 %v3991, %v1453
      %v4011 = vmul.f32 %v3999, %v1457
      %v4012 = vmul.f32 %v3992, %v1453
      %v4013 = vmul.f32 %v4000, %v1457
      %v4014 = vmul.f32 %v3993, %v1453
      %v4015 = vmul.f32 %v4001, %v1457
      %v4016 = vmul.f32 %v3994, %v1453
      %v4017 = vmul.f32 %v4002, %v1457
      %v4018 = vmul.f32 %v3995, %v1453
      %v4019 = vmul.f32 %v4003, %v1457
      %4020 = vrot.lane.b32.xlu0 %v3308, 112
      %v4021 = vpop.permute.xlu0 %4020
      %4022 = vrot.lane.b32.xlu0 %v3354, 112
      %v4023 = vpop.permute.xlu0 %4022
      %4024 = vrot.lane.b32.xlu0 %v3400, 112
      %v4025 = vpop.permute.xlu0 %4024
      %4026 = vrot.lane.b32.xlu0 %v3446, 112
      %v4027 = vpop.permute.xlu0 %4026
      %4028 = vrot.lane.b32.xlu0 %v3492, 112
      %v4029 = vpop.permute.xlu0 %4028
      %4030 = vrot.lane.b32.xlu0 %v3538, 112
      %v4031 = vpop.permute.xlu0 %4030
      %4032 = vrot.lane.b32.xlu0 %v3584, 112
      %v4033 = vpop.permute.xlu0 %4032
      %4034 = vrot.lane.b32.xlu0 %v3630, 112
      %v4035 = vpop.permute.xlu0 %4034
      %4036 = vrot.lane.b32.xlu0 %v3309, 112
      %v4037 = vpop.permute.xlu0 %4036
      %4038 = vrot.lane.b32.xlu0 %v3355, 112
      %v4039 = vpop.permute.xlu0 %4038
      %4040 = vrot.lane.b32.xlu0 %v3401, 112
      %v4041 = vpop.permute.xlu0 %4040
      %4042 = vrot.lane.b32.xlu0 %v3447, 112
      %v4043 = vpop.permute.xlu0 %4042
      %4044 = vrot.lane.b32.xlu0 %v3493, 112
      %v4045 = vpop.permute.xlu0 %4044
      %4046 = vrot.lane.b32.xlu0 %v3539, 112
      %v4047 = vpop.permute.xlu0 %4046
      %4048 = vrot.lane.b32.xlu0 %v3585, 112
      %v4049 = vpop.permute.xlu0 %4048
      %4050 = vrot.lane.b32.xlu0 %v3631, 112
      %v4051 = vpop.permute.xlu0 %4050
      %v4052 = vsel %vm1464, %v4021, %v4037
      %v4053 = vsel %vm1464, %v4023, %v4039
      %v4054 = vsel %vm1464, %v4025, %v4041
      %v4055 = vsel %vm1464, %v4027, %v4043
      %v4056 = vsel %vm1464, %v4029, %v4045
      %v4057 = vsel %vm1464, %v4031, %v4047
      %v4058 = vsel %vm1464, %v4033, %v4049
      %v4059 = vsel %vm1464, %v4035, %v4051
      %v4060 = vsel %vm1464, %v4037, %v4021
      %v4061 = vsel %vm1464, %v4039, %v4023
      %v4062 = vsel %vm1464, %v4041, %v4025
      %v4063 = vsel %vm1464, %v4043, %v4027
      %v4064 = vsel %vm1464, %v4045, %v4029
      %v4065 = vsel %vm1464, %v4047, %v4031
      %v4066 = vsel %vm1464, %v4049, %v4033
      %v4067 = vsel %vm1464, %v4051, %v4035
      %v4068 = vmul.f32 %v4052, %v1470
      %v4069 = vmul.f32 %v4060, %v1474
      %v4070 = vmul.f32 %v4053, %v1470
      %v4071 = vmul.f32 %v4061, %v1474
      %v4072 = vmul.f32 %v4054, %v1470
      %v4073 = vmul.f32 %v4062, %v1474
      %v4074 = vmul.f32 %v4055, %v1470
      %v4075 = vmul.f32 %v4063, %v1474
      %v4076 = vmul.f32 %v4056, %v1470
      %v4077 = vmul.f32 %v4064, %v1474
      %v4078 = vmul.f32 %v4057, %v1470
      %v4079 = vmul.f32 %v4065, %v1474
      %v4080 = vmul.f32 %v4058, %v1470
      %v4081 = vmul.f32 %v4066, %v1474
      %v4082 = vmul.f32 %v4059, %v1470
      %v4083 = vmul.f32 %v4067, %v1474
      %4084 = vrot.lane.b32.xlu0 %v3308, 111
      %v4085 = vpop.permute.xlu0 %4084
      %4086 = vrot.lane.b32.xlu0 %v3354, 111
      %v4087 = vpop.permute.xlu0 %4086
      %4088 = vrot.lane.b32.xlu0 %v3400, 111
      %v4089 = vpop.permute.xlu0 %4088
      %4090 = vrot.lane.b32.xlu0 %v3446, 111
      %v4091 = vpop.permute.xlu0 %4090
      %4092 = vrot.lane.b32.xlu0 %v3492, 111
      %v4093 = vpop.permute.xlu0 %4092
      %4094 = vrot.lane.b32.xlu0 %v3538, 111
      %v4095 = vpop.permute.xlu0 %4094
      %4096 = vrot.lane.b32.xlu0 %v3584, 111
      %v4097 = vpop.permute.xlu0 %4096
      %4098 = vrot.lane.b32.xlu0 %v3630, 111
      %v4099 = vpop.permute.xlu0 %4098
      %4100 = vrot.lane.b32.xlu0 %v3309, 111
      %v4101 = vpop.permute.xlu0 %4100
      %4102 = vrot.lane.b32.xlu0 %v3355, 111
      %v4103 = vpop.permute.xlu0 %4102
      %4104 = vrot.lane.b32.xlu0 %v3401, 111
      %v4105 = vpop.permute.xlu0 %4104
      %4106 = vrot.lane.b32.xlu0 %v3447, 111
      %v4107 = vpop.permute.xlu0 %4106
      %4108 = vrot.lane.b32.xlu0 %v3493, 111
      %v4109 = vpop.permute.xlu0 %4108
      %4110 = vrot.lane.b32.xlu0 %v3539, 111
      %v4111 = vpop.permute.xlu0 %4110
      %4112 = vrot.lane.b32.xlu0 %v3585, 111
      %v4113 = vpop.permute.xlu0 %4112
      %4114 = vrot.lane.b32.xlu0 %v3631, 111
      %v4115 = vpop.permute.xlu0 %4114
      %v4116 = vsel %vm1481, %v4085, %v4101
      %v4117 = vsel %vm1481, %v4087, %v4103
      %v4118 = vsel %vm1481, %v4089, %v4105
      %v4119 = vsel %vm1481, %v4091, %v4107
      %v4120 = vsel %vm1481, %v4093, %v4109
      %v4121 = vsel %vm1481, %v4095, %v4111
      %v4122 = vsel %vm1481, %v4097, %v4113
      %v4123 = vsel %vm1481, %v4099, %v4115
      %v4124 = vsel %vm1481, %v4101, %v4085
      %v4125 = vsel %vm1481, %v4103, %v4087
      %v4126 = vsel %vm1481, %v4105, %v4089
      %v4127 = vsel %vm1481, %v4107, %v4091
      %v4128 = vsel %vm1481, %v4109, %v4093
      %v4129 = vsel %vm1481, %v4111, %v4095
      %v4130 = vsel %vm1481, %v4113, %v4097
      %v4131 = vsel %vm1481, %v4115, %v4099
      %v4132 = vmul.f32 %v4116, %v1487
      %v4133 = vmul.f32 %v4124, %v1491
      %v4134 = vmul.f32 %v4117, %v1487
      %v4135 = vmul.f32 %v4125, %v1491
      %v4136 = vmul.f32 %v4118, %v1487
      %v4137 = vmul.f32 %v4126, %v1491
      %v4138 = vmul.f32 %v4119, %v1487
      %v4139 = vmul.f32 %v4127, %v1491
      %v4140 = vmul.f32 %v4120, %v1487
      %v4141 = vmul.f32 %v4128, %v1491
      %v4142 = vmul.f32 %v4121, %v1487
      %v4143 = vmul.f32 %v4129, %v1491
      %v4144 = vmul.f32 %v4122, %v1487
      %v4145 = vmul.f32 %v4130, %v1491
      %v4146 = vmul.f32 %v4123, %v1487
      %v4147 = vmul.f32 %v4131, %v1491
      %4149 = vset.pattern.permute.xlu0 0
      %4150 = vperm.xlu0 %4149, %v3635
      %v4151 = vpop.permute.xlu0 %4150
      %v4156 = vcombine.high %v3632, %v3632
      %v4157 = vcombine.high %v3633, %v3633
      %v4160 = vsel %vm2804, %v3634, 0
      %4162 = vmatprep.subr.mxu0 %v3685
      %4163 = vmatpush1.msra.mxu0 %v3684
      %4164 = vmatprep.subr.mxu0 %v3687
      %4165 = vmatpush1.msra.mxu0 %v3686
      %4166 = vmatprep.subr.mxu0 %v3689
      %4167 = vmatpush1.msra.mxu0 %v3688
      %4168 = vmatprep.subr.mxu0 %v3691
      %4169 = vmatpush1.msra.mxu0 %v3690
      %4170 = vmatprep.subr.mxu0 %v3693
      %4171 = vmatpush1.msra.mxu0 %v3692
      %4172 = vmatprep.subr.mxu0 %v3695
      %4173 = vmatpush1.msra.mxu0 %v3694
      %4174 = vmatprep.subr.mxu0 %v3697
      %4175 = vmatpush1.msra.mxu0 %v3696
      %4176 = vmatprep.subr.mxu0 %v3699
      %4177 = vmatpush1.msra.mxu0 %v3698
      %4178 = vmatprep.subr.mxu0 %v3749
      %4179 = vmatpush1.msra.mxu0 %v3748
      %4180 = vmatprep.subr.mxu0 %v3751
      %4181 = vmatpush1.msra.mxu0 %v3750
      %4182 = vmatprep.subr.mxu0 %v3753
      %4183 = vmatpush1.msra.mxu0 %v3752
      %4184 = vmatprep.subr.mxu0 %v3755
      %4185 = vmatpush1.msra.mxu0 %v3754
      %4186 = vmatprep.subr.mxu0 %v3757
      %4187 = vmatpush1.msra.mxu0 %v3756
      %4188 = vmatprep.subr.mxu0 %v3759
      %4189 = vmatpush1.msra.mxu0 %v3758
      %4190 = vmatprep.subr.mxu0 %v3761
      %4191 = vmatpush1.msra.mxu0 %v3760
      %4192 = vmatprep.subr.mxu0 %v3763
      %4193 = vmatpush1.msra.mxu0 %v3762
      %4194 = vmatprep.subr.mxu0 %v3813
      %4195 = vmatpush1.msra.mxu0 %v3812
      %4196 = vmatprep.subr.mxu0 %v3815
      %4197 = vmatpush1.msra.mxu0 %v3814
      %4198 = vmatprep.subr.mxu0 %v3817
      %4199 = vmatpush1.msra.mxu0 %v3816
      %4200 = vmatprep.subr.mxu0 %v3819
      %4201 = vmatpush1.msra.mxu0 %v3818
      %4202 = vmatprep.subr.mxu0 %v3821
      %4203 = vmatpush1.msra.mxu0 %v3820
      %4204 = vmatprep.subr.mxu0 %v3823
      %4205 = vmatpush1.msra.mxu0 %v3822
      %4206 = vmatprep.subr.mxu0 %v3825
      %4207 = vmatpush1.msra.mxu0 %v3824
      %4208 = vmatprep.subr.mxu0 %v3827
      %4209 = vmatpush1.msra.mxu0 %v3826
      %4210 = vmatprep.subr.mxu0 %v3877
      %4211 = vmatpush1.msra.mxu0 %v3876
      %4212 = vmatprep.subr.mxu0 %v3879
      %4213 = vmatpush1.msra.mxu0 %v3878
      %4214 = vmatprep.subr.mxu0 %v3881
      %4215 = vmatpush1.msra.mxu0 %v3880
      %4216 = vmatprep.subr.mxu0 %v3883
      %4217 = vmatpush1.msra.mxu0 %v3882
      %4218 = vmatprep.subr.mxu0 %v3885
      %4219 = vmatpush1.msra.mxu0 %v3884
      %4220 = vmatprep.subr.mxu0 %v3887
      %4221 = vmatpush1.msra.mxu0 %v3886
      %4222 = vmatprep.subr.mxu0 %v3889
      %4223 = vmatpush1.msra.mxu0 %v3888
      %4224 = vmatprep.subr.mxu0 %v3891
      %4225 = vmatpush1.msra.mxu0 %v3890
      %4226 = vmatprep.mubr.f32.mxu0 %v4156
      %4227 = vmatmul.mubr.f32.gmra.mrb[0].mxu0 %v3632
      %v4228 = vpop.f32.mrb[0].mxu0
      %v4229 = vadd.f32 %v4151, %v4228
      %v4230 = vpop.f32.mrb[0].mxu0
      %v4231 = vadd.f32 %v4151, %v4230
      %4232 = vdwg.mxu0
      %4233 = vmatprep.subr.mxu0 %v3309
      %4234 = vmatpush1.msra.mxu0 %v3308
      %4235 = vmatprep.subr.mxu0 %v3355
      %4236 = vmatpush1.msra.mxu0 %v3354
      %4237 = vmatprep.subr.mxu0 %v3401
      %4238 = vmatpush1.msra.mxu0 %v3400
      %4239 = vmatprep.subr.mxu0 %v3447
      %4240 = vmatpush1.msra.mxu0 %v3446
      %4241 = vmatprep.subr.mxu0 %v3493
      %4242 = vmatpush1.msra.mxu0 %v3492
      %4243 = vmatprep.subr.mxu0 %v3539
      %4244 = vmatpush1.msra.mxu0 %v3538
      %4245 = vmatprep.subr.mxu0 %v3585
      %4246 = vmatpush1.msra.mxu0 %v3584
      %4247 = vmatprep.subr.mxu0 %v3631
      %4248 = vmatpush1.msra.mxu0 %v3630
      %4249 = vmatprep.subr.mxu0 %v3941
      %4250 = vmatpush1.msra.mxu0 %v3940
      %4251 = vmatprep.subr.mxu0 %v3943
      %4252 = vmatpush1.msra.mxu0 %v3942
      %4253 = vmatprep.subr.mxu0 %v3945
      %4254 = vmatpush1.msra.mxu0 %v3944
      %4255 = vmatprep.subr.mxu0 %v3947
      %4256 = vmatpush1.msra.mxu0 %v3946
      %4257 = vmatprep.subr.mxu0 %v3949
      %4258 = vmatpush1.msra.mxu0 %v3948
      %4259 = vmatprep.subr.mxu0 %v3951
      %4260 = vmatpush1.msra.mxu0 %v3950
      %4261 = vmatprep.subr.mxu0 %v3953
      %4262 = vmatpush1.msra.mxu0 %v3952
      %4263 = vmatprep.subr.mxu0 %v3955
      %4264 = vmatpush1.msra.mxu0 %v3954
      %4265 = vmatprep.subr.mxu0 %v4005
      %4266 = vmatpush1.msra.mxu0 %v4004
      %4267 = vmatprep.subr.mxu0 %v4007
      %4268 = vmatpush1.msra.mxu0 %v4006
      %4269 = vmatprep.subr.mxu0 %v4009
      %4270 = vmatpush1.msra.mxu0 %v4008
      %4271 = vmatprep.subr.mxu0 %v4011
      %4272 = vmatpush1.msra.mxu0 %v4010
      %4273 = vmatprep.subr.mxu0 %v4013
      %4274 = vmatpush1.msra.mxu0 %v4012
      %4275 = vmatprep.subr.mxu0 %v4015
      %4276 = vmatpush1.msra.mxu0 %v4014
      %4277 = vmatprep.subr.mxu0 %v4017
      %4278 = vmatpush1.msra.mxu0 %v4016
      %4279 = vmatprep.subr.mxu0 %v4019
      %4280 = vmatpush1.msra.mxu0 %v4018
      %4281 = vmatprep.subr.mxu0 %v4069
      %4282 = vmatpush1.msra.mxu0 %v4068
      %4283 = vmatprep.subr.mxu0 %v4071
      %4284 = vmatpush1.msra.mxu0 %v4070
      %4285 = vmatprep.subr.mxu0 %v4073
      %4286 = vmatpush1.msra.mxu0 %v4072
      %4287 = vmatprep.subr.mxu0 %v4075
      %4288 = vmatpush1.msra.mxu0 %v4074
      %4289 = vmatprep.subr.mxu0 %v4077
      %4290 = vmatpush1.msra.mxu0 %v4076
      %4291 = vmatprep.subr.mxu0 %v4079
      %4292 = vmatpush1.msra.mxu0 %v4078
      %4293 = vmatprep.subr.mxu0 %v4081
      %4294 = vmatpush1.msra.mxu0 %v4080
      %4295 = vmatprep.subr.mxu0 %v4083
      %4296 = vmatpush1.msra.mxu0 %v4082
      %4297 = vmatprep.mubr.f32.mxu0 %v4157
      %4298 = vmatmul.mubr.f32.gmra.mrb[0].mxu0 %v3633
      %v4299 = vpop.f32.mrb[0].mxu0
      %v4300 = vadd.f32 %v4229, %v4299
      %v4301 = vpop.f32.mrb[0].mxu0
      %v4302 = vadd.f32 %v4231, %v4301
      %4303 = vdwg.mxu0
      %4304 = vmatprep.subr.mxu0 %v4133
      %4305 = vmatpush1.msra.mxu0 %v4132
      %4306 = vmatprep.subr.mxu0 %v4135
      %4307 = vmatpush1.msra.mxu0 %v4134
      %4308 = vmatprep.subr.mxu0 %v4137
      %4309 = vmatpush1.msra.mxu0 %v4136
      %4310 = vmatprep.subr.mxu0 %v4139
      %4311 = vmatpush1.msra.mxu0 %v4138
      %4312 = vmatprep.subr.mxu0 %v4141
      %4313 = vmatpush1.msra.mxu0 %v4140
      %4314 = vmatprep.subr.mxu0 %v4143
      %4315 = vmatpush1.msra.mxu0 %v4142
      %4316 = vmatprep.subr.mxu0 %v4145
      %4317 = vmatpush1.msra.mxu0 %v4144
      %4318 = vmatprep.subr.mxu0 %v4147
      %4319 = vmatpush1.msra.mxu0 %v4146
      %4320 = vmatprep.subr.mxu0 0.0
      %4321 = vmatpush1.msra.mxu0 0.0
      %4322 = vmatprep.subr.mxu0 0.0
      %4323 = vmatpush1.msra.mxu0 0.0
      %4324 = vmatprep.subr.mxu0 0.0
      %4325 = vmatpush1.msra.mxu0 0.0
      %4326 = vmatprep.subr.mxu0 0.0
      %4327 = vmatpush1.msra.mxu0 0.0
      %4328 = vmatprep.subr.mxu0 0.0
      %4329 = vmatpush1.msra.mxu0 0.0
      %4330 = vmatprep.subr.mxu0 0.0
      %4331 = vmatpush1.msra.mxu0 0.0
      %4332 = vmatprep.subr.mxu0 0.0
      %4333 = vmatpush1.msra.mxu0 0.0
      %4334 = vmatprep.subr.mxu0 0.0
      %4335 = vmatpush1.msra.mxu0 0.0
      %4336 = vmatprep.subr.mxu0 0.0
      %4337 = vmatpush1.msra.mxu0 0.0
      %4338 = vmatprep.subr.mxu0 0.0
      %4339 = vmatpush1.msra.mxu0 0.0
      %4340 = vmatprep.subr.mxu0 0.0
      %4341 = vmatpush1.msra.mxu0 0.0
      %4342 = vmatprep.subr.mxu0 0.0
      %4343 = vmatpush1.msra.mxu0 0.0
      %4344 = vmatprep.subr.mxu0 0.0
      %4345 = vmatpush1.msra.mxu0 0.0
      %4346 = vmatprep.subr.mxu0 0.0
      %4347 = vmatpush1.msra.mxu0 0.0
      %4348 = vmatprep.subr.mxu0 0.0
      %4349 = vmatpush1.msra.mxu0 0.0
      %4350 = vmatprep.subr.mxu0 0.0
      %4351 = vmatpush1.msra.mxu0 0.0
      %4352 = vmatprep.subr.mxu0 0.0
      %4353 = vmatpush1.msra.mxu0 0.0
      %4354 = vmatprep.subr.mxu0 0.0
      %4355 = vmatpush1.msra.mxu0 0.0
      %4356 = vmatprep.subr.mxu0 0.0
      %4357 = vmatpush1.msra.mxu0 0.0
      %4358 = vmatprep.subr.mxu0 0.0
      %4359 = vmatpush1.msra.mxu0 0.0
      %4360 = vmatprep.subr.mxu0 0.0
      %4361 = vmatpush1.msra.mxu0 0.0
      %4362 = vmatprep.subr.mxu0 0.0
      %4363 = vmatpush1.msra.mxu0 0.0
      %4364 = vmatprep.subr.mxu0 0.0
      %4365 = vmatpush1.msra.mxu0 0.0
      %4366 = vmatprep.subr.mxu0 0.0
      %4367 = vmatpush1.msra.mxu0 0.0
      %4368 = vmatprep.mubr.f32.mxu0 0.0
      %4369 = vmatmul.mubr.f32.gmra.mrb[0].mxu0 %v4160
      %v4370 = vpop.f32.mrb[0].mxu0
      %v4371 = vadd.f32 %v4300, %v4370
      %v4372 = vpop.f32.mrb[0].mxu0
      %v4373 = vadd.f32 %v4302, %v4372
      %4374 = vdwg.mxu0
      %v4375 = vadd.f32 %v1333, %v4371
      %v4376 = vadd.f32 %v1334, %v4373
      %v4377 = vmul.f32 %v4375, %v4375
      %v4378 = vmul.f32 %v4376, %v4376
      %v4379 = vsel %vm1536, %v4377, 0.0
      %v4380 = vrot.slane %v4379, 4
      %v4381 = vadd.f32 %v4379, %v4380
      %v4382 = vrot.slane %v4381, 2
      %v4383 = vadd.f32 %v4381, %v4382
      %v4384 = vrot.slane %v4383, 1
      %v4385 = vadd.f32 %v4383, %v4384
      %v4386 = vsel %vm1536, %v4378, 0.0
      %v4387 = vrot.slane %v4386, 4
      %v4388 = vadd.f32 %v4386, %v4387
      %v4389 = vrot.slane %v4388, 2
      %v4390 = vadd.f32 %v4388, %v4389
      %v4391 = vrot.slane %v4390, 1
      %v4392 = vadd.f32 %v4390, %v4391
      %v4393 = vrsqrt.pop %v4385
      %v4394 = vrsqrt.pop %v4392
      %v4395 = vmul.f32 %v4375, %v4393
      %v4396 = vmul.f32 %v4376, %v4394
      %v4398 = vcombine.high %v1339, %v1339
      %v4402 = vrot.slane %v4395, 5
      %v4403 = vrot.slane %v4396, 5
      %v4406 = vsel %vm1536, %v1339, %v4402
      %v4407 = vsel %vm1536, %v4398, %v4403
      %v4408 = vld [vmem:[%s13] sm:$0x7]
      %v4409 = vld [vmem:[%s14] sm:$0x7]
      %4411 = vset.pattern.permute.xlu0 0
      %4412 = vperm.xlu0 %4411, %v4409
      %v4413 = vpop.permute.xlu0 %4412
      %vm4415 = vcmask 48128
      %v4417 = vsel %vm4415, %v4408, 0
      %v4420 = vsel %vm1539, %v4406, 0
      %v4423 = vsel %vm1539, %v4407, 0
      %4425 = vmatprep.subr.mxu0 %v4423
      %4426 = vmatpush1.msra.mxu0 %v4420
      %4427 = vmatprep.subr.mxu0 0.0
      %4428 = vmatpush1.msra.mxu0 0.0
      %4429 = vmatprep.subr.mxu0 0.0
      %4430 = vmatpush1.msra.mxu0 0.0
      %4431 = vmatprep.subr.mxu0 0.0
      %4432 = vmatpush1.msra.mxu0 0.0
      %4433 = vmatprep.subr.mxu0 0.0
      %4434 = vmatpush1.msra.mxu0 0.0
      %4435 = vmatprep.subr.mxu0 0.0
      %4436 = vmatpush1.msra.mxu0 0.0
      %4437 = vmatprep.subr.mxu0 0.0
      %4438 = vmatpush1.msra.mxu0 0.0
      %4439 = vmatprep.subr.mxu0 0.0
      %4440 = vmatpush1.msra.mxu0 0.0
      %4441 = vmatprep.subr.mxu0 0.0
      %4442 = vmatpush1.msra.mxu0 0.0
      %4443 = vmatprep.subr.mxu0 0.0
      %4444 = vmatpush1.msra.mxu0 0.0
      %4445 = vmatprep.subr.mxu0 0.0
      %4446 = vmatpush1.msra.mxu0 0.0
      %4447 = vmatprep.subr.mxu0 0.0
      %4448 = vmatpush1.msra.mxu0 0.0
      %4449 = vmatprep.subr.mxu0 0.0
      %4450 = vmatpush1.msra.mxu0 0.0
      %4451 = vmatprep.subr.mxu0 0.0
      %4452 = vmatpush1.msra.mxu0 0.0
      %4453 = vmatprep.subr.mxu0 0.0
      %4454 = vmatpush1.msra.mxu0 0.0
      %4455 = vmatprep.subr.mxu0 0.0
      %4456 = vmatpush1.msra.mxu0 0.0
      %4457 = vmatprep.subr.mxu0 0.0
      %4458 = vmatpush1.msra.mxu0 0.0
      %4459 = vmatprep.subr.mxu0 0.0
      %4460 = vmatpush1.msra.mxu0 0.0
      %4461 = vmatprep.subr.mxu0 0.0
      %4462 = vmatpush1.msra.mxu0 0.0
      %4463 = vmatprep.subr.mxu0 0.0
      %4464 = vmatpush1.msra.mxu0 0.0
      %4465 = vmatprep.subr.mxu0 0.0
      %4466 = vmatpush1.msra.mxu0 0.0
      %4467 = vmatprep.subr.mxu0 0.0
      %4468 = vmatpush1.msra.mxu0 0.0
      %4469 = vmatprep.subr.mxu0 0.0
      %4470 = vmatpush1.msra.mxu0 0.0
      %4471 = vmatprep.subr.mxu0 0.0
      %4472 = vmatpush1.msra.mxu0 0.0
      %4473 = vmatprep.subr.mxu0 0.0
      %4474 = vmatpush1.msra.mxu0 0.0
      %4475 = vmatprep.subr.mxu0 0.0
      %4476 = vmatpush1.msra.mxu0 0.0
      %4477 = vmatprep.subr.mxu0 0.0
      %4478 = vmatpush1.msra.mxu0 0.0
      %4479 = vmatprep.subr.mxu0 0.0
      %4480 = vmatpush1.msra.mxu0 0.0
      %4481 = vmatprep.subr.mxu0 0.0
      %4482 = vmatpush1.msra.mxu0 0.0
      %4483 = vmatprep.subr.mxu0 0.0
      %4484 = vmatpush1.msra.mxu0 0.0
      %4485 = vmatprep.subr.mxu0 0.0
      %4486 = vmatpush1.msra.mxu0 0.0
      %4487 = vmatprep.subr.mxu0 0.0
      %4488 = vmatpush1.msra.mxu0 0.0
      %4489 = vmatprep.mubr.f32.mxu0 0.0
      %4490 = vmatmul.mubr.f32.gmra.mrb[0].mxu0 %v4417
      %v4491 = vpop.f32.mrb[0].mxu0
      %v4492 = vadd.f32 %v4413, %v4491
      %v4493 = vpop.f32.mrb[0].mxu0
      %v4494 = vadd.f32 %v4413, %v4493
      %4495 = vdwg.mxu0
      %v4496 = vmul.f32 %v4492, %v4492
      %v4497 = vmul.f32 %v4494, %v4494
      %v4498 = vsel %vm1536, %v4496, 0.0
      %v4499 = vrot.slane %v4498, 4
      %v4500 = vadd.f32 %v4498, %v4499
      %v4501 = vrot.slane %v4500, 2
      %v4502 = vadd.f32 %v4500, %v4501
      %v4503 = vrot.slane %v4502, 1
      %v4504 = vadd.f32 %v4502, %v4503
      %v4505 = vsel %vm1536, %v4497, 0.0
      %v4506 = vrot.slane %v4505, 4
      %v4507 = vadd.f32 %v4505, %v4506
      %v4508 = vrot.slane %v4507, 2
      %v4509 = vadd.f32 %v4507, %v4508
      %v4510 = vrot.slane %v4509, 1
      %v4511 = vadd.f32 %v4509, %v4510
      %v4512 = vrsqrt.pop %v4504
      %v4513 = vrsqrt.pop %v4511
      %v4514 = vmul.f32 %v4492, %v4512
      %v4515 = vmul.f32 %v4494, %v4513
      %v4516 = vadd.f32 %v4514, 1.0
      %v4517 = vadd.f32 %v4515, 1.0
      %v4518 = vmul.f32 %v4516, 0.5
      %v4519 = vmul.f32 %v4517, 0.5
      %v4520 = vmax.f32 %v4518, 0.0
      %v4521 = vmax.f32 %v4519, 0.0
      %v4522 = vmin.f32 %v4520, 1.0
      %v4523 = vmin.f32 %v4521, 1.0
      %v4526 = vcombine.low %v4522, %v4523
      %4528 = vst [vmem:[%s514] sm:$0x77] %v4526
      %p4529 = scmp.lt.s32.totalorder %s26, 1
      %s4530 = scalar_select %p4529, %s26, 1
      %s4531 = smul.addr %s4530, 2
      %s4532 = smul.addr %s4531, 4
      %s4533 = scalar_lea.vmem %s15, %s4532
      // Predicated region
      $region81: #{geonet_depth_to_normal.1} parent=79 // pred_check
        %p4534 = pneg %p369
      $region82: #{geonet_depth_to_normal.1} parent=79 // pred_check_branch
        %4536 = sbr.rel (%p4534) target = $region84
      $region83: #{geonet_depth_to_normal.1} parent=79 // pred_region
        _
      $region84: #{geonet_depth_to_normal.1} parent=79 // pred_fallthru
        _
    $region80: #{geonet_depth_to_normal.1} parent=5 // pred_fallthru
      _
    %p4537 = scmp.le.s32.totalorder 2, %s21
    // Predicated region
    $region85: #{geonet_depth_to_normal.1} parent=5 // pred_check
      %p4538 = pneg %p4537
    $region86: #{geonet_depth_to_normal.1} parent=5 // pred_check_branch
      %4540 = sbr.rel (%p4538) target = $region88
    $region87: #{geonet_depth_to_normal.1} parent=5 // pred_region
      %s4541 = ssub.s32 %s21, 2
      // Predicated region
      $region89: #{geonet_depth_to_normal.1} parent=87 // pred_check
        %p4542 = pneg %p375
      $region90: #{geonet_depth_to_normal.1} parent=87 // pred_check_branch
        %4544 = sbr.rel (%p4542) target = $region92
      $region91: #{geonet_depth_to_normal.1} parent=87 // pred_region
        %p4545 = scmp.lt.s32.totalorder %s27, 1
        %s4546 = scalar_select %p4545, %s27, 1
        %s4547 = smul.addr %s4546, 2
        %s4548 = smul.addr %s4547, 4
        %s4549 = scalar_lea.vmem %s15, %s4548
      $region92: #{geonet_depth_to_normal.1} parent=87 // pred_fallthru
        _
    $region88: #{geonet_depth_to_normal.1} parent=5 // pred_fallthru
      _
  $region6: #{geonet_depth_to_normal.1} parent=0 // loop_footer
    %s25 = sadd.s32 1, %s21
  $region7: #{geonet_depth_to_normal.1} parent=0 // loop_footer_branch
    %20 = sbr.rel target = $region3
  $region8: #{geonet_depth_to_normal.1} parent=0 // loop_exit
    _

</llo_original>
